<compile_context>
chip_gen: v7x
topology: tpu7x:2x2x1
jax: 0.10.0
libtpu: 0.0.40
codegen_flags: <defaults>
</compile_context>

<pallas_src>
import math

import jax
import jax.numpy as jnp
from jax.experimental import pallas as pl
from jax.experimental.pallas import tpu as pltpu

D_MODEL = 128
N_HEADS = 8
HEAD_DIM = D_MODEL // N_HEADS
D_FF = 100
LN_EPS = 1e-5  # torch.nn.LayerNorm default


def _transformer_block_kernel(
    x_ref,                      # (S, D)  activation tile for one batch element
    ln1_g_ref, ln1_b_ref,       # (1, D)
    wq_ref, bq_ref,             # (H, D, hd), (H, 1, hd)
    wk_ref, bk_ref,
    wv_ref, bv_ref,
    wo_ref, bo_ref,             # (H, hd, D), (1, D)
    ln2_g_ref, ln2_b_ref,       # (1, D)
    w1_ref, b1_ref,             # (D, Fp), (1, Fp)   (Fp = d_ff padded to 128)
    w2_ref, b2_ref,             # (Fp, D), (1, D)
    o_ref,                      # (S, D)
):
    x = x_ref[...]                                           # (S, D) f32

    # ---- LayerNorm 1 -------------------------------------------------------
    mu = jnp.mean(x, axis=-1, keepdims=True)
    xc = x - mu
    var = jnp.mean(xc * xc, axis=-1, keepdims=True)
    h = xc * jax.lax.rsqrt(var + LN_EPS) * ln1_g_ref[...] + ln1_b_ref[...]

    # ---- Multi-head self-attention (no mask, matching the reference) -------
    scale = 1.0 / math.sqrt(HEAD_DIM)
    attn = None
    for hd_i in range(N_HEADS):
        q = jnp.dot(h, wq_ref[hd_i], preferred_element_type=jnp.float32) + bq_ref[hd_i]
        k = jnp.dot(h, wk_ref[hd_i], preferred_element_type=jnp.float32) + bk_ref[hd_i]
        v = jnp.dot(h, wv_ref[hd_i], preferred_element_type=jnp.float32) + bv_ref[hd_i]
        # scores[i, j] = <q_i, k_j> * scale                      -> (S, S)
        scores = jax.lax.dot_general(
            q, k, (((1,), (1,)), ((), ())),
            preferred_element_type=jnp.float32) * scale
        m = jnp.max(scores, axis=-1, keepdims=True)
        p = jnp.exp(scores - m)
        p = p / jnp.sum(p, axis=-1, keepdims=True)
        o_h = jnp.dot(p, v, preferred_element_type=jnp.float32)  # (S, hd)
        contrib = jnp.dot(o_h, wo_ref[hd_i], preferred_element_type=jnp.float32)
        attn = contrib if attn is None else attn + contrib

    x1 = x + attn + bo_ref[...]                              # residual 1

    # ---- LayerNorm 2 -------------------------------------------------------
    mu2 = jnp.mean(x1, axis=-1, keepdims=True)
    xc2 = x1 - mu2
    var2 = jnp.mean(xc2 * xc2, axis=-1, keepdims=True)
    h2 = xc2 * jax.lax.rsqrt(var2 + LN_EPS) * ln2_g_ref[...] + ln2_b_ref[...]

    # ---- FeedForward -------------------------------------------------------
    # TODO(synk): training-mode dropout (p=0.1) is not implemented; this is
    # the eval()-mode forward (dropout == identity).
    f = jnp.maximum(
        jnp.dot(h2, w1_ref[...], preferred_element_type=jnp.float32) + b1_ref[...],
        0.0)
    ffn = jnp.dot(f, w2_ref[...], preferred_element_type=jnp.float32) + b2_ref[...]

    o_ref[...] = x1 + ffn                                    # residual 2


@jax.jit
def transformer_block_forward(x, params):
    B, S, D = x.shape
    assert D == D_MODEL
    H, hd = N_HEADS, HEAD_DIM
    f_pad = ((D_FF + 127) // 128) * 128
    p = params

    # Per-head weight layouts (done once, outside the hot loop) so the kernel
    # never slices the 128-lane feature axis.
    wq_h = p["wq"].reshape(D, H, hd).transpose(1, 0, 2)      # (H, D, hd)
    wk_h = p["wk"].reshape(D, H, hd).transpose(1, 0, 2)
    wv_h = p["wv"].reshape(D, H, hd).transpose(1, 0, 2)
    bq_h = p["bq"].reshape(H, 1, hd)
    bk_h = p["bk"].reshape(H, 1, hd)
    bv_h = p["bv"].reshape(H, 1, hd)
    wo_h = p["wo"].reshape(H, hd, D)                         # (H, hd, D)
    bo2 = p["bo"].reshape(1, D)
    ln1_g = p["ln1_g"].reshape(1, D)
    ln1_b = p["ln1_b"].reshape(1, D)
    ln2_g = p["ln2_g"].reshape(1, D)
    ln2_b = p["ln2_b"].reshape(1, D)

    # Zero-pad the FFN hidden dim (100 -> 128) for lane alignment; padded W1
    # columns yield relu(0)=0 activations that multiply zero rows of W2, so
    # the output is unchanged.
    w1_p = jnp.zeros((D, f_pad), jnp.float32).at[:, :D_FF].set(p["w1"])
    b1_p = jnp.zeros((1, f_pad), jnp.float32).at[:, :D_FF].set(p["b1"].reshape(1, D_FF))
    w2_p = jnp.zeros((f_pad, D), jnp.float32).at[:D_FF, :].set(p["w2"])
    b2_2 = p["b2"].reshape(1, D)

    weights = (ln1_g, ln1_b, wq_h, bq_h, wk_h, bk_h, wv_h, bv_h, wo_h, bo2,
               ln2_g, ln2_b, w1_p, b1_p, w2_p, b2_2)

    def full_spec(a):
        # Whole-array block + constant index_map -> loaded once, VMEM-resident.
        if a.ndim == 2:
            return pl.BlockSpec(a.shape, lambda b: (0, 0))
        return pl.BlockSpec(a.shape, lambda b: (0, 0, 0))

    grid_spec = pltpu.PrefetchScalarGridSpec(
        num_scalar_prefetch=0,
        grid=(B,),
        in_specs=[pl.BlockSpec((pl.Squeezed(), S, D), lambda b: (b, 0, 0))]
                 + [full_spec(a) for a in weights],
        out_specs=pl.BlockSpec((pl.Squeezed(), S, D), lambda b: (b, 0, 0)),
    )

    return pl.pallas_call(
        _transformer_block_kernel,
        out_shape=jax.ShapeDtypeStruct((B, S, D), x.dtype),
        grid_spec=grid_spec,
        compiler_params=pltpu.CompilerParams(
            dimension_semantics=("parallel",),
        ),
    )(x, *weights)


def reference_forward(x, p):
    """Pure-JAX reference matching the PyTorch TransformerBlock (eval mode)."""
    def ln(y, g, b):
        mu = y.mean(-1, keepdims=True)
        var = ((y - mu) ** 2).mean(-1, keepdims=True)
        return (y - mu) / jnp.sqrt(var + LN_EPS) * g + b

    B, S, D = x.shape
    h = ln(x, p["ln1_g"], p["ln1_b"])
    q = h @ p["wq"] + p["bq"]
    k = h @ p["wk"] + p["bk"]
    v = h @ p["wv"] + p["bv"]
    qh = q.reshape(B, S, N_HEADS, HEAD_DIM).transpose(0, 2, 1, 3)
    kh = k.reshape(B, S, N_HEADS, HEAD_DIM).transpose(0, 2, 1, 3)
    vh = v.reshape(B, S, N_HEADS, HEAD_DIM).transpose(0, 2, 1, 3)
    scores = (qh @ kh.transpose(0, 1, 3, 2)) / math.sqrt(HEAD_DIM)
    attn_p = jax.nn.softmax(scores, axis=-1)
    o = (attn_p @ vh).transpose(0, 2, 1, 3).reshape(B, S, D)
    x1 = x + o @ p["wo"] + p["bo"]
    h2 = ln(x1, p["ln2_g"], p["ln2_b"])
    f = jax.nn.relu(h2 @ p["w1"] + p["b1"])
    return x1 + f @ p["w2"] + p["b2"]


if __name__ == "__main__":
    root = jax.random.PRNGKey(0)
    B, S = 2, 8
    ks = jax.random.split(root, 11)
    x = jax.random.normal(ks[0], (B, S, D_MODEL), dtype=jnp.float32)

    def linear_params(k, din, dout):
        kw, kb = jax.random.split(k)
        bound = 1.0 / math.sqrt(din)
        w = jax.random.uniform(kw, (din, dout), jnp.float32, -bound, bound)
        b = jax.random.uniform(kb, (dout,), jnp.float32, -bound, bound)
        return w, b

    wq, bq = linear_params(ks[1], D_MODEL, D_MODEL)
    wk, bk = linear_params(ks[2], D_MODEL, D_MODEL)
    wv, bv = linear_params(ks[3], D_MODEL, D_MODEL)
    wo, bo = linear_params(ks[4], D_MODEL, D_MODEL)
    w1, b1 = linear_params(ks[5], D_MODEL, D_FF)
    w2, b2 = linear_params(ks[6], D_FF, D_MODEL)
    ln1_g = 1.0 + 0.05 * jax.random.normal(ks[7], (D_MODEL,), jnp.float32)
    ln1_b = 0.05 * jax.random.normal(ks[8], (D_MODEL,), jnp.float32)
    ln2_g = 1.0 + 0.05 * jax.random.normal(ks[9], (D_MODEL,), jnp.float32)
    ln2_b = 0.05 * jax.random.normal(ks[10], (D_MODEL,), jnp.float32)

    params = dict(ln1_g=ln1_g, ln1_b=ln1_b, wq=wq, bq=bq, wk=wk, bk=bk,
                  wv=wv, bv=bv, wo=wo, bo=bo, ln2_g=ln2_g, ln2_b=ln2_b,
                  w1=w1, b1=b1, w2=w2, b2=b2)

    out = jax.block_until_ready(transformer_block_forward(x, params))
    ref = jax.block_until_ready(reference_forward(x, params))

    assert out.shape == (B, S, D_MODEL)
    max_err = jnp.max(jnp.abs(out - ref))
    assert jnp.allclose(out, ref, atol=1e-3, rtol=1e-3), f"max abs err {max_err:.3e}"

    print("KERNEL_OK")
</pallas_src>

<mosaic_0001>
module attributes {stable_mosaic.version = 11 : i64} {
  func.func @_transformer_block_kernel(%arg0: i32, %arg1: memref<1x8x128xf32, #tpu.memory_space<vmem>>, %arg2: memref<1x128xf32, #tpu.memory_space<vmem>>, %arg3: memref<1x128xf32, #tpu.memory_space<vmem>>, %arg4: memref<8x128x16xf32, #tpu.memory_space<vmem>>, %arg5: memref<8x1x16xf32, #tpu.memory_space<vmem>>, %arg6: memref<8x128x16xf32, #tpu.memory_space<vmem>>, %arg7: memref<8x1x16xf32, #tpu.memory_space<vmem>>, %arg8: memref<8x128x16xf32, #tpu.memory_space<vmem>>, %arg9: memref<8x1x16xf32, #tpu.memory_space<vmem>>, %arg10: memref<8x16x128xf32, #tpu.memory_space<vmem>>, %arg11: memref<1x128xf32, #tpu.memory_space<vmem>>, %arg12: memref<1x128xf32, #tpu.memory_space<vmem>>, %arg13: memref<1x128xf32, #tpu.memory_space<vmem>>, %arg14: memref<128x128xf32, #tpu.memory_space<vmem>>, %arg15: memref<1x128xf32, #tpu.memory_space<vmem>>, %arg16: memref<128x128xf32, #tpu.memory_space<vmem>>, %arg17: memref<1x128xf32, #tpu.memory_space<vmem>>, %arg18: memref<1x8x128xf32, #tpu.memory_space<vmem>>) attributes {dimension_semantics = [#tpu.dimension_semantics<parallel>], iteration_bounds = array<i64: 2>, scalar_prefetch = 0 : i64, scratch_operands = 0 : i64, tpu.core_type = #tpu.core_type<tc>, window_params = [{transform_indices = @transform_0, window_bounds = array<i64: 1, 8, 128>}, {pipeline_mode = #tpu.pipeline_mode<synchronous>, transform_indices = @transform_1, window_bounds = array<i64: 1, 128>}, {pipeline_mode = #tpu.pipeline_mode<synchronous>, transform_indices = @transform_2, window_bounds = array<i64: 1, 128>}, {pipeline_mode = #tpu.pipeline_mode<synchronous>, transform_indices = @transform_3, window_bounds = array<i64: 8, 128, 16>}, {pipeline_mode = #tpu.pipeline_mode<synchronous>, transform_indices = @transform_4, window_bounds = array<i64: 8, 1, 16>}, {pipeline_mode = #tpu.pipeline_mode<synchronous>, transform_indices = @transform_5, window_bounds = array<i64: 8, 128, 16>}, {pipeline_mode = #tpu.pipeline_mode<synchronous>, transform_indices = @transform_6, window_bounds = array<i64: 8, 1, 16>}, {pipeline_mode = #tpu.pipeline_mode<synchronous>, transform_indices = @transform_7, window_bounds = array<i64: 8, 128, 16>}, {pipeline_mode = #tpu.pipeline_mode<synchronous>, transform_indices = @transform_8, window_bounds = array<i64: 8, 1, 16>}, {pipeline_mode = #tpu.pipeline_mode<synchronous>, transform_indices = @transform_9, window_bounds = array<i64: 8, 16, 128>}, {pipeline_mode = #tpu.pipeline_mode<synchronous>, transform_indices = @transform_10, window_bounds = array<i64: 1, 128>}, {pipeline_mode = #tpu.pipeline_mode<synchronous>, transform_indices = @transform_11, window_bounds = array<i64: 1, 128>}, {pipeline_mode = #tpu.pipeline_mode<synchronous>, transform_indices = @transform_12, window_bounds = array<i64: 1, 128>}, {pipeline_mode = #tpu.pipeline_mode<synchronous>, transform_indices = @transform_13, window_bounds = array<i64: 128, 128>}, {pipeline_mode = #tpu.pipeline_mode<synchronous>, transform_indices = @transform_14, window_bounds = array<i64: 1, 128>}, {pipeline_mode = #tpu.pipeline_mode<synchronous>, transform_indices = @transform_15, window_bounds = array<i64: 128, 128>}, {pipeline_mode = #tpu.pipeline_mode<synchronous>, transform_indices = @transform_16, window_bounds = array<i64: 1, 128>}, {transform_indices = @transform_17, window_bounds = array<i64: 1, 8, 128>}]} {
    %c0 = arith.constant 0 : index
    %c0_0 = arith.constant 0 : index
    %c0_1 = arith.constant 0 : index
    %0 = vector.load %arg1[%c0, %c0_0, %c0_1] : memref<1x8x128xf32, #tpu.memory_space<vmem>>, vector<1x8x128xf32>
    %1 = vector.shape_cast %0 : vector<1x8x128xf32> to vector<8x128xf32>
    %cst = arith.constant dense<0.000000e+00> : vector<8xf32>
    %2 = vector.multi_reduction <add>, %1, %cst [1] : vector<8x128xf32> to vector<8xf32>
    %3 = vector.shape_cast %2 : vector<8xf32> to vector<8x1xf32>
    %cst_2 = arith.constant 1.280000e+02 : f32
    %4 = vector.broadcast %cst_2 : f32 to vector<8x1xf32>
    %5 = arith.divf %3, %4 : vector<8x1xf32>
    %6 = vector.broadcast %5 : vector<8x1xf32> to vector<8x128xf32>
    %7 = arith.subf %1, %6 : vector<8x128xf32>
    %8 = arith.mulf %7, %7 : vector<8x128xf32>
    %cst_3 = arith.constant dense<0.000000e+00> : vector<8xf32>
    %9 = vector.multi_reduction <add>, %8, %cst_3 [1] : vector<8x128xf32> to vector<8xf32>
    %10 = vector.shape_cast %9 : vector<8xf32> to vector<8x1xf32>
    %cst_4 = arith.constant 1.280000e+02 : f32
    %11 = vector.broadcast %cst_4 : f32 to vector<8x1xf32>
    %12 = arith.divf %10, %11 : vector<8x1xf32>
    %cst_5 = arith.constant 9.99999974E-6 : f32
    %13 = vector.broadcast %cst_5 : f32 to vector<8x1xf32>
    %14 = arith.addf %12, %13 : vector<8x1xf32>
    %15 = math.rsqrt %14 : vector<8x1xf32>
    %16 = vector.broadcast %15 : vector<8x1xf32> to vector<8x128xf32>
    %17 = arith.mulf %7, %16 : vector<8x128xf32>
    %c0_6 = arith.constant 0 : index
    %c0_7 = arith.constant 0 : index
    %18 = vector.load %arg2[%c0_6, %c0_7] : memref<1x128xf32, #tpu.memory_space<vmem>>, vector<1x128xf32>
    %19 = vector.broadcast %18 : vector<1x128xf32> to vector<8x128xf32>
    %20 = arith.mulf %17, %19 : vector<8x128xf32>
    %c0_8 = arith.constant 0 : index
    %c0_9 = arith.constant 0 : index
    %21 = vector.load %arg3[%c0_8, %c0_9] : memref<1x128xf32, #tpu.memory_space<vmem>>, vector<1x128xf32>
    %22 = vector.broadcast %21 : vector<1x128xf32> to vector<8x128xf32>
    %23 = arith.addf %20, %22 : vector<8x128xf32>
    %c0_10 = arith.constant 0 : index
    %c0_11 = arith.constant 0 : index
    %c0_12 = arith.constant 0 : index
    %24 = vector.load %arg4[%c0_10, %c0_11, %c0_12] : memref<8x128x16xf32, #tpu.memory_space<vmem>>, vector<1x128x16xf32>
    %25 = vector.shape_cast %24 : vector<1x128x16xf32> to vector<128x16xf32>
    %cst_13 = arith.constant dense<0.000000e+00> : vector<8x16xf32>
    %26 = tpu.matmul %23, %25, %cst_13 {dimension_numbers = #tpu.dot_dimension_numbers<[1], [0], [0], [1], [0, 0, 1, 1], [], []>} : vector<8x128xf32>, vector<128x16xf32>, vector<8x16xf32> -> vector<8x16xf32>
    %c0_14 = arith.constant 0 : index
    %c0_15 = arith.constant 0 : index
    %c0_16 = arith.constant 0 : index
    %27 = vector.load %arg5[%c0_14, %c0_15, %c0_16] : memref<8x1x16xf32, #tpu.memory_space<vmem>>, vector<1x1x16xf32>
    %28 = vector.shape_cast %27 : vector<1x1x16xf32> to vector<1x16xf32>
    %29 = vector.broadcast %28 : vector<1x16xf32> to vector<8x16xf32>
    %30 = arith.addf %26, %29 : vector<8x16xf32>
    %c0_17 = arith.constant 0 : index
    %c0_18 = arith.constant 0 : index
    %c0_19 = arith.constant 0 : index
    %31 = vector.load %arg6[%c0_17, %c0_18, %c0_19] : memref<8x128x16xf32, #tpu.memory_space<vmem>>, vector<1x128x16xf32>
    %32 = vector.shape_cast %31 : vector<1x128x16xf32> to vector<128x16xf32>
    %cst_20 = arith.constant dense<0.000000e+00> : vector<8x16xf32>
    %33 = tpu.matmul %23, %32, %cst_20 {dimension_numbers = #tpu.dot_dimension_numbers<[1], [0], [0], [1], [0, 0, 1, 1], [], []>} : vector<8x128xf32>, vector<128x16xf32>, vector<8x16xf32> -> vector<8x16xf32>
    %c0_21 = arith.constant 0 : index
    %c0_22 = arith.constant 0 : index
    %c0_23 = arith.constant 0 : index
    %34 = vector.load %arg7[%c0_21, %c0_22, %c0_23] : memref<8x1x16xf32, #tpu.memory_space<vmem>>, vector<1x1x16xf32>
    %35 = vector.shape_cast %34 : vector<1x1x16xf32> to vector<1x16xf32>
    %36 = vector.broadcast %35 : vector<1x16xf32> to vector<8x16xf32>
    %37 = arith.addf %33, %36 : vector<8x16xf32>
    %c0_24 = arith.constant 0 : index
    %c0_25 = arith.constant 0 : index
    %c0_26 = arith.constant 0 : index
    %38 = vector.load %arg8[%c0_24, %c0_25, %c0_26] : memref<8x128x16xf32, #tpu.memory_space<vmem>>, vector<1x128x16xf32>
    %39 = vector.shape_cast %38 : vector<1x128x16xf32> to vector<128x16xf32>
    %cst_27 = arith.constant dense<0.000000e+00> : vector<8x16xf32>
    %40 = tpu.matmul %23, %39, %cst_27 {dimension_numbers = #tpu.dot_dimension_numbers<[1], [0], [0], [1], [0, 0, 1, 1], [], []>} : vector<8x128xf32>, vector<128x16xf32>, vector<8x16xf32> -> vector<8x16xf32>
    %c0_28 = arith.constant 0 : index
    %c0_29 = arith.constant 0 : index
    %c0_30 = arith.constant 0 : index
    %41 = vector.load %arg9[%c0_28, %c0_29, %c0_30] : memref<8x1x16xf32, #tpu.memory_space<vmem>>, vector<1x1x16xf32>
    %42 = vector.shape_cast %41 : vector<1x1x16xf32> to vector<1x16xf32>
    %43 = vector.broadcast %42 : vector<1x16xf32> to vector<8x16xf32>
    %44 = arith.addf %40, %43 : vector<8x16xf32>
    %cst_31 = arith.constant dense<0.000000e+00> : vector<8x8xf32>
    %45 = tpu.matmul %30, %37, %cst_31 {dimension_numbers = #tpu.dot_dimension_numbers<[1], [1], [0], [0], [0, 0, 1, 0], [], []>} : vector<8x16xf32>, vector<8x16xf32>, vector<8x8xf32> -> vector<8x8xf32>
    %cst_32 = arith.constant 2.500000e-01 : f32
    %46 = vector.broadcast %cst_32 : f32 to vector<8x8xf32>
    %47 = arith.mulf %45, %46 : vector<8x8xf32>
    %cst_33 = arith.constant dense<0xFF800000> : vector<8xf32>
    %48 = vector.multi_reduction <maximumf>, %47, %cst_33 [1] : vector<8x8xf32> to vector<8xf32>
    %49 = vector.shape_cast %48 : vector<8xf32> to vector<8x1xf32>
    %50 = vector.broadcast %49 : vector<8x1xf32> to vector<8x8xf32>
    %51 = arith.subf %47, %50 : vector<8x8xf32>
    %52 = math.exp %51 : vector<8x8xf32>
    %cst_34 = arith.constant dense<0.000000e+00> : vector<8xf32>
    %53 = vector.multi_reduction <add>, %52, %cst_34 [1] : vector<8x8xf32> to vector<8xf32>
    %54 = vector.shape_cast %53 : vector<8xf32> to vector<8x1xf32>
    %55 = vector.broadcast %54 : vector<8x1xf32> to vector<8x8xf32>
    %56 = arith.divf %52, %55 : vector<8x8xf32>
    %cst_35 = arith.constant dense<0.000000e+00> : vector<8x16xf32>
    %57 = tpu.matmul %56, %44, %cst_35 {dimension_numbers = #tpu.dot_dimension_numbers<[1], [0], [0], [1], [0, 0, 1, 1], [], []>} : vector<8x8xf32>, vector<8x16xf32>, vector<8x16xf32> -> vector<8x16xf32>
    %c0_36 = arith.constant 0 : index
    %c0_37 = arith.constant 0 : index
    %c0_38 = arith.constant 0 : index
    %58 = vector.load %arg10[%c0_36, %c0_37, %c0_38] : memref<8x16x128xf32, #tpu.memory_space<vmem>>, vector<1x16x128xf32>
    %59 = vector.shape_cast %58 : vector<1x16x128xf32> to vector<16x128xf32>
    %cst_39 = arith.constant dense<0.000000e+00> : vector<8x128xf32>
    %60 = tpu.matmul %57, %59, %cst_39 {dimension_numbers = #tpu.dot_dimension_numbers<[1], [0], [0], [1], [0, 0, 1, 1], [], []>} : vector<8x16xf32>, vector<16x128xf32>, vector<8x128xf32> -> vector<8x128xf32>
    %c1 = arith.constant 1 : index
    %c0_40 = arith.constant 0 : index
    %c0_41 = arith.constant 0 : index
    %61 = vector.load %arg4[%c1, %c0_40, %c0_41] : memref<8x128x16xf32, #tpu.memory_space<vmem>>, vector<1x128x16xf32>
    %62 = vector.shape_cast %61 : vector<1x128x16xf32> to vector<128x16xf32>
    %cst_42 = arith.constant dense<0.000000e+00> : vector<8x16xf32>
    %63 = tpu.matmul %23, %62, %cst_42 {dimension_numbers = #tpu.dot_dimension_numbers<[1], [0], [0], [1], [0, 0, 1, 1], [], []>} : vector<8x128xf32>, vector<128x16xf32>, vector<8x16xf32> -> vector<8x16xf32>
    %c1_43 = arith.constant 1 : index
    %c0_44 = arith.constant 0 : index
    %c0_45 = arith.constant 0 : index
    %64 = vector.load %arg5[%c1_43, %c0_44, %c0_45] : memref<8x1x16xf32, #tpu.memory_space<vmem>>, vector<1x1x16xf32>
    %65 = vector.shape_cast %64 : vector<1x1x16xf32> to vector<1x16xf32>
    %66 = vector.broadcast %65 : vector<1x16xf32> to vector<8x16xf32>
    %67 = arith.addf %63, %66 : vector<8x16xf32>
    %c1_46 = arith.constant 1 : index
    %c0_47 = arith.constant 0 : index
    %c0_48 = arith.constant 0 : index
    %68 = vector.load %arg6[%c1_46, %c0_47, %c0_48] : memref<8x128x16xf32, #tpu.memory_space<vmem>>, vector<1x128x16xf32>
    %69 = vector.shape_cast %68 : vector<1x128x16xf32> to vector<128x16xf32>
    %cst_49 = arith.constant dense<0.000000e+00> : vector<8x16xf32>
    %70 = tpu.matmul %23, %69, %cst_49 {dimension_numbers = #tpu.dot_dimension_numbers<[1], [0], [0], [1], [0, 0, 1, 1], [], []>} : vector<8x128xf32>, vector<128x16xf32>, vector<8x16xf32> -> vector<8x16xf32>
    %c1_50 = arith.constant 1 : index
    %c0_51 = arith.constant 0 : index
    %c0_52 = arith.constant 0 : index
    %71 = vector.load %arg7[%c1_50, %c0_51, %c0_52] : memref<8x1x16xf32, #tpu.memory_space<vmem>>, vector<1x1x16xf32>
    %72 = vector.shape_cast %71 : vector<1x1x16xf32> to vector<1x16xf32>
    %73 = vector.broadcast %72 : vector<1x16xf32> to vector<8x16xf32>
    %74 = arith.addf %70, %73 : vector<8x16xf32>
    %c1_53 = arith.constant 1 : index
    %c0_54 = arith.constant 0 : index
    %c0_55 = arith.constant 0 : index
    %75 = vector.load %arg8[%c1_53, %c0_54, %c0_55] : memref<8x128x16xf32, #tpu.memory_space<vmem>>, vector<1x128x16xf32>
    %76 = vector.shape_cast %75 : vector<1x128x16xf32> to vector<128x16xf32>
    %cst_56 = arith.constant dense<0.000000e+00> : vector<8x16xf32>
    %77 = tpu.matmul %23, %76, %cst_56 {dimension_numbers = #tpu.dot_dimension_numbers<[1], [0], [0], [1], [0, 0, 1, 1], [], []>} : vector<8x128xf32>, vector<128x16xf32>, vector<8x16xf32> -> vector<8x16xf32>
    %c1_57 = arith.constant 1 : index
    %c0_58 = arith.constant 0 : index
    %c0_59 = arith.constant 0 : index
    %78 = vector.load %arg9[%c1_57, %c0_58, %c0_59] : memref<8x1x16xf32, #tpu.memory_space<vmem>>, vector<1x1x16xf32>
    %79 = vector.shape_cast %78 : vector<1x1x16xf32> to vector<1x16xf32>
    %80 = vector.broadcast %79 : vector<1x16xf32> to vector<8x16xf32>
    %81 = arith.addf %77, %80 : vector<8x16xf32>
    %cst_60 = arith.constant dense<0.000000e+00> : vector<8x8xf32>
    %82 = tpu.matmul %67, %74, %cst_60 {dimension_numbers = #tpu.dot_dimension_numbers<[1], [1], [0], [0], [0, 0, 1, 0], [], []>} : vector<8x16xf32>, vector<8x16xf32>, vector<8x8xf32> -> vector<8x8xf32>
    %cst_61 = arith.constant 2.500000e-01 : f32
    %83 = vector.broadcast %cst_61 : f32 to vector<8x8xf32>
    %84 = arith.mulf %82, %83 : vector<8x8xf32>
    %cst_62 = arith.constant dense<0xFF800000> : vector<8xf32>
    %85 = vector.multi_reduction <maximumf>, %84, %cst_62 [1] : vector<8x8xf32> to vector<8xf32>
    %86 = vector.shape_cast %85 : vector<8xf32> to vector<8x1xf32>
    %87 = vector.broadcast %86 : vector<8x1xf32> to vector<8x8xf32>
    %88 = arith.subf %84, %87 : vector<8x8xf32>
    %89 = math.exp %88 : vector<8x8xf32>
    %cst_63 = arith.constant dense<0.000000e+00> : vector<8xf32>
    %90 = vector.multi_reduction <add>, %89, %cst_63 [1] : vector<8x8xf32> to vector<8xf32>
    %91 = vector.shape_cast %90 : vector<8xf32> to vector<8x1xf32>
    %92 = vector.broadcast %91 : vector<8x1xf32> to vector<8x8xf32>
    %93 = arith.divf %89, %92 : vector<8x8xf32>
    %cst_64 = arith.constant dense<0.000000e+00> : vector<8x16xf32>
    %94 = tpu.matmul %93, %81, %cst_64 {dimension_numbers = #tpu.dot_dimension_numbers<[1], [0], [0], [1], [0, 0, 1, 1], [], []>} : vector<8x8xf32>, vector<8x16xf32>, vector<8x16xf32> -> vector<8x16xf32>
    %c1_65 = arith.constant 1 : index
    %c0_66 = arith.constant 0 : index
    %c0_67 = arith.constant 0 : index
    %95 = vector.load %arg10[%c1_65, %c0_66, %c0_67] : memref<8x16x128xf32, #tpu.memory_space<vmem>>, vector<1x16x128xf32>
    %96 = vector.shape_cast %95 : vector<1x16x128xf32> to vector<16x128xf32>
    %cst_68 = arith.constant dense<0.000000e+00> : vector<8x128xf32>
    %97 = tpu.matmul %94, %96, %cst_68 {dimension_numbers = #tpu.dot_dimension_numbers<[1], [0], [0], [1], [0, 0, 1, 1], [], []>} : vector<8x16xf32>, vector<16x128xf32>, vector<8x128xf32> -> vector<8x128xf32>
    %98 = arith.addf %60, %97 : vector<8x128xf32>
    %c2 = arith.constant 2 : index
    %c0_69 = arith.constant 0 : index
    %c0_70 = arith.constant 0 : index
    %99 = vector.load %arg4[%c2, %c0_69, %c0_70] : memref<8x128x16xf32, #tpu.memory_space<vmem>>, vector<1x128x16xf32>
    %100 = vector.shape_cast %99 : vector<1x128x16xf32> to vector<128x16xf32>
    %cst_71 = arith.constant dense<0.000000e+00> : vector<8x16xf32>
    %101 = tpu.matmul %23, %100, %cst_71 {dimension_numbers = #tpu.dot_dimension_numbers<[1], [0], [0], [1], [0, 0, 1, 1], [], []>} : vector<8x128xf32>, vector<128x16xf32>, vector<8x16xf32> -> vector<8x16xf32>
    %c2_72 = arith.constant 2 : index
    %c0_73 = arith.constant 0 : index
    %c0_74 = arith.constant 0 : index
    %102 = vector.load %arg5[%c2_72, %c0_73, %c0_74] : memref<8x1x16xf32, #tpu.memory_space<vmem>>, vector<1x1x16xf32>
    %103 = vector.shape_cast %102 : vector<1x1x16xf32> to vector<1x16xf32>
    %104 = vector.broadcast %103 : vector<1x16xf32> to vector<8x16xf32>
    %105 = arith.addf %101, %104 : vector<8x16xf32>
    %c2_75 = arith.constant 2 : index
    %c0_76 = arith.constant 0 : index
    %c0_77 = arith.constant 0 : index
    %106 = vector.load %arg6[%c2_75, %c0_76, %c0_77] : memref<8x128x16xf32, #tpu.memory_space<vmem>>, vector<1x128x16xf32>
    %107 = vector.shape_cast %106 : vector<1x128x16xf32> to vector<128x16xf32>
    %cst_78 = arith.constant dense<0.000000e+00> : vector<8x16xf32>
    %108 = tpu.matmul %23, %107, %cst_78 {dimension_numbers = #tpu.dot_dimension_numbers<[1], [0], [0], [1], [0, 0, 1, 1], [], []>} : vector<8x128xf32>, vector<128x16xf32>, vector<8x16xf32> -> vector<8x16xf32>
    %c2_79 = arith.constant 2 : index
    %c0_80 = arith.constant 0 : index
    %c0_81 = arith.constant 0 : index
    %109 = vector.load %arg7[%c2_79, %c0_80, %c0_81] : memref<8x1x16xf32, #tpu.memory_space<vmem>>, vector<1x1x16xf32>
    %110 = vector.shape_cast %109 : vector<1x1x16xf32> to vector<1x16xf32>
    %111 = vector.broadcast %110 : vector<1x16xf32> to vector<8x16xf32>
    %112 = arith.addf %108, %111 : vector<8x16xf32>
    %c2_82 = arith.constant 2 : index
    %c0_83 = arith.constant 0 : index
    %c0_84 = arith.constant 0 : index
    %113 = vector.load %arg8[%c2_82, %c0_83, %c0_84] : memref<8x128x16xf32, #tpu.memory_space<vmem>>, vector<1x128x16xf32>
    %114 = vector.shape_cast %113 : vector<1x128x16xf32> to vector<128x16xf32>
    %cst_85 = arith.constant dense<0.000000e+00> : vector<8x16xf32>
    %115 = tpu.matmul %23, %114, %cst_85 {dimension_numbers = #tpu.dot_dimension_numbers<[1], [0], [0], [1], [0, 0, 1, 1], [], []>} : vector<8x128xf32>, vector<128x16xf32>, vector<8x16xf32> -> vector<8x16xf32>
    %c2_86 = arith.constant 2 : index
    %c0_87 = arith.constant 0 : index
    %c0_88 = arith.constant 0 : index
    %116 = vector.load %arg9[%c2_86, %c0_87, %c0_88] : memref<8x1x16xf32, #tpu.memory_space<vmem>>, vector<1x1x16xf32>
    %117 = vector.shape_cast %116 : vector<1x1x16xf32> to vector<1x16xf32>
    %118 = vector.broadcast %117 : vector<1x16xf32> to vector<8x16xf32>
    %119 = arith.addf %115, %118 : vector<8x16xf32>
    %cst_89 = arith.constant dense<0.000000e+00> : vector<8x8xf32>
    %120 = tpu.matmul %105, %112, %cst_89 {dimension_numbers = #tpu.dot_dimension_numbers<[1], [1], [0], [0], [0, 0, 1, 0], [], []>} : vector<8x16xf32>, vector<8x16xf32>, vector<8x8xf32> -> vector<8x8xf32>
    %cst_90 = arith.constant 2.500000e-01 : f32
    %121 = vector.broadcast %cst_90 : f32 to vector<8x8xf32>
    %122 = arith.mulf %120, %121 : vector<8x8xf32>
    %cst_91 = arith.constant dense<0xFF800000> : vector<8xf32>
    %123 = vector.multi_reduction <maximumf>, %122, %cst_91 [1] : vector<8x8xf32> to vector<8xf32>
    %124 = vector.shape_cast %123 : vector<8xf32> to vector<8x1xf32>
    %125 = vector.broadcast %124 : vector<8x1xf32> to vector<8x8xf32>
    %126 = arith.subf %122, %125 : vector<8x8xf32>
    %127 = math.exp %126 : vector<8x8xf32>
    %cst_92 = arith.constant dense<0.000000e+00> : vector<8xf32>
    %128 = vector.multi_reduction <add>, %127, %cst_92 [1] : vector<8x8xf32> to vector<8xf32>
    %129 = vector.shape_cast %128 : vector<8xf32> to vector<8x1xf32>
    %130 = vector.broadcast %129 : vector<8x1xf32> to vector<8x8xf32>
    %131 = arith.divf %127, %130 : vector<8x8xf32>
    %cst_93 = arith.constant dense<0.000000e+00> : vector<8x16xf32>
    %132 = tpu.matmul %131, %119, %cst_93 {dimension_numbers = #tpu.dot_dimension_numbers<[1], [0], [0], [1], [0, 0, 1, 1], [], []>} : vector<8x8xf32>, vector<8x16xf32>, vector<8x16xf32> -> vector<8x16xf32>
    %c2_94 = arith.constant 2 : index
    %c0_95 = arith.constant 0 : index
    %c0_96 = arith.constant 0 : index
    %133 = vector.load %arg10[%c2_94, %c0_95, %c0_96] : memref<8x16x128xf32, #tpu.memory_space<vmem>>, vector<1x16x128xf32>
    %134 = vector.shape_cast %133 : vector<1x16x128xf32> to vector<16x128xf32>
    %cst_97 = arith.constant dense<0.000000e+00> : vector<8x128xf32>
    %135 = tpu.matmul %132, %134, %cst_97 {dimension_numbers = #tpu.dot_dimension_numbers<[1], [0], [0], [1], [0, 0, 1, 1], [], []>} : vector<8x16xf32>, vector<16x128xf32>, vector<8x128xf32> -> vector<8x128xf32>
    %136 = arith.addf %98, %135 : vector<8x128xf32>
    %c3 = arith.constant 3 : index
    %c0_98 = arith.constant 0 : index
    %c0_99 = arith.constant 0 : index
    %137 = vector.load %arg4[%c3, %c0_98, %c0_99] : memref<8x128x16xf32, #tpu.memory_space<vmem>>, vector<1x128x16xf32>
    %138 = vector.shape_cast %137 : vector<1x128x16xf32> to vector<128x16xf32>
    %cst_100 = arith.constant dense<0.000000e+00> : vector<8x16xf32>
    %139 = tpu.matmul %23, %138, %cst_100 {dimension_numbers = #tpu.dot_dimension_numbers<[1], [0], [0], [1], [0, 0, 1, 1], [], []>} : vector<8x128xf32>, vector<128x16xf32>, vector<8x16xf32> -> vector<8x16xf32>
    %c3_101 = arith.constant 3 : index
    %c0_102 = arith.constant 0 : index
    %c0_103 = arith.constant 0 : index
    %140 = vector.load %arg5[%c3_101, %c0_102, %c0_103] : memref<8x1x16xf32, #tpu.memory_space<vmem>>, vector<1x1x16xf32>
    %141 = vector.shape_cast %140 : vector<1x1x16xf32> to vector<1x16xf32>
    %142 = vector.broadcast %141 : vector<1x16xf32> to vector<8x16xf32>
    %143 = arith.addf %139, %142 : vector<8x16xf32>
    %c3_104 = arith.constant 3 : index
    %c0_105 = arith.constant 0 : index
    %c0_106 = arith.constant 0 : index
    %144 = vector.load %arg6[%c3_104, %c0_105, %c0_106] : memref<8x128x16xf32, #tpu.memory_space<vmem>>, vector<1x128x16xf32>
    %145 = vector.shape_cast %144 : vector<1x128x16xf32> to vector<128x16xf32>
    %cst_107 = arith.constant dense<0.000000e+00> : vector<8x16xf32>
    %146 = tpu.matmul %23, %145, %cst_107 {dimension_numbers = #tpu.dot_dimension_numbers<[1], [0], [0], [1], [0, 0, 1, 1], [], []>} : vector<8x128xf32>, vector<128x16xf32>, vector<8x16xf32> -> vector<8x16xf32>
    %c3_108 = arith.constant 3 : index
    %c0_109 = arith.constant 0 : index
    %c0_110 = arith.constant 0 : index
    %147 = vector.load %arg7[%c3_108, %c0_109, %c0_110] : memref<8x1x16xf32, #tpu.memory_space<vmem>>, vector<1x1x16xf32>
    %148 = vector.shape_cast %147 : vector<1x1x16xf32> to vector<1x16xf32>
    %149 = vector.broadcast %148 : vector<1x16xf32> to vector<8x16xf32>
    %150 = arith.addf %146, %149 : vector<8x16xf32>
    %c3_111 = arith.constant 3 : index
    %c0_112 = arith.constant 0 : index
    %c0_113 = arith.constant 0 : index
    %151 = vector.load %arg8[%c3_111, %c0_112, %c0_113] : memref<8x128x16xf32, #tpu.memory_space<vmem>>, vector<1x128x16xf32>
    %152 = vector.shape_cast %151 : vector<1x128x16xf32> to vector<128x16xf32>
    %cst_114 = arith.constant dense<0.000000e+00> : vector<8x16xf32>
    %153 = tpu.matmul %23, %152, %cst_114 {dimension_numbers = #tpu.dot_dimension_numbers<[1], [0], [0], [1], [0, 0, 1, 1], [], []>} : vector<8x128xf32>, vector<128x16xf32>, vector<8x16xf32> -> vector<8x16xf32>
    %c3_115 = arith.constant 3 : index
    %c0_116 = arith.constant 0 : index
    %c0_117 = arith.constant 0 : index
    %154 = vector.load %arg9[%c3_115, %c0_116, %c0_117] : memref<8x1x16xf32, #tpu.memory_space<vmem>>, vector<1x1x16xf32>
    %155 = vector.shape_cast %154 : vector<1x1x16xf32> to vector<1x16xf32>
    %156 = vector.broadcast %155 : vector<1x16xf32> to vector<8x16xf32>
    %157 = arith.addf %153, %156 : vector<8x16xf32>
    %cst_118 = arith.constant dense<0.000000e+00> : vector<8x8xf32>
    %158 = tpu.matmul %143, %150, %cst_118 {dimension_numbers = #tpu.dot_dimension_numbers<[1], [1], [0], [0], [0, 0, 1, 0], [], []>} : vector<8x16xf32>, vector<8x16xf32>, vector<8x8xf32> -> vector<8x8xf32>
    %cst_119 = arith.constant 2.500000e-01 : f32
    %159 = vector.broadcast %cst_119 : f32 to vector<8x8xf32>
    %160 = arith.mulf %158, %159 : vector<8x8xf32>
    %cst_120 = arith.constant dense<0xFF800000> : vector<8xf32>
    %161 = vector.multi_reduction <maximumf>, %160, %cst_120 [1] : vector<8x8xf32> to vector<8xf32>
    %162 = vector.shape_cast %161 : vector<8xf32> to vector<8x1xf32>
    %163 = vector.broadcast %162 : vector<8x1xf32> to vector<8x8xf32>
    %164 = arith.subf %160, %163 : vector<8x8xf32>
    %165 = math.exp %164 : vector<8x8xf32>
    %cst_121 = arith.constant dense<0.000000e+00> : vector<8xf32>
    %166 = vector.multi_reduction <add>, %165, %cst_121 [1] : vector<8x8xf32> to vector<8xf32>
    %167 = vector.shape_cast %166 : vector<8xf32> to vector<8x1xf32>
    %168 = vector.broadcast %167 : vector<8x1xf32> to vector<8x8xf32>
    %169 = arith.divf %165, %168 : vector<8x8xf32>
    %cst_122 = arith.constant dense<0.000000e+00> : vector<8x16xf32>
    %170 = tpu.matmul %169, %157, %cst_122 {dimension_numbers = #tpu.dot_dimension_numbers<[1], [0], [0], [1], [0, 0, 1, 1], [], []>} : vector<8x8xf32>, vector<8x16xf32>, vector<8x16xf32> -> vector<8x16xf32>
    %c3_123 = arith.constant 3 : index
    %c0_124 = arith.constant 0 : index
    %c0_125 = arith.constant 0 : index
    %171 = vector.load %arg10[%c3_123, %c0_124, %c0_125] : memref<8x16x128xf32, #tpu.memory_space<vmem>>, vector<1x16x128xf32>
    %172 = vector.shape_cast %171 : vector<1x16x128xf32> to vector<16x128xf32>
    %cst_126 = arith.constant dense<0.000000e+00> : vector<8x128xf32>
    %173 = tpu.matmul %170, %172, %cst_126 {dimension_numbers = #tpu.dot_dimension_numbers<[1], [0], [0], [1], [0, 0, 1, 1], [], []>} : vector<8x16xf32>, vector<16x128xf32>, vector<8x128xf32> -> vector<8x128xf32>
    %174 = arith.addf %136, %173 : vector<8x128xf32>
    %c4 = arith.constant 4 : index
    %c0_127 = arith.constant 0 : index
    %c0_128 = arith.constant 0 : index
    %175 = vector.load %arg4[%c4, %c0_127, %c0_128] : memref<8x128x16xf32, #tpu.memory_space<vmem>>, vector<1x128x16xf32>
    %176 = vector.shape_cast %175 : vector<1x128x16xf32> to vector<128x16xf32>
    %cst_129 = arith.constant dense<0.000000e+00> : vector<8x16xf32>
    %177 = tpu.matmul %23, %176, %cst_129 {dimension_numbers = #tpu.dot_dimension_numbers<[1], [0], [0], [1], [0, 0, 1, 1], [], []>} : vector<8x128xf32>, vector<128x16xf32>, vector<8x16xf32> -> vector<8x16xf32>
    %c4_130 = arith.constant 4 : index
    %c0_131 = arith.constant 0 : index
    %c0_132 = arith.constant 0 : index
    %178 = vector.load %arg5[%c4_130, %c0_131, %c0_132] : memref<8x1x16xf32, #tpu.memory_space<vmem>>, vector<1x1x16xf32>
    %179 = vector.shape_cast %178 : vector<1x1x16xf32> to vector<1x16xf32>
    %180 = vector.broadcast %179 : vector<1x16xf32> to vector<8x16xf32>
    %181 = arith.addf %177, %180 : vector<8x16xf32>
    %c4_133 = arith.constant 4 : index
    %c0_134 = arith.constant 0 : index
    %c0_135 = arith.constant 0 : index
    %182 = vector.load %arg6[%c4_133, %c0_134, %c0_135] : memref<8x128x16xf32, #tpu.memory_space<vmem>>, vector<1x128x16xf32>
    %183 = vector.shape_cast %182 : vector<1x128x16xf32> to vector<128x16xf32>
    %cst_136 = arith.constant dense<0.000000e+00> : vector<8x16xf32>
    %184 = tpu.matmul %23, %183, %cst_136 {dimension_numbers = #tpu.dot_dimension_numbers<[1], [0], [0], [1], [0, 0, 1, 1], [], []>} : vector<8x128xf32>, vector<128x16xf32>, vector<8x16xf32> -> vector<8x16xf32>
    %c4_137 = arith.constant 4 : index
    %c0_138 = arith.constant 0 : index
    %c0_139 = arith.constant 0 : index
    %185 = vector.load %arg7[%c4_137, %c0_138, %c0_139] : memref<8x1x16xf32, #tpu.memory_space<vmem>>, vector<1x1x16xf32>
    %186 = vector.shape_cast %185 : vector<1x1x16xf32> to vector<1x16xf32>
    %187 = vector.broadcast %186 : vector<1x16xf32> to vector<8x16xf32>
    %188 = arith.addf %184, %187 : vector<8x16xf32>
    %c4_140 = arith.constant 4 : index
    %c0_141 = arith.constant 0 : index
    %c0_142 = arith.constant 0 : index
    %189 = vector.load %arg8[%c4_140, %c0_141, %c0_142] : memref<8x128x16xf32, #tpu.memory_space<vmem>>, vector<1x128x16xf32>
    %190 = vector.shape_cast %189 : vector<1x128x16xf32> to vector<128x16xf32>
    %cst_143 = arith.constant dense<0.000000e+00> : vector<8x16xf32>
    %191 = tpu.matmul %23, %190, %cst_143 {dimension_numbers = #tpu.dot_dimension_numbers<[1], [0], [0], [1], [0, 0, 1, 1], [], []>} : vector<8x128xf32>, vector<128x16xf32>, vector<8x16xf32> -> vector<8x16xf32>
    %c4_144 = arith.constant 4 : index
    %c0_145 = arith.constant 0 : index
    %c0_146 = arith.constant 0 : index
    %192 = vector.load %arg9[%c4_144, %c0_145, %c0_146] : memref<8x1x16xf32, #tpu.memory_space<vmem>>, vector<1x1x16xf32>
    %193 = vector.shape_cast %192 : vector<1x1x16xf32> to vector<1x16xf32>
    %194 = vector.broadcast %193 : vector<1x16xf32> to vector<8x16xf32>
    %195 = arith.addf %191, %194 : vector<8x16xf32>
    %cst_147 = arith.constant dense<0.000000e+00> : vector<8x8xf32>
    %196 = tpu.matmul %181, %188, %cst_147 {dimension_numbers = #tpu.dot_dimension_numbers<[1], [1], [0], [0], [0, 0, 1, 0], [], []>} : vector<8x16xf32>, vector<8x16xf32>, vector<8x8xf32> -> vector<8x8xf32>
    %cst_148 = arith.constant 2.500000e-01 : f32
    %197 = vector.broadcast %cst_148 : f32 to vector<8x8xf32>
    %198 = arith.mulf %196, %197 : vector<8x8xf32>
    %cst_149 = arith.constant dense<0xFF800000> : vector<8xf32>
    %199 = vector.multi_reduction <maximumf>, %198, %cst_149 [1] : vector<8x8xf32> to vector<8xf32>
    %200 = vector.shape_cast %199 : vector<8xf32> to vector<8x1xf32>
    %201 = vector.broadcast %200 : vector<8x1xf32> to vector<8x8xf32>
    %202 = arith.subf %198, %201 : vector<8x8xf32>
    %203 = math.exp %202 : vector<8x8xf32>
    %cst_150 = arith.constant dense<0.000000e+00> : vector<8xf32>
    %204 = vector.multi_reduction <add>, %203, %cst_150 [1] : vector<8x8xf32> to vector<8xf32>
    %205 = vector.shape_cast %204 : vector<8xf32> to vector<8x1xf32>
    %206 = vector.broadcast %205 : vector<8x1xf32> to vector<8x8xf32>
    %207 = arith.divf %203, %206 : vector<8x8xf32>
    %cst_151 = arith.constant dense<0.000000e+00> : vector<8x16xf32>
    %208 = tpu.matmul %207, %195, %cst_151 {dimension_numbers = #tpu.dot_dimension_numbers<[1], [0], [0], [1], [0, 0, 1, 1], [], []>} : vector<8x8xf32>, vector<8x16xf32>, vector<8x16xf32> -> vector<8x16xf32>
    %c4_152 = arith.constant 4 : index
    %c0_153 = arith.constant 0 : index
    %c0_154 = arith.constant 0 : index
    %209 = vector.load %arg10[%c4_152, %c0_153, %c0_154] : memref<8x16x128xf32, #tpu.memory_space<vmem>>, vector<1x16x128xf32>
    %210 = vector.shape_cast %209 : vector<1x16x128xf32> to vector<16x128xf32>
    %cst_155 = arith.constant dense<0.000000e+00> : vector<8x128xf32>
    %211 = tpu.matmul %208, %210, %cst_155 {dimension_numbers = #tpu.dot_dimension_numbers<[1], [0], [0], [1], [0, 0, 1, 1], [], []>} : vector<8x16xf32>, vector<16x128xf32>, vector<8x128xf32> -> vector<8x128xf32>
    %212 = arith.addf %174, %211 : vector<8x128xf32>
    %c5 = arith.constant 5 : index
    %c0_156 = arith.constant 0 : index
    %c0_157 = arith.constant 0 : index
    %213 = vector.load %arg4[%c5, %c0_156, %c0_157] : memref<8x128x16xf32, #tpu.memory_space<vmem>>, vector<1x128x16xf32>
    %214 = vector.shape_cast %213 : vector<1x128x16xf32> to vector<128x16xf32>
    %cst_158 = arith.constant dense<0.000000e+00> : vector<8x16xf32>
    %215 = tpu.matmul %23, %214, %cst_158 {dimension_numbers = #tpu.dot_dimension_numbers<[1], [0], [0], [1], [0, 0, 1, 1], [], []>} : vector<8x128xf32>, vector<128x16xf32>, vector<8x16xf32> -> vector<8x16xf32>
    %c5_159 = arith.constant 5 : index
    %c0_160 = arith.constant 0 : index
    %c0_161 = arith.constant 0 : index
    %216 = vector.load %arg5[%c5_159, %c0_160, %c0_161] : memref<8x1x16xf32, #tpu.memory_space<vmem>>, vector<1x1x16xf32>
    %217 = vector.shape_cast %216 : vector<1x1x16xf32> to vector<1x16xf32>
    %218 = vector.broadcast %217 : vector<1x16xf32> to vector<8x16xf32>
    %219 = arith.addf %215, %218 : vector<8x16xf32>
    %c5_162 = arith.constant 5 : index
    %c0_163 = arith.constant 0 : index
    %c0_164 = arith.constant 0 : index
    %220 = vector.load %arg6[%c5_162, %c0_163, %c0_164] : memref<8x128x16xf32, #tpu.memory_space<vmem>>, vector<1x128x16xf32>
    %221 = vector.shape_cast %220 : vector<1x128x16xf32> to vector<128x16xf32>
    %cst_165 = arith.constant dense<0.000000e+00> : vector<8x16xf32>
    %222 = tpu.matmul %23, %221, %cst_165 {dimension_numbers = #tpu.dot_dimension_numbers<[1], [0], [0], [1], [0, 0, 1, 1], [], []>} : vector<8x128xf32>, vector<128x16xf32>, vector<8x16xf32> -> vector<8x16xf32>
    %c5_166 = arith.constant 5 : index
    %c0_167 = arith.constant 0 : index
    %c0_168 = arith.constant 0 : index
    %223 = vector.load %arg7[%c5_166, %c0_167, %c0_168] : memref<8x1x16xf32, #tpu.memory_space<vmem>>, vector<1x1x16xf32>
    %224 = vector.shape_cast %223 : vector<1x1x16xf32> to vector<1x16xf32>
    %225 = vector.broadcast %224 : vector<1x16xf32> to vector<8x16xf32>
    %226 = arith.addf %222, %225 : vector<8x16xf32>
    %c5_169 = arith.constant 5 : index
    %c0_170 = arith.constant 0 : index
    %c0_171 = arith.constant 0 : index
    %227 = vector.load %arg8[%c5_169, %c0_170, %c0_171] : memref<8x128x16xf32, #tpu.memory_space<vmem>>, vector<1x128x16xf32>
    %228 = vector.shape_cast %227 : vector<1x128x16xf32> to vector<128x16xf32>
    %cst_172 = arith.constant dense<0.000000e+00> : vector<8x16xf32>
    %229 = tpu.matmul %23, %228, %cst_172 {dimension_numbers = #tpu.dot_dimension_numbers<[1], [0], [0], [1], [0, 0, 1, 1], [], []>} : vector<8x128xf32>, vector<128x16xf32>, vector<8x16xf32> -> vector<8x16xf32>
    %c5_173 = arith.constant 5 : index
    %c0_174 = arith.constant 0 : index
    %c0_175 = arith.constant 0 : index
    %230 = vector.load %arg9[%c5_173, %c0_174, %c0_175] : memref<8x1x16xf32, #tpu.memory_space<vmem>>, vector<1x1x16xf32>
    %231 = vector.shape_cast %230 : vector<1x1x16xf32> to vector<1x16xf32>
    %232 = vector.broadcast %231 : vector<1x16xf32> to vector<8x16xf32>
    %233 = arith.addf %229, %232 : vector<8x16xf32>
    %cst_176 = arith.constant dense<0.000000e+00> : vector<8x8xf32>
    %234 = tpu.matmul %219, %226, %cst_176 {dimension_numbers = #tpu.dot_dimension_numbers<[1], [1], [0], [0], [0, 0, 1, 0], [], []>} : vector<8x16xf32>, vector<8x16xf32>, vector<8x8xf32> -> vector<8x8xf32>
    %cst_177 = arith.constant 2.500000e-01 : f32
    %235 = vector.broadcast %cst_177 : f32 to vector<8x8xf32>
    %236 = arith.mulf %234, %235 : vector<8x8xf32>
    %cst_178 = arith.constant dense<0xFF800000> : vector<8xf32>
    %237 = vector.multi_reduction <maximumf>, %236, %cst_178 [1] : vector<8x8xf32> to vector<8xf32>
    %238 = vector.shape_cast %237 : vector<8xf32> to vector<8x1xf32>
    %239 = vector.broadcast %238 : vector<8x1xf32> to vector<8x8xf32>
    %240 = arith.subf %236, %239 : vector<8x8xf32>
    %241 = math.exp %240 : vector<8x8xf32>
    %cst_179 = arith.constant dense<0.000000e+00> : vector<8xf32>
    %242 = vector.multi_reduction <add>, %241, %cst_179 [1] : vector<8x8xf32> to vector<8xf32>
    %243 = vector.shape_cast %242 : vector<8xf32> to vector<8x1xf32>
    %244 = vector.broadcast %243 : vector<8x1xf32> to vector<8x8xf32>
    %245 = arith.divf %241, %244 : vector<8x8xf32>
    %cst_180 = arith.constant dense<0.000000e+00> : vector<8x16xf32>
    %246 = tpu.matmul %245, %233, %cst_180 {dimension_numbers = #tpu.dot_dimension_numbers<[1], [0], [0], [1], [0, 0, 1, 1], [], []>} : vector<8x8xf32>, vector<8x16xf32>, vector<8x16xf32> -> vector<8x16xf32>
    %c5_181 = arith.constant 5 : index
    %c0_182 = arith.constant 0 : index
    %c0_183 = arith.constant 0 : index
    %247 = vector.load %arg10[%c5_181, %c0_182, %c0_183] : memref<8x16x128xf32, #tpu.memory_space<vmem>>, vector<1x16x128xf32>
    %248 = vector.shape_cast %247 : vector<1x16x128xf32> to vector<16x128xf32>
    %cst_184 = arith.constant dense<0.000000e+00> : vector<8x128xf32>
    %249 = tpu.matmul %246, %248, %cst_184 {dimension_numbers = #tpu.dot_dimension_numbers<[1], [0], [0], [1], [0, 0, 1, 1], [], []>} : vector<8x16xf32>, vector<16x128xf32>, vector<8x128xf32> -> vector<8x128xf32>
    %250 = arith.addf %212, %249 : vector<8x128xf32>
    %c6 = arith.constant 6 : index
    %c0_185 = arith.constant 0 : index
    %c0_186 = arith.constant 0 : index
    %251 = vector.load %arg4[%c6, %c0_185, %c0_186] : memref<8x128x16xf32, #tpu.memory_space<vmem>>, vector<1x128x16xf32>
    %252 = vector.shape_cast %251 : vector<1x128x16xf32> to vector<128x16xf32>
    %cst_187 = arith.constant dense<0.000000e+00> : vector<8x16xf32>
    %253 = tpu.matmul %23, %252, %cst_187 {dimension_numbers = #tpu.dot_dimension_numbers<[1], [0], [0], [1], [0, 0, 1, 1], [], []>} : vector<8x128xf32>, vector<128x16xf32>, vector<8x16xf32> -> vector<8x16xf32>
    %c6_188 = arith.constant 6 : index
    %c0_189 = arith.constant 0 : index
    %c0_190 = arith.constant 0 : index
    %254 = vector.load %arg5[%c6_188, %c0_189, %c0_190] : memref<8x1x16xf32, #tpu.memory_space<vmem>>, vector<1x1x16xf32>
    %255 = vector.shape_cast %254 : vector<1x1x16xf32> to vector<1x16xf32>
    %256 = vector.broadcast %255 : vector<1x16xf32> to vector<8x16xf32>
    %257 = arith.addf %253, %256 : vector<8x16xf32>
    %c6_191 = arith.constant 6 : index
    %c0_192 = arith.constant 0 : index
    %c0_193 = arith.constant 0 : index
    %258 = vector.load %arg6[%c6_191, %c0_192, %c0_193] : memref<8x128x16xf32, #tpu.memory_space<vmem>>, vector<1x128x16xf32>
    %259 = vector.shape_cast %258 : vector<1x128x16xf32> to vector<128x16xf32>
    %cst_194 = arith.constant dense<0.000000e+00> : vector<8x16xf32>
    %260 = tpu.matmul %23, %259, %cst_194 {dimension_numbers = #tpu.dot_dimension_numbers<[1], [0], [0], [1], [0, 0, 1, 1], [], []>} : vector<8x128xf32>, vector<128x16xf32>, vector<8x16xf32> -> vector<8x16xf32>
    %c6_195 = arith.constant 6 : index
    %c0_196 = arith.constant 0 : index
    %c0_197 = arith.constant 0 : index
    %261 = vector.load %arg7[%c6_195, %c0_196, %c0_197] : memref<8x1x16xf32, #tpu.memory_space<vmem>>, vector<1x1x16xf32>
    %262 = vector.shape_cast %261 : vector<1x1x16xf32> to vector<1x16xf32>
    %263 = vector.broadcast %262 : vector<1x16xf32> to vector<8x16xf32>
    %264 = arith.addf %260, %263 : vector<8x16xf32>
    %c6_198 = arith.constant 6 : index
    %c0_199 = arith.constant 0 : index
    %c0_200 = arith.constant 0 : index
    %265 = vector.load %arg8[%c6_198, %c0_199, %c0_200] : memref<8x128x16xf32, #tpu.memory_space<vmem>>, vector<1x128x16xf32>
    %266 = vector.shape_cast %265 : vector<1x128x16xf32> to vector<128x16xf32>
    %cst_201 = arith.constant dense<0.000000e+00> : vector<8x16xf32>
    %267 = tpu.matmul %23, %266, %cst_201 {dimension_numbers = #tpu.dot_dimension_numbers<[1], [0], [0], [1], [0, 0, 1, 1], [], []>} : vector<8x128xf32>, vector<128x16xf32>, vector<8x16xf32> -> vector<8x16xf32>
    %c6_202 = arith.constant 6 : index
    %c0_203 = arith.constant 0 : index
    %c0_204 = arith.constant 0 : index
    %268 = vector.load %arg9[%c6_202, %c0_203, %c0_204] : memref<8x1x16xf32, #tpu.memory_space<vmem>>, vector<1x1x16xf32>
    %269 = vector.shape_cast %268 : vector<1x1x16xf32> to vector<1x16xf32>
    %270 = vector.broadcast %269 : vector<1x16xf32> to vector<8x16xf32>
    %271 = arith.addf %267, %270 : vector<8x16xf32>
    %cst_205 = arith.constant dense<0.000000e+00> : vector<8x8xf32>
    %272 = tpu.matmul %257, %264, %cst_205 {dimension_numbers = #tpu.dot_dimension_numbers<[1], [1], [0], [0], [0, 0, 1, 0], [], []>} : vector<8x16xf32>, vector<8x16xf32>, vector<8x8xf32> -> vector<8x8xf32>
    %cst_206 = arith.constant 2.500000e-01 : f32
    %273 = vector.broadcast %cst_206 : f32 to vector<8x8xf32>
    %274 = arith.mulf %272, %273 : vector<8x8xf32>
    %cst_207 = arith.constant dense<0xFF800000> : vector<8xf32>
    %275 = vector.multi_reduction <maximumf>, %274, %cst_207 [1] : vector<8x8xf32> to vector<8xf32>
    %276 = vector.shape_cast %275 : vector<8xf32> to vector<8x1xf32>
    %277 = vector.broadcast %276 : vector<8x1xf32> to vector<8x8xf32>
    %278 = arith.subf %274, %277 : vector<8x8xf32>
    %279 = math.exp %278 : vector<8x8xf32>
    %cst_208 = arith.constant dense<0.000000e+00> : vector<8xf32>
    %280 = vector.multi_reduction <add>, %279, %cst_208 [1] : vector<8x8xf32> to vector<8xf32>
    %281 = vector.shape_cast %280 : vector<8xf32> to vector<8x1xf32>
    %282 = vector.broadcast %281 : vector<8x1xf32> to vector<8x8xf32>
    %283 = arith.divf %279, %282 : vector<8x8xf32>
    %cst_209 = arith.constant dense<0.000000e+00> : vector<8x16xf32>
    %284 = tpu.matmul %283, %271, %cst_209 {dimension_numbers = #tpu.dot_dimension_numbers<[1], [0], [0], [1], [0, 0, 1, 1], [], []>} : vector<8x8xf32>, vector<8x16xf32>, vector<8x16xf32> -> vector<8x16xf32>
    %c6_210 = arith.constant 6 : index
    %c0_211 = arith.constant 0 : index
    %c0_212 = arith.constant 0 : index
    %285 = vector.load %arg10[%c6_210, %c0_211, %c0_212] : memref<8x16x128xf32, #tpu.memory_space<vmem>>, vector<1x16x128xf32>
    %286 = vector.shape_cast %285 : vector<1x16x128xf32> to vector<16x128xf32>
    %cst_213 = arith.constant dense<0.000000e+00> : vector<8x128xf32>
    %287 = tpu.matmul %284, %286, %cst_213 {dimension_numbers = #tpu.dot_dimension_numbers<[1], [0], [0], [1], [0, 0, 1, 1], [], []>} : vector<8x16xf32>, vector<16x128xf32>, vector<8x128xf32> -> vector<8x128xf32>
    %288 = arith.addf %250, %287 : vector<8x128xf32>
    %c7 = arith.constant 7 : index
    %c0_214 = arith.constant 0 : index
    %c0_215 = arith.constant 0 : index
    %289 = vector.load %arg4[%c7, %c0_214, %c0_215] : memref<8x128x16xf32, #tpu.memory_space<vmem>>, vector<1x128x16xf32>
    %290 = vector.shape_cast %289 : vector<1x128x16xf32> to vector<128x16xf32>
    %cst_216 = arith.constant dense<0.000000e+00> : vector<8x16xf32>
    %291 = tpu.matmul %23, %290, %cst_216 {dimension_numbers = #tpu.dot_dimension_numbers<[1], [0], [0], [1], [0, 0, 1, 1], [], []>} : vector<8x128xf32>, vector<128x16xf32>, vector<8x16xf32> -> vector<8x16xf32>
    %c7_217 = arith.constant 7 : index
    %c0_218 = arith.constant 0 : index
    %c0_219 = arith.constant 0 : index
    %292 = vector.load %arg5[%c7_217, %c0_218, %c0_219] : memref<8x1x16xf32, #tpu.memory_space<vmem>>, vector<1x1x16xf32>
    %293 = vector.shape_cast %292 : vector<1x1x16xf32> to vector<1x16xf32>
    %294 = vector.broadcast %293 : vector<1x16xf32> to vector<8x16xf32>
    %295 = arith.addf %291, %294 : vector<8x16xf32>
    %c7_220 = arith.constant 7 : index
    %c0_221 = arith.constant 0 : index
    %c0_222 = arith.constant 0 : index
    %296 = vector.load %arg6[%c7_220, %c0_221, %c0_222] : memref<8x128x16xf32, #tpu.memory_space<vmem>>, vector<1x128x16xf32>
    %297 = vector.shape_cast %296 : vector<1x128x16xf32> to vector<128x16xf32>
    %cst_223 = arith.constant dense<0.000000e+00> : vector<8x16xf32>
    %298 = tpu.matmul %23, %297, %cst_223 {dimension_numbers = #tpu.dot_dimension_numbers<[1], [0], [0], [1], [0, 0, 1, 1], [], []>} : vector<8x128xf32>, vector<128x16xf32>, vector<8x16xf32> -> vector<8x16xf32>
    %c7_224 = arith.constant 7 : index
    %c0_225 = arith.constant 0 : index
    %c0_226 = arith.constant 0 : index
    %299 = vector.load %arg7[%c7_224, %c0_225, %c0_226] : memref<8x1x16xf32, #tpu.memory_space<vmem>>, vector<1x1x16xf32>
    %300 = vector.shape_cast %299 : vector<1x1x16xf32> to vector<1x16xf32>
    %301 = vector.broadcast %300 : vector<1x16xf32> to vector<8x16xf32>
    %302 = arith.addf %298, %301 : vector<8x16xf32>
    %c7_227 = arith.constant 7 : index
    %c0_228 = arith.constant 0 : index
    %c0_229 = arith.constant 0 : index
    %303 = vector.load %arg8[%c7_227, %c0_228, %c0_229] : memref<8x128x16xf32, #tpu.memory_space<vmem>>, vector<1x128x16xf32>
    %304 = vector.shape_cast %303 : vector<1x128x16xf32> to vector<128x16xf32>
    %cst_230 = arith.constant dense<0.000000e+00> : vector<8x16xf32>
    %305 = tpu.matmul %23, %304, %cst_230 {dimension_numbers = #tpu.dot_dimension_numbers<[1], [0], [0], [1], [0, 0, 1, 1], [], []>} : vector<8x128xf32>, vector<128x16xf32>, vector<8x16xf32> -> vector<8x16xf32>
    %c7_231 = arith.constant 7 : index
    %c0_232 = arith.constant 0 : index
    %c0_233 = arith.constant 0 : index
    %306 = vector.load %arg9[%c7_231, %c0_232, %c0_233] : memref<8x1x16xf32, #tpu.memory_space<vmem>>, vector<1x1x16xf32>
    %307 = vector.shape_cast %306 : vector<1x1x16xf32> to vector<1x16xf32>
    %308 = vector.broadcast %307 : vector<1x16xf32> to vector<8x16xf32>
    %309 = arith.addf %305, %308 : vector<8x16xf32>
    %cst_234 = arith.constant dense<0.000000e+00> : vector<8x8xf32>
    %310 = tpu.matmul %295, %302, %cst_234 {dimension_numbers = #tpu.dot_dimension_numbers<[1], [1], [0], [0], [0, 0, 1, 0], [], []>} : vector<8x16xf32>, vector<8x16xf32>, vector<8x8xf32> -> vector<8x8xf32>
    %cst_235 = arith.constant 2.500000e-01 : f32
    %311 = vector.broadcast %cst_235 : f32 to vector<8x8xf32>
    %312 = arith.mulf %310, %311 : vector<8x8xf32>
    %cst_236 = arith.constant dense<0xFF800000> : vector<8xf32>
    %313 = vector.multi_reduction <maximumf>, %312, %cst_236 [1] : vector<8x8xf32> to vector<8xf32>
    %314 = vector.shape_cast %313 : vector<8xf32> to vector<8x1xf32>
    %315 = vector.broadcast %314 : vector<8x1xf32> to vector<8x8xf32>
    %316 = arith.subf %312, %315 : vector<8x8xf32>
    %317 = math.exp %316 : vector<8x8xf32>
    %cst_237 = arith.constant dense<0.000000e+00> : vector<8xf32>
    %318 = vector.multi_reduction <add>, %317, %cst_237 [1] : vector<8x8xf32> to vector<8xf32>
    %319 = vector.shape_cast %318 : vector<8xf32> to vector<8x1xf32>
    %320 = vector.broadcast %319 : vector<8x1xf32> to vector<8x8xf32>
    %321 = arith.divf %317, %320 : vector<8x8xf32>
    %cst_238 = arith.constant dense<0.000000e+00> : vector<8x16xf32>
    %322 = tpu.matmul %321, %309, %cst_238 {dimension_numbers = #tpu.dot_dimension_numbers<[1], [0], [0], [1], [0, 0, 1, 1], [], []>} : vector<8x8xf32>, vector<8x16xf32>, vector<8x16xf32> -> vector<8x16xf32>
    %c7_239 = arith.constant 7 : index
    %c0_240 = arith.constant 0 : index
    %c0_241 = arith.constant 0 : index
    %323 = vector.load %arg10[%c7_239, %c0_240, %c0_241] : memref<8x16x128xf32, #tpu.memory_space<vmem>>, vector<1x16x128xf32>
    %324 = vector.shape_cast %323 : vector<1x16x128xf32> to vector<16x128xf32>
    %cst_242 = arith.constant dense<0.000000e+00> : vector<8x128xf32>
    %325 = tpu.matmul %322, %324, %cst_242 {dimension_numbers = #tpu.dot_dimension_numbers<[1], [0], [0], [1], [0, 0, 1, 1], [], []>} : vector<8x16xf32>, vector<16x128xf32>, vector<8x128xf32> -> vector<8x128xf32>
    %326 = arith.addf %288, %325 : vector<8x128xf32>
    %327 = arith.addf %1, %326 : vector<8x128xf32>
    %c0_243 = arith.constant 0 : index
    %c0_244 = arith.constant 0 : index
    %328 = vector.load %arg11[%c0_243, %c0_244] : memref<1x128xf32, #tpu.memory_space<vmem>>, vector<1x128xf32>
    %329 = vector.broadcast %328 : vector<1x128xf32> to vector<8x128xf32>
    %330 = arith.addf %327, %329 : vector<8x128xf32>
    %cst_245 = arith.constant dense<0.000000e+00> : vector<8xf32>
    %331 = vector.multi_reduction <add>, %330, %cst_245 [1] : vector<8x128xf32> to vector<8xf32>
    %332 = vector.shape_cast %331 : vector<8xf32> to vector<8x1xf32>
    %cst_246 = arith.constant 1.280000e+02 : f32
    %333 = vector.broadcast %cst_246 : f32 to vector<8x1xf32>
    %334 = arith.divf %332, %333 : vector<8x1xf32>
    %335 = vector.broadcast %334 : vector<8x1xf32> to vector<8x128xf32>
    %336 = arith.subf %330, %335 : vector<8x128xf32>
    %337 = arith.mulf %336, %336 : vector<8x128xf32>
    %cst_247 = arith.constant dense<0.000000e+00> : vector<8xf32>
    %338 = vector.multi_reduction <add>, %337, %cst_247 [1] : vector<8x128xf32> to vector<8xf32>
    %339 = vector.shape_cast %338 : vector<8xf32> to vector<8x1xf32>
    %cst_248 = arith.constant 1.280000e+02 : f32
    %340 = vector.broadcast %cst_248 : f32 to vector<8x1xf32>
    %341 = arith.divf %339, %340 : vector<8x1xf32>
    %cst_249 = arith.constant 9.99999974E-6 : f32
    %342 = vector.broadcast %cst_249 : f32 to vector<8x1xf32>
    %343 = arith.addf %341, %342 : vector<8x1xf32>
    %344 = math.rsqrt %343 : vector<8x1xf32>
    %345 = vector.broadcast %344 : vector<8x1xf32> to vector<8x128xf32>
    %346 = arith.mulf %336, %345 : vector<8x128xf32>
    %c0_250 = arith.constant 0 : index
    %c0_251 = arith.constant 0 : index
    %347 = vector.load %arg12[%c0_250, %c0_251] : memref<1x128xf32, #tpu.memory_space<vmem>>, vector<1x128xf32>
    %348 = vector.broadcast %347 : vector<1x128xf32> to vector<8x128xf32>
    %349 = arith.mulf %346, %348 : vector<8x128xf32>
    %c0_252 = arith.constant 0 : index
    %c0_253 = arith.constant 0 : index
    %350 = vector.load %arg13[%c0_252, %c0_253] : memref<1x128xf32, #tpu.memory_space<vmem>>, vector<1x128xf32>
    %351 = vector.broadcast %350 : vector<1x128xf32> to vector<8x128xf32>
    %352 = arith.addf %349, %351 : vector<8x128xf32>
    %c0_254 = arith.constant 0 : index
    %c0_255 = arith.constant 0 : index
    %353 = vector.load %arg14[%c0_254, %c0_255] : memref<128x128xf32, #tpu.memory_space<vmem>>, vector<128x128xf32>
    %cst_256 = arith.constant dense<0.000000e+00> : vector<8x128xf32>
    %354 = tpu.matmul %352, %353, %cst_256 {dimension_numbers = #tpu.dot_dimension_numbers<[1], [0], [0], [1], [0, 0, 1, 1], [], []>} : vector<8x128xf32>, vector<128x128xf32>, vector<8x128xf32> -> vector<8x128xf32>
    %c0_257 = arith.constant 0 : index
    %c0_258 = arith.constant 0 : index
    %355 = vector.load %arg15[%c0_257, %c0_258] : memref<1x128xf32, #tpu.memory_space<vmem>>, vector<1x128xf32>
    %356 = vector.broadcast %355 : vector<1x128xf32> to vector<8x128xf32>
    %357 = arith.addf %354, %356 : vector<8x128xf32>
    %cst_259 = arith.constant 0.000000e+00 : f32
    %358 = vector.broadcast %cst_259 : f32 to vector<8x128xf32>
    %359 = arith.maximumf %357, %358 : vector<8x128xf32>
    %c0_260 = arith.constant 0 : index
    %c0_261 = arith.constant 0 : index
    %360 = vector.load %arg16[%c0_260, %c0_261] : memref<128x128xf32, #tpu.memory_space<vmem>>, vector<128x128xf32>
    %cst_262 = arith.constant dense<0.000000e+00> : vector<8x128xf32>
    %361 = tpu.matmul %359, %360, %cst_262 {dimension_numbers = #tpu.dot_dimension_numbers<[1], [0], [0], [1], [0, 0, 1, 1], [], []>} : vector<8x128xf32>, vector<128x128xf32>, vector<8x128xf32> -> vector<8x128xf32>
    %c0_263 = arith.constant 0 : index
    %c0_264 = arith.constant 0 : index
    %362 = vector.load %arg17[%c0_263, %c0_264] : memref<1x128xf32, #tpu.memory_space<vmem>>, vector<1x128xf32>
    %363 = vector.broadcast %362 : vector<1x128xf32> to vector<8x128xf32>
    %364 = arith.addf %361, %363 : vector<8x128xf32>
    %365 = arith.addf %330, %364 : vector<8x128xf32>
    %c0_265 = arith.constant 0 : index
    %c0_266 = arith.constant 0 : index
    %c0_267 = arith.constant 0 : index
    %366 = vector.load %arg18[%c0_265, %c0_266, %c0_267] : memref<1x8x128xf32, #tpu.memory_space<vmem>>, vector<1x8x128xf32>
    %367 = vector.shape_cast %366 : vector<1x8x128xf32> to vector<8x128xf32>
    %368 = vector.shape_cast %365 : vector<8x128xf32> to vector<1x8x128xf32>
    tpu.vector_store %arg18[%c0_265, %c0_266, %c0_267], %368 {strides = array<i32>} : memref<1x8x128xf32, #tpu.memory_space<vmem>>, vector<1x8x128xf32>,
    return
  }
  func.func @transform_0(%arg0: i32) -> (i32, i32, i32) {
    %c0_i32 = arith.constant 0 : i32
    %c0_i32_0 = arith.constant 0 : i32
    %c0_i32_1 = arith.constant 0 : i32
    return %arg0, %c0_i32, %c0_i32_0 : i32, i32, i32
  }
  func.func @transform_1(%arg0: i32) -> (i32, i32) {
    %c0_i32 = arith.constant 0 : i32
    %c0_i32_0 = arith.constant 0 : i32
    %c0_i32_1 = arith.constant 0 : i32
    return %c0_i32, %c0_i32_0 : i32, i32
  }
  func.func @transform_2(%arg0: i32) -> (i32, i32) {
    %c0_i32 = arith.constant 0 : i32
    %c0_i32_0 = arith.constant 0 : i32
    %c0_i32_1 = arith.constant 0 : i32
    return %c0_i32, %c0_i32_0 : i32, i32
  }
  func.func @transform_3(%arg0: i32) -> (i32, i32, i32) {
    %c0_i32 = arith.constant 0 : i32
    %c0_i32_0 = arith.constant 0 : i32
    %c0_i32_1 = arith.constant 0 : i32
    %c0_i32_2 = arith.constant 0 : i32
    return %c0_i32, %c0_i32_0, %c0_i32_1 : i32, i32, i32
  }
  func.func @transform_4(%arg0: i32) -> (i32, i32, i32) {
    %c0_i32 = arith.constant 0 : i32
    %c0_i32_0 = arith.constant 0 : i32
    %c0_i32_1 = arith.constant 0 : i32
    %c0_i32_2 = arith.constant 0 : i32
    return %c0_i32, %c0_i32_0, %c0_i32_1 : i32, i32, i32
  }
  func.func @transform_5(%arg0: i32) -> (i32, i32, i32) {
    %c0_i32 = arith.constant 0 : i32
    %c0_i32_0 = arith.constant 0 : i32
    %c0_i32_1 = arith.constant 0 : i32
    %c0_i32_2 = arith.constant 0 : i32
    return %c0_i32, %c0_i32_0, %c0_i32_1 : i32, i32, i32
  }
  func.func @transform_6(%arg0: i32) -> (i32, i32, i32) {
    %c0_i32 = arith.constant 0 : i32
    %c0_i32_0 = arith.constant 0 : i32
    %c0_i32_1 = arith.constant 0 : i32
    %c0_i32_2 = arith.constant 0 : i32
    return %c0_i32, %c0_i32_0, %c0_i32_1 : i32, i32, i32
  }
  func.func @transform_7(%arg0: i32) -> (i32, i32, i32) {
    %c0_i32 = arith.constant 0 : i32
    %c0_i32_0 = arith.constant 0 : i32
    %c0_i32_1 = arith.constant 0 : i32
    %c0_i32_2 = arith.constant 0 : i32
    return %c0_i32, %c0_i32_0, %c0_i32_1 : i32, i32, i32
  }
  func.func @transform_8(%arg0: i32) -> (i32, i32, i32) {
    %c0_i32 = arith.constant 0 : i32
    %c0_i32_0 = arith.constant 0 : i32
    %c0_i32_1 = arith.constant 0 : i32
    %c0_i32_2 = arith.constant 0 : i32
    return %c0_i32, %c0_i32_0, %c0_i32_1 : i32, i32, i32
  }
  func.func @transform_9(%arg0: i32) -> (i32, i32, i32) {
    %c0_i32 = arith.constant 0 : i32
    %c0_i32_0 = arith.constant 0 : i32
    %c0_i32_1 = arith.constant 0 : i32
    %c0_i32_2 = arith.constant 0 : i32
    return %c0_i32, %c0_i32_0, %c0_i32_1 : i32, i32, i32
  }
  func.func @transform_10(%arg0: i32) -> (i32, i32) {
    %c0_i32 = arith.constant 0 : i32
    %c0_i32_0 = arith.constant 0 : i32
    %c0_i32_1 = arith.constant 0 : i32
    return %c0_i32, %c0_i32_0 : i32, i32
  }
  func.func @transform_11(%arg0: i32) -> (i32, i32) {
    %c0_i32 = arith.constant 0 : i32
    %c0_i32_0 = arith.constant 0 : i32
    %c0_i32_1 = arith.constant 0 : i32
    return %c0_i32, %c0_i32_0 : i32, i32
  }
  func.func @transform_12(%arg0: i32) -> (i32, i32) {
    %c0_i32 = arith.constant 0 : i32
    %c0_i32_0 = arith.constant 0 : i32
    %c0_i32_1 = arith.constant 0 : i32
    return %c0_i32, %c0_i32_0 : i32, i32
  }
  func.func @transform_13(%arg0: i32) -> (i32, i32) {
    %c0_i32 = arith.constant 0 : i32
    %c0_i32_0 = arith.constant 0 : i32
    %c0_i32_1 = arith.constant 0 : i32
    return %c0_i32, %c0_i32_0 : i32, i32
  }
  func.func @transform_14(%arg0: i32) -> (i32, i32) {
    %c0_i32 = arith.constant 0 : i32
    %c0_i32_0 = arith.constant 0 : i32
    %c0_i32_1 = arith.constant 0 : i32
    return %c0_i32, %c0_i32_0 : i32, i32
  }
  func.func @transform_15(%arg0: i32) -> (i32, i32) {
    %c0_i32 = arith.constant 0 : i32
    %c0_i32_0 = arith.constant 0 : i32
    %c0_i32_1 = arith.constant 0 : i32
    return %c0_i32, %c0_i32_0 : i32, i32
  }
  func.func @transform_16(%arg0: i32) -> (i32, i32) {
    %c0_i32 = arith.constant 0 : i32
    %c0_i32_0 = arith.constant 0 : i32
    %c0_i32_1 = arith.constant 0 : i32
    return %c0_i32, %c0_i32_0 : i32, i32
  }
  func.func @transform_17(%arg0: i32) -> (i32, i32, i32) {
    %c0_i32 = arith.constant 0 : i32
    %c0_i32_0 = arith.constant 0 : i32
    %c0_i32_1 = arith.constant 0 : i32
    return %arg0, %c0_i32, %c0_i32_0 : i32, i32, i32
  }
}

</mosaic_0001>

<llo_original>
// kernel: transformer_block_forward.1
$region0: #{transformer_block_forward.1}
  #allocation0 [shape = 'u32[]', space=smem, size = 0x4, offset = 0x4, fixed_abs, tag = 'smem constant byte address 0x4 - core index']
  #allocation1 [shape = 'u32[144,128]{1,0:T(1,128)}', space=vmem, size = 0x12000, scoped, tag = 'internal scratch']
  %s0 = inlined_call_operand.vmem [shape: f32[2,8,128], index: 0, kind: input, shape index: {}]
  %s1 = inlined_call_operand.vmem [shape: f32[1,128], index: 1, kind: input, shape index: {}]
  %s2 = inlined_call_operand.vmem [shape: f32[1,128], index: 2, kind: input, shape index: {}]
  %s3 = inlined_call_operand.vmem [shape: f32[8,128,16], index: 3, kind: input, shape index: {}]
  %s4 = inlined_call_operand.vmem [shape: f32[8,1,16], index: 4, kind: input, shape index: {}]
  %s5 = inlined_call_operand.vmem [shape: f32[8,128,16], index: 5, kind: input, shape index: {}]
  %s6 = inlined_call_operand.vmem [shape: f32[8,1,16], index: 6, kind: input, shape index: {}]
  %s7 = inlined_call_operand.vmem [shape: f32[8,128,16], index: 7, kind: input, shape index: {}]
  %s8 = inlined_call_operand.vmem [shape: f32[8,1,16], index: 8, kind: input, shape index: {}]
  %s9 = inlined_call_operand.vmem [shape: f32[8,16,128], index: 9, kind: input, shape index: {}]
  %s10 = inlined_call_operand.vmem [shape: f32[1,128], index: 10, kind: input, shape index: {}]
  %s11 = inlined_call_operand.vmem [shape: f32[1,128], index: 11, kind: input, shape index: {}]
  %s12 = inlined_call_operand.vmem [shape: f32[1,128], index: 12, kind: input, shape index: {}]
  %s13 = inlined_call_operand.vmem [shape: f32[128,128], index: 13, kind: input, shape index: {}]
  %s14 = inlined_call_operand.vmem [shape: f32[1,128], index: 14, kind: input, shape index: {}]
  %s15 = inlined_call_operand.vmem [shape: f32[128,128], index: 15, kind: input, shape index: {}]
  %s16 = inlined_call_operand.vmem [shape: f32[1,128], index: 16, kind: input, shape index: {}]
  %s17 = inlined_call_operand.hbm [shape: f32[2,8,128], index: 17, kind: output, shape index: {}]
  %s18 = sld [smem:[#allocation0]]
  $region101: #{transformer_block_forward.1} parent=0
    _
  %s20 = ssub.s32 1, %s18
  %s21 = scalar_select 0, %s20, %s18
  $region1: #{transformer_block_forward.1} parent=0
    #allocation2 [shape = 'u8[8192]{0}', space=vmem, size = 0x2000, scoped, tag = 'output window, operand 0']
    #allocation3 [shape = 's32[2]{0}', space=sflag, size = 0x8, scoped, tag = 'scoped memory for transformer_block_forward.1']
    %22 = vsyncpa [#allocation3], 0
    %s23 = scalar_lea.sflag [#allocation3], 1
    %24 = vsyncpa %s23, 0
    loop: start=0, step=1, limit=4
    $region2: #{transformer_block_forward.1} parent=1 // loop_pre_header
      _
    $region3: #{transformer_block_forward.1} parent=1 // loop_header
      %s26 = sphi 0, %s30
      %p27 = scmp.ge.s32.totalorder %s26, 4
      %s36 = sphi 0, %s38
      %s39 = sphi 0, %s36
      %s40 = sphi 0, %s39
      %s56 = sphi 0, %s40
      %s60 = sphi 0, %s60
      %s62 = sphi 0, %s60
      %s63 = sphi 0, %s62
      %s77 = sphi 0, %s63
      %s81 = sphi 0, %s81
      %s83 = sphi 0, %s81
      %s84 = sphi 0, %s83
      %s98 = sphi 0, %s84
      %s102 = sphi 0, %s102
      %s104 = sphi 0, %s102
      %s105 = sphi 0, %s104
      %s119 = sphi 0, %s105
      %s123 = sphi 0, %s123
      %s125 = sphi 0, %s123
      %s126 = sphi 0, %s125
      %s140 = sphi 0, %s126
      %s144 = sphi 0, %s144
      %s146 = sphi 0, %s144
      %s147 = sphi 0, %s146
      %s161 = sphi 0, %s147
      %s165 = sphi 0, %s165
      %s167 = sphi 0, %s165
      %s168 = sphi 0, %s167
      %s182 = sphi 0, %s168
      %s186 = sphi 0, %s186
      %s188 = sphi 0, %s186
      %s189 = sphi 0, %s188
      %s203 = sphi 0, %s189
      %s207 = sphi 0, %s207
      %s209 = sphi 0, %s207
      %s210 = sphi 0, %s209
      %s224 = sphi 0, %s210
      %s228 = sphi 0, %s228
      %s230 = sphi 0, %s228
      %s231 = sphi 0, %s230
      %s245 = sphi 0, %s231
      %s249 = sphi 0, %s249
      %s251 = sphi 0, %s249
      %s252 = sphi 0, %s251
      %s266 = sphi 0, %s252
      %s270 = sphi 0, %s270
      %s272 = sphi 0, %s270
      %s273 = sphi 0, %s272
      %s287 = sphi 0, %s273
      %s291 = sphi 0, %s291
      %s293 = sphi 0, %s291
      %s294 = sphi 0, %s293
      %s308 = sphi 0, %s294
      %s312 = sphi 0, %s312
      %s314 = sphi 0, %s312
      %s315 = sphi 0, %s314
      %s329 = sphi 0, %s315
      %s333 = sphi 0, %s333
      %s335 = sphi 0, %s333
      %s336 = sphi 0, %s335
      %s350 = sphi 0, %s336
      %s354 = sphi 0, %s354
      %s356 = sphi 0, %s354
      %s357 = sphi 0, %s356
      %s371 = sphi 0, %s357
      %s375 = sphi 0, %s375
      %s377 = sphi 0, %s375
      %s378 = sphi 0, %s377
      %s392 = sphi 0, %s378
      %s398 = sphi 0, %s400
      %s401 = sphi 0, %s398
      %s402 = sphi 0, %s401
      %s418 = sphi 0, %s402
    $region4: #{transformer_block_forward.1} parent=1 // loop_header_branch
      %29 = sbr.rel (%p27) target = $region8
    $region5: #{transformer_block_forward.1} parent=1 // loop_body
      %s31 = ssub.s32 %s26, 1
      %s32 = ssub.s32 %s26, 2
      %s33 = sadd.s32 %s26, 1
      %s34 = ssub.s32 %s26, %s33
      %p35 = scmp.eq.s32.totalorder %s34, 0
      %s37 = sadd.s32 %s36, 1
      %s38 = scalar_select %p35, %s36, %s37
      %p41 = pneg %p35
      %p42 = scmp.eq.s32.totalorder %s26, 1
      %p43 = por %p41, %p42
      %p44 = scmp.ne.s32.totalorder %s36, %s39
      %p45 = scmp.eq.s32.totalorder %s26, 0
      %p46 = por %p44, %p45
      %p47 = scmp.ne.s32.totalorder %s36, %s39
      %p48 = scmp.eq.s32.totalorder %s31, 1
      %p49 = por %p47, %p48
      %p50 = scmp.ne.s32.totalorder %s39, %s40
      %p51 = scmp.eq.s32.totalorder %s31, 0
      %p52 = por %p50, %p51
      %p53 = scmp.ne.s32.totalorder %s39, %s40
      %p54 = scmp.eq.s32.totalorder %s32, 1
      %p55 = por %p53, %p54
      %p57 = scmp.ne.s32.totalorder %s40, %s56
      %p58 = scmp.eq.s32.totalorder %s32, 0
      %p59 = por %p57, %p58
      %s61 = sadd.s32 %s60, 1
      %p64 = scmp.eq.s32.totalorder %s26, 1
      %p65 = scmp.ne.s32.totalorder %s60, %s62
      %p66 = scmp.eq.s32.totalorder %s26, 0
      %p67 = por %p65, %p66
      %p68 = scmp.ne.s32.totalorder %s60, %s62
      %p69 = scmp.eq.s32.totalorder %s31, 1
      %p70 = por %p68, %p69
      %p71 = scmp.ne.s32.totalorder %s62, %s63
      %p72 = scmp.eq.s32.totalorder %s31, 0
      %p73 = por %p71, %p72
      %p74 = scmp.ne.s32.totalorder %s62, %s63
      %p75 = scmp.eq.s32.totalorder %s32, 1
      %p76 = por %p74, %p75
      %p78 = scmp.ne.s32.totalorder %s63, %s77
      %p79 = scmp.eq.s32.totalorder %s32, 0
      %p80 = por %p78, %p79
      %s82 = sadd.s32 %s81, 1
      %p85 = scmp.eq.s32.totalorder %s26, 1
      %p86 = scmp.ne.s32.totalorder %s81, %s83
      %p87 = scmp.eq.s32.totalorder %s26, 0
      %p88 = por %p86, %p87
      %p89 = scmp.ne.s32.totalorder %s81, %s83
      %p90 = scmp.eq.s32.totalorder %s31, 1
      %p91 = por %p89, %p90
      %p92 = scmp.ne.s32.totalorder %s83, %s84
      %p93 = scmp.eq.s32.totalorder %s31, 0
      %p94 = por %p92, %p93
      %p95 = scmp.ne.s32.totalorder %s83, %s84
      %p96 = scmp.eq.s32.totalorder %s32, 1
      %p97 = por %p95, %p96
      %p99 = scmp.ne.s32.totalorder %s84, %s98
      %p100 = scmp.eq.s32.totalorder %s32, 0
      %p101 = por %p99, %p100
      %s103 = sadd.s32 %s102, 1
      %p106 = scmp.eq.s32.totalorder %s26, 1
      %p107 = scmp.ne.s32.totalorder %s102, %s104
      %p108 = scmp.eq.s32.totalorder %s26, 0
      %p109 = por %p107, %p108
      %p110 = scmp.ne.s32.totalorder %s102, %s104
      %p111 = scmp.eq.s32.totalorder %s31, 1
      %p112 = por %p110, %p111
      %p113 = scmp.ne.s32.totalorder %s104, %s105
      %p114 = scmp.eq.s32.totalorder %s31, 0
      %p115 = por %p113, %p114
      %p116 = scmp.ne.s32.totalorder %s104, %s105
      %p117 = scmp.eq.s32.totalorder %s32, 1
      %p118 = por %p116, %p117
      %p120 = scmp.ne.s32.totalorder %s105, %s119
      %p121 = scmp.eq.s32.totalorder %s32, 0
      %p122 = por %p120, %p121
      %s124 = sadd.s32 %s123, 1
      %p127 = scmp.eq.s32.totalorder %s26, 1
      %p128 = scmp.ne.s32.totalorder %s123, %s125
      %p129 = scmp.eq.s32.totalorder %s26, 0
      %p130 = por %p128, %p129
      %p131 = scmp.ne.s32.totalorder %s123, %s125
      %p132 = scmp.eq.s32.totalorder %s31, 1
      %p133 = por %p131, %p132
      %p134 = scmp.ne.s32.totalorder %s125, %s126
      %p135 = scmp.eq.s32.totalorder %s31, 0
      %p136 = por %p134, %p135
      %p137 = scmp.ne.s32.totalorder %s125, %s126
      %p138 = scmp.eq.s32.totalorder %s32, 1
      %p139 = por %p137, %p138
      %p141 = scmp.ne.s32.totalorder %s126, %s140
      %p142 = scmp.eq.s32.totalorder %s32, 0
      %p143 = por %p141, %p142
      %s145 = sadd.s32 %s144, 1
      %p148 = scmp.eq.s32.totalorder %s26, 1
      %p149 = scmp.ne.s32.totalorder %s144, %s146
      %p150 = scmp.eq.s32.totalorder %s26, 0
      %p151 = por %p149, %p150
      %p152 = scmp.ne.s32.totalorder %s144, %s146
      %p153 = scmp.eq.s32.totalorder %s31, 1
      %p154 = por %p152, %p153
      %p155 = scmp.ne.s32.totalorder %s146, %s147
      %p156 = scmp.eq.s32.totalorder %s31, 0
      %p157 = por %p155, %p156
      %p158 = scmp.ne.s32.totalorder %s146, %s147
      %p159 = scmp.eq.s32.totalorder %s32, 1
      %p160 = por %p158, %p159
      %p162 = scmp.ne.s32.totalorder %s147, %s161
      %p163 = scmp.eq.s32.totalorder %s32, 0
      %p164 = por %p162, %p163
      %s166 = sadd.s32 %s165, 1
      %p169 = scmp.eq.s32.totalorder %s26, 1
      %p170 = scmp.ne.s32.totalorder %s165, %s167
      %p171 = scmp.eq.s32.totalorder %s26, 0
      %p172 = por %p170, %p171
      %p173 = scmp.ne.s32.totalorder %s165, %s167
      %p174 = scmp.eq.s32.totalorder %s31, 1
      %p175 = por %p173, %p174
      %p176 = scmp.ne.s32.totalorder %s167, %s168
      %p177 = scmp.eq.s32.totalorder %s31, 0
      %p178 = por %p176, %p177
      %p179 = scmp.ne.s32.totalorder %s167, %s168
      %p180 = scmp.eq.s32.totalorder %s32, 1
      %p181 = por %p179, %p180
      %p183 = scmp.ne.s32.totalorder %s168, %s182
      %p184 = scmp.eq.s32.totalorder %s32, 0
      %p185 = por %p183, %p184
      %s187 = sadd.s32 %s186, 1
      %p190 = scmp.eq.s32.totalorder %s26, 1
      %p191 = scmp.ne.s32.totalorder %s186, %s188
      %p192 = scmp.eq.s32.totalorder %s26, 0
      %p193 = por %p191, %p192
      %p194 = scmp.ne.s32.totalorder %s186, %s188
      %p195 = scmp.eq.s32.totalorder %s31, 1
      %p196 = por %p194, %p195
      %p197 = scmp.ne.s32.totalorder %s188, %s189
      %p198 = scmp.eq.s32.totalorder %s31, 0
      %p199 = por %p197, %p198
      %p200 = scmp.ne.s32.totalorder %s188, %s189
      %p201 = scmp.eq.s32.totalorder %s32, 1
      %p202 = por %p200, %p201
      %p204 = scmp.ne.s32.totalorder %s189, %s203
      %p205 = scmp.eq.s32.totalorder %s32, 0
      %p206 = por %p204, %p205
      %s208 = sadd.s32 %s207, 1
      %p211 = scmp.eq.s32.totalorder %s26, 1
      %p212 = scmp.ne.s32.totalorder %s207, %s209
      %p213 = scmp.eq.s32.totalorder %s26, 0
      %p214 = por %p212, %p213
      %p215 = scmp.ne.s32.totalorder %s207, %s209
      %p216 = scmp.eq.s32.totalorder %s31, 1
      %p217 = por %p215, %p216
      %p218 = scmp.ne.s32.totalorder %s209, %s210
      %p219 = scmp.eq.s32.totalorder %s31, 0
      %p220 = por %p218, %p219
      %p221 = scmp.ne.s32.totalorder %s209, %s210
      %p222 = scmp.eq.s32.totalorder %s32, 1
      %p223 = por %p221, %p222
      %p225 = scmp.ne.s32.totalorder %s210, %s224
      %p226 = scmp.eq.s32.totalorder %s32, 0
      %p227 = por %p225, %p226
      %s229 = sadd.s32 %s228, 1
      %p232 = scmp.eq.s32.totalorder %s26, 1
      %p233 = scmp.ne.s32.totalorder %s228, %s230
      %p234 = scmp.eq.s32.totalorder %s26, 0
      %p235 = por %p233, %p234
      %p236 = scmp.ne.s32.totalorder %s228, %s230
      %p237 = scmp.eq.s32.totalorder %s31, 1
      %p238 = por %p236, %p237
      %p239 = scmp.ne.s32.totalorder %s230, %s231
      %p240 = scmp.eq.s32.totalorder %s31, 0
      %p241 = por %p239, %p240
      %p242 = scmp.ne.s32.totalorder %s230, %s231
      %p243 = scmp.eq.s32.totalorder %s32, 1
      %p244 = por %p242, %p243
      %p246 = scmp.ne.s32.totalorder %s231, %s245
      %p247 = scmp.eq.s32.totalorder %s32, 0
      %p248 = por %p246, %p247
      %s250 = sadd.s32 %s249, 1
      %p253 = scmp.eq.s32.totalorder %s26, 1
      %p254 = scmp.ne.s32.totalorder %s249, %s251
      %p255 = scmp.eq.s32.totalorder %s26, 0
      %p256 = por %p254, %p255
      %p257 = scmp.ne.s32.totalorder %s249, %s251
      %p258 = scmp.eq.s32.totalorder %s31, 1
      %p259 = por %p257, %p258
      %p260 = scmp.ne.s32.totalorder %s251, %s252
      %p261 = scmp.eq.s32.totalorder %s31, 0
      %p262 = por %p260, %p261
      %p263 = scmp.ne.s32.totalorder %s251, %s252
      %p264 = scmp.eq.s32.totalorder %s32, 1
      %p265 = por %p263, %p264
      %p267 = scmp.ne.s32.totalorder %s252, %s266
      %p268 = scmp.eq.s32.totalorder %s32, 0
      %p269 = por %p267, %p268
      %s271 = sadd.s32 %s270, 1
      %p274 = scmp.eq.s32.totalorder %s26, 1
      %p275 = scmp.ne.s32.totalorder %s270, %s272
      %p276 = scmp.eq.s32.totalorder %s26, 0
      %p277 = por %p275, %p276
      %p278 = scmp.ne.s32.totalorder %s270, %s272
      %p279 = scmp.eq.s32.totalorder %s31, 1
      %p280 = por %p278, %p279
      %p281 = scmp.ne.s32.totalorder %s272, %s273
      %p282 = scmp.eq.s32.totalorder %s31, 0
      %p283 = por %p281, %p282
      %p284 = scmp.ne.s32.totalorder %s272, %s273
      %p285 = scmp.eq.s32.totalorder %s32, 1
      %p286 = por %p284, %p285
      %p288 = scmp.ne.s32.totalorder %s273, %s287
      %p289 = scmp.eq.s32.totalorder %s32, 0
      %p290 = por %p288, %p289
      %s292 = sadd.s32 %s291, 1
      %p295 = scmp.eq.s32.totalorder %s26, 1
      %p296 = scmp.ne.s32.totalorder %s291, %s293
      %p297 = scmp.eq.s32.totalorder %s26, 0
      %p298 = por %p296, %p297
      %p299 = scmp.ne.s32.totalorder %s291, %s293
      %p300 = scmp.eq.s32.totalorder %s31, 1
      %p301 = por %p299, %p300
      %p302 = scmp.ne.s32.totalorder %s293, %s294
      %p303 = scmp.eq.s32.totalorder %s31, 0
      %p304 = por %p302, %p303
      %p305 = scmp.ne.s32.totalorder %s293, %s294
      %p306 = scmp.eq.s32.totalorder %s32, 1
      %p307 = por %p305, %p306
      %p309 = scmp.ne.s32.totalorder %s294, %s308
      %p310 = scmp.eq.s32.totalorder %s32, 0
      %p311 = por %p309, %p310
      %s313 = sadd.s32 %s312, 1
      %p316 = scmp.eq.s32.totalorder %s26, 1
      %p317 = scmp.ne.s32.totalorder %s312, %s314
      %p318 = scmp.eq.s32.totalorder %s26, 0
      %p319 = por %p317, %p318
      %p320 = scmp.ne.s32.totalorder %s312, %s314
      %p321 = scmp.eq.s32.totalorder %s31, 1
      %p322 = por %p320, %p321
      %p323 = scmp.ne.s32.totalorder %s314, %s315
      %p324 = scmp.eq.s32.totalorder %s31, 0
      %p325 = por %p323, %p324
      %p326 = scmp.ne.s32.totalorder %s314, %s315
      %p327 = scmp.eq.s32.totalorder %s32, 1
      %p328 = por %p326, %p327
      %p330 = scmp.ne.s32.totalorder %s315, %s329
      %p331 = scmp.eq.s32.totalorder %s32, 0
      %p332 = por %p330, %p331
      %s334 = sadd.s32 %s333, 1
      %p337 = scmp.eq.s32.totalorder %s26, 1
      %p338 = scmp.ne.s32.totalorder %s333, %s335
      %p339 = scmp.eq.s32.totalorder %s26, 0
      %p340 = por %p338, %p339
      %p341 = scmp.ne.s32.totalorder %s333, %s335
      %p342 = scmp.eq.s32.totalorder %s31, 1
      %p343 = por %p341, %p342
      %p344 = scmp.ne.s32.totalorder %s335, %s336
      %p345 = scmp.eq.s32.totalorder %s31, 0
      %p346 = por %p344, %p345
      %p347 = scmp.ne.s32.totalorder %s335, %s336
      %p348 = scmp.eq.s32.totalorder %s32, 1
      %p349 = por %p347, %p348
      %p351 = scmp.ne.s32.totalorder %s336, %s350
      %p352 = scmp.eq.s32.totalorder %s32, 0
      %p353 = por %p351, %p352
      %s355 = sadd.s32 %s354, 1
      %p358 = scmp.eq.s32.totalorder %s26, 1
      %p359 = scmp.ne.s32.totalorder %s354, %s356
      %p360 = scmp.eq.s32.totalorder %s26, 0
      %p361 = por %p359, %p360
      %p362 = scmp.ne.s32.totalorder %s354, %s356
      %p363 = scmp.eq.s32.totalorder %s31, 1
      %p364 = por %p362, %p363
      %p365 = scmp.ne.s32.totalorder %s356, %s357
      %p366 = scmp.eq.s32.totalorder %s31, 0
      %p367 = por %p365, %p366
      %p368 = scmp.ne.s32.totalorder %s356, %s357
      %p369 = scmp.eq.s32.totalorder %s32, 1
      %p370 = por %p368, %p369
      %p372 = scmp.ne.s32.totalorder %s357, %s371
      %p373 = scmp.eq.s32.totalorder %s32, 0
      %p374 = por %p372, %p373
      %s376 = sadd.s32 %s375, 1
      %p379 = scmp.eq.s32.totalorder %s26, 1
      %p380 = scmp.ne.s32.totalorder %s375, %s377
      %p381 = scmp.eq.s32.totalorder %s26, 0
      %p382 = por %p380, %p381
      %p383 = scmp.ne.s32.totalorder %s375, %s377
      %p384 = scmp.eq.s32.totalorder %s31, 1
      %p385 = por %p383, %p384
      %p386 = scmp.ne.s32.totalorder %s377, %s378
      %p387 = scmp.eq.s32.totalorder %s31, 0
      %p388 = por %p386, %p387
      %p389 = scmp.ne.s32.totalorder %s377, %s378
      %p390 = scmp.eq.s32.totalorder %s32, 1
      %p391 = por %p389, %p390
      %p393 = scmp.ne.s32.totalorder %s378, %s392
      %p394 = scmp.eq.s32.totalorder %s32, 0
      %p395 = por %p393, %p394
      %s396 = ssub.s32 %s26, %s33
      %p397 = scmp.eq.s32.totalorder %s396, 0
      %s399 = sadd.s32 %s398, 1
      %s400 = scalar_select %p397, %s398, %s399
      %p403 = pneg %p397
      %p404 = scmp.eq.s32.totalorder %s26, 1
      %p405 = por %p403, %p404
      %p406 = scmp.ne.s32.totalorder %s398, %s401
      %p407 = scmp.eq.s32.totalorder %s26, 0
      %p408 = por %p406, %p407
      %p409 = scmp.ne.s32.totalorder %s398, %s401
      %p410 = scmp.eq.s32.totalorder %s31, 1
      %p411 = por %p409, %p410
      %p412 = scmp.ne.s32.totalorder %s401, %s402
      %p413 = scmp.eq.s32.totalorder %s31, 0
      %p414 = por %p412, %p413
      %p415 = scmp.ne.s32.totalorder %s401, %s402
      %p416 = scmp.eq.s32.totalorder %s32, 1
      %p417 = por %p415, %p416
      %p419 = scmp.ne.s32.totalorder %s402, %s418
      %p420 = scmp.eq.s32.totalorder %s32, 0
      %p421 = por %p419, %p420
      %p422 = scmp.le.s32.totalorder 1, %s26
      %p423 = scmp.lt.s32.totalorder %s26, 3
      %p424 = pnand %p422, %p423
      %p425 = pneg %p424
      // Predicated region
      $region9: #{transformer_block_forward.1} parent=5 // pred_check
        _
      $region10: #{transformer_block_forward.1} parent=5 // pred_check_branch
        %427 = sbr.rel (%p424) target = $region12
      $region11: #{transformer_block_forward.1} parent=5 // pred_region
        %s428 = ssub.s32 %s26, 1
        // Predicated region
        $region13: #{transformer_block_forward.1} parent=11 // pred_check
          %p429 = pneg %p73
        $region14: #{transformer_block_forward.1} parent=11 // pred_check_branch
          %431 = sbr.rel (%p429) target = $region16
        $region15: #{transformer_block_forward.1} parent=11 // pred_region
          _
        $region16: #{transformer_block_forward.1} parent=11 // pred_fallthru
          _
        // Predicated region
        $region17: #{transformer_block_forward.1} parent=11 // pred_check
          %p432 = pneg %p94
        $region18: #{transformer_block_forward.1} parent=11 // pred_check_branch
          %434 = sbr.rel (%p432) target = $region20
        $region19: #{transformer_block_forward.1} parent=11 // pred_region
          _
        $region20: #{transformer_block_forward.1} parent=11 // pred_fallthru
          _
        // Predicated region
        $region21: #{transformer_block_forward.1} parent=11 // pred_check
          %p435 = pneg %p115
        $region22: #{transformer_block_forward.1} parent=11 // pred_check_branch
          %437 = sbr.rel (%p435) target = $region24
        $region23: #{transformer_block_forward.1} parent=11 // pred_region
          _
        $region24: #{transformer_block_forward.1} parent=11 // pred_fallthru
          _
        // Predicated region
        $region25: #{transformer_block_forward.1} parent=11 // pred_check
          %p438 = pneg %p136
        $region26: #{transformer_block_forward.1} parent=11 // pred_check_branch
          %440 = sbr.rel (%p438) target = $region28
        $region27: #{transformer_block_forward.1} parent=11 // pred_region
          _
        $region28: #{transformer_block_forward.1} parent=11 // pred_fallthru
          _
        // Predicated region
        $region29: #{transformer_block_forward.1} parent=11 // pred_check
          %p441 = pneg %p157
        $region30: #{transformer_block_forward.1} parent=11 // pred_check_branch
          %443 = sbr.rel (%p441) target = $region32
        $region31: #{transformer_block_forward.1} parent=11 // pred_region
          _
        $region32: #{transformer_block_forward.1} parent=11 // pred_fallthru
          _
        // Predicated region
        $region33: #{transformer_block_forward.1} parent=11 // pred_check
          %p444 = pneg %p178
        $region34: #{transformer_block_forward.1} parent=11 // pred_check_branch
          %446 = sbr.rel (%p444) target = $region36
        $region35: #{transformer_block_forward.1} parent=11 // pred_region
          _
        $region36: #{transformer_block_forward.1} parent=11 // pred_fallthru
          _
        // Predicated region
        $region37: #{transformer_block_forward.1} parent=11 // pred_check
          %p447 = pneg %p199
        $region38: #{transformer_block_forward.1} parent=11 // pred_check_branch
          %449 = sbr.rel (%p447) target = $region40
        $region39: #{transformer_block_forward.1} parent=11 // pred_region
          _
        $region40: #{transformer_block_forward.1} parent=11 // pred_fallthru
          _
        // Predicated region
        $region41: #{transformer_block_forward.1} parent=11 // pred_check
          %p450 = pneg %p220
        $region42: #{transformer_block_forward.1} parent=11 // pred_check_branch
          %452 = sbr.rel (%p450) target = $region44
        $region43: #{transformer_block_forward.1} parent=11 // pred_region
          _
        $region44: #{transformer_block_forward.1} parent=11 // pred_fallthru
          _
        // Predicated region
        $region45: #{transformer_block_forward.1} parent=11 // pred_check
          %p453 = pneg %p241
        $region46: #{transformer_block_forward.1} parent=11 // pred_check_branch
          %455 = sbr.rel (%p453) target = $region48
        $region47: #{transformer_block_forward.1} parent=11 // pred_region
          _
        $region48: #{transformer_block_forward.1} parent=11 // pred_fallthru
          _
        // Predicated region
        $region49: #{transformer_block_forward.1} parent=11 // pred_check
          %p456 = pneg %p262
        $region50: #{transformer_block_forward.1} parent=11 // pred_check_branch
          %458 = sbr.rel (%p456) target = $region52
        $region51: #{transformer_block_forward.1} parent=11 // pred_region
          _
        $region52: #{transformer_block_forward.1} parent=11 // pred_fallthru
          _
        // Predicated region
        $region53: #{transformer_block_forward.1} parent=11 // pred_check
          %p459 = pneg %p283
        $region54: #{transformer_block_forward.1} parent=11 // pred_check_branch
          %461 = sbr.rel (%p459) target = $region56
        $region55: #{transformer_block_forward.1} parent=11 // pred_region
          _
        $region56: #{transformer_block_forward.1} parent=11 // pred_fallthru
          _
        // Predicated region
        $region57: #{transformer_block_forward.1} parent=11 // pred_check
          %p462 = pneg %p304
        $region58: #{transformer_block_forward.1} parent=11 // pred_check_branch
          %464 = sbr.rel (%p462) target = $region60
        $region59: #{transformer_block_forward.1} parent=11 // pred_region
          _
        $region60: #{transformer_block_forward.1} parent=11 // pred_fallthru
          _
        // Predicated region
        $region61: #{transformer_block_forward.1} parent=11 // pred_check
          %p465 = pneg %p325
        $region62: #{transformer_block_forward.1} parent=11 // pred_check_branch
          %467 = sbr.rel (%p465) target = $region64
        $region63: #{transformer_block_forward.1} parent=11 // pred_region
          _
        $region64: #{transformer_block_forward.1} parent=11 // pred_fallthru
          _
        // Predicated region
        $region65: #{transformer_block_forward.1} parent=11 // pred_check
          %p468 = pneg %p346
        $region66: #{transformer_block_forward.1} parent=11 // pred_check_branch
          %470 = sbr.rel (%p468) target = $region68
        $region67: #{transformer_block_forward.1} parent=11 // pred_region
          _
        $region68: #{transformer_block_forward.1} parent=11 // pred_fallthru
          _
        // Predicated region
        $region69: #{transformer_block_forward.1} parent=11 // pred_check
          %p471 = pneg %p367
        $region70: #{transformer_block_forward.1} parent=11 // pred_check_branch
          %473 = sbr.rel (%p471) target = $region72
        $region71: #{transformer_block_forward.1} parent=11 // pred_region
          _
        $region72: #{transformer_block_forward.1} parent=11 // pred_fallthru
          _
        // Predicated region
        $region73: #{transformer_block_forward.1} parent=11 // pred_check
          %p474 = pneg %p388
        $region74: #{transformer_block_forward.1} parent=11 // pred_check_branch
          %476 = sbr.rel (%p474) target = $region76
        $region75: #{transformer_block_forward.1} parent=11 // pred_region
          _
        $region76: #{transformer_block_forward.1} parent=11 // pred_fallthru
          _
      $region12: #{transformer_block_forward.1} parent=5 // pred_fallthru
        _
      %p477 = scmp.lt.s32.totalorder %s26, 2
      // Predicated region
      $region77: #{transformer_block_forward.1} parent=5 // pred_check
        %p478 = pneg %p477
      $region78: #{transformer_block_forward.1} parent=5 // pred_check_branch
        %480 = sbr.rel (%p478) target = $region80
      $region79: #{transformer_block_forward.1} parent=5 // pred_region
        // Predicated region
        $region81: #{transformer_block_forward.1} parent=79 // pred_check
          %p481 = pneg %p46
        $region82: #{transformer_block_forward.1} parent=79 // pred_check_branch
          %483 = sbr.rel (%p481) target = $region84
        $region83: #{transformer_block_forward.1} parent=79 // pred_region
          %p484 = scmp.lt.s32.totalorder %s26, 1
          %s485 = scalar_select %p484, %s26, 1
          %s486 = smul.addr %s485, 8
          %s487 = scalar_lea.vmem %s0, %s486
        $region84: #{transformer_block_forward.1} parent=79 // pred_fallthru
          _
      $region80: #{transformer_block_forward.1} parent=5 // pred_fallthru
        _
      %p488 = scmp.le.s32.totalorder 1, %s26
      %p489 = scmp.lt.s32.totalorder %s26, 3
      %p490 = pnand %p488, %p489
      %p491 = pneg %p490
      // Predicated region
      $region85: #{transformer_block_forward.1} parent=5 // pred_check
        _
      $region86: #{transformer_block_forward.1} parent=5 // pred_check_branch
        %493 = sbr.rel (%p490) target = $region88
      $region87: #{transformer_block_forward.1} parent=5 // pred_region
        %s494 = ssub.s32 %s26, 1
        %p495 = scmp.lt.s32.totalorder %s31, 1
        %s496 = scalar_select %p495, %s31, 1
        %s497 = smul.addr %s496, 8
        %s498 = scalar_lea.vmem %s0, %s497
        %p499 = pneg %p52
        %p500 = pneg %p49
        %p501 = pneg %p73
        %p502 = pneg %p70
        %p503 = pneg %p94
        %p504 = pneg %p91
        %p505 = pneg %p115
        %p506 = pneg %p112
        %p507 = pneg %p136
        %p508 = pneg %p133
        %p509 = pneg %p157
        %p510 = pneg %p154
        %p511 = pneg %p178
        %p512 = pneg %p175
        %p513 = pneg %p199
        %p514 = pneg %p196
        %p515 = pneg %p220
        %p516 = pneg %p217
        %p517 = pneg %p241
        %p518 = pneg %p238
        %p519 = pneg %p262
        %p520 = pneg %p259
        %p521 = pneg %p283
        %p522 = pneg %p280
        %p523 = pneg %p304
        %p524 = pneg %p301
        %p525 = pneg %p325
        %p526 = pneg %p322
        %p527 = pneg %p346
        %p528 = pneg %p343
        %p529 = pneg %p367
        %p530 = pneg %p364
        %p531 = pneg %p388
        %p532 = pneg %p385
        %p533 = pneg %p414
        %p534 = pneg %p411
        %s535 = sand.u32 %s401, 1
        %s536 = scalar_lea.sflag [#allocation3], %s535
        %s537 = sand.u32 %s401, 1
        %s538 = smul.addr %s537, 8
        %s539 = scalar_lea.vmem [#allocation2], %s538
        %p540 = scmp.lt.s32.totalorder %s31, 1
        %s541 = scalar_select %p540, %s31, 1
        %s542 = smul.addr %s541, 8
        %s543 = scalar_lea.vmem %s0, %s542
        %v544 = vld [vmem:[%s543] sm:$0xff]
        %545 = vadd.xlane.f32.xlu0 %v544
        %v546 = vpop.xlane.xlu0 %545
        %v547 = vrcp.pop 128.0
        %v548 = vmul.f32 %v546, %v547
        %v549 = vsub.f32 %v544, %v548
        %v550 = vmul.f32 %v549, %v549
        %551 = vadd.xlane.f32.xlu0 %v550
        %v552 = vpop.xlane.xlu0 %551
        %v553 = vmul.f32 %v552, %v547
        %v554 = vadd.f32 %v553, 1e-05
        %v555 = vrsqrt.pop %v554
        %v556 = vmul.f32 %v549, %v555
        %v557 = vld [vmem:[%s1] sm:$0x1]
        %v559 = vlaneseq
        %v560 = vshrl.u32 %v559, 7
        %v561 = vsub.s32 0, %v560
        %v562 = vrot.slane %v557, %v561
        %v564 = vmul.f32 %v556, %v562
        %v565 = vld [vmem:[%s2] sm:$0x1]
        %v567 = vlaneseq
        %v568 = vshrl.u32 %v567, 7
        %v569 = vsub.s32 0, %v568
        %v570 = vrot.slane %v565, %v569
        %v572 = vadd.f32 %v564, %v570
        %v573 = vld [vmem:[%s3] sm:$0xff]
        %v574 = vld [vmem:[%s3 + $0x8] sm:$0xff]
        %v575 = vld [vmem:[%s3 + $0x10] sm:$0xff]
        %v576 = vld [vmem:[%s3 + $0x18] sm:$0xff]
        %v577 = vld [vmem:[%s3 + $0x20] sm:$0xff]
        %v578 = vld [vmem:[%s3 + $0x28] sm:$0xff]
        %v579 = vld [vmem:[%s3 + $0x30] sm:$0xff]
        %v580 = vld [vmem:[%s3 + $0x38] sm:$0xff]
        %v581 = vld [vmem:[%s3 + $0x40] sm:$0xff]
        %v582 = vld [vmem:[%s3 + $0x48] sm:$0xff]
        %v583 = vld [vmem:[%s3 + $0x50] sm:$0xff]
        %v584 = vld [vmem:[%s3 + $0x58] sm:$0xff]
        %v585 = vld [vmem:[%s3 + $0x60] sm:$0xff]
        %v586 = vld [vmem:[%s3 + $0x68] sm:$0xff]
        %v587 = vld [vmem:[%s3 + $0x70] sm:$0xff]
        %v588 = vld [vmem:[%s3 + $0x78] sm:$0xff]
        %v589 = vld [vmem:[%s4] sm:$0x1]
        %v591 = vlaneseq
        %v592 = vshrl.u32 %v591, 7
        %v593 = vsub.s32 0, %v592
        %v594 = vrot.slane %v589, %v593
        %596 = vmatprep.subr.mxu0 0.0
        %597 = vmatpush1.msra.mxu0 %v573
        %598 = vmatprep.subr.mxu0 0.0
        %599 = vmatpush1.msra.mxu0 %v574
        %600 = vmatprep.subr.mxu0 0.0
        %601 = vmatpush1.msra.mxu0 %v575
        %602 = vmatprep.subr.mxu0 0.0
        %603 = vmatpush1.msra.mxu0 %v576
        %604 = vmatprep.subr.mxu0 0.0
        %605 = vmatpush1.msra.mxu0 %v577
        %606 = vmatprep.subr.mxu0 0.0
        %607 = vmatpush1.msra.mxu0 %v578
        %608 = vmatprep.subr.mxu0 0.0
        %609 = vmatpush1.msra.mxu0 %v579
        %610 = vmatprep.subr.mxu0 0.0
        %611 = vmatpush1.msra.mxu0 %v580
        %612 = vmatprep.subr.mxu0 0.0
        %613 = vmatpush1.msra.mxu0 %v581
        %614 = vmatprep.subr.mxu0 0.0
        %615 = vmatpush1.msra.mxu0 %v582
        %616 = vmatprep.subr.mxu0 0.0
        %617 = vmatpush1.msra.mxu0 %v583
        %618 = vmatprep.subr.mxu0 0.0
        %619 = vmatpush1.msra.mxu0 %v584
        %620 = vmatprep.subr.mxu0 0.0
        %621 = vmatpush1.msra.mxu0 %v585
        %622 = vmatprep.subr.mxu0 0.0
        %623 = vmatpush1.msra.mxu0 %v586
        %624 = vmatprep.subr.mxu0 0.0
        %625 = vmatpush1.msra.mxu0 %v587
        %626 = vmatprep.subr.mxu0 0.0
        %627 = vmatpush1.msra.mxu0 %v588
        %628 = vmatprep.subr.mxu0 0.0
        %629 = vmatpush1.msra.mxu0 0.0
        %630 = vmatprep.subr.mxu0 0.0
        %631 = vmatpush1.msra.mxu0 0.0
        %632 = vmatprep.subr.mxu0 0.0
        %633 = vmatpush1.msra.mxu0 0.0
        %634 = vmatprep.subr.mxu0 0.0
        %635 = vmatpush1.msra.mxu0 0.0
        %636 = vmatprep.subr.mxu0 0.0
        %637 = vmatpush1.msra.mxu0 0.0
        %638 = vmatprep.subr.mxu0 0.0
        %639 = vmatpush1.msra.mxu0 0.0
        %640 = vmatprep.subr.mxu0 0.0
        %641 = vmatpush1.msra.mxu0 0.0
        %642 = vmatprep.subr.mxu0 0.0
        %643 = vmatpush1.msra.mxu0 0.0
        %644 = vmatprep.subr.mxu0 0.0
        %645 = vmatpush1.msra.mxu0 0.0
        %646 = vmatprep.subr.mxu0 0.0
        %647 = vmatpush1.msra.mxu0 0.0
        %648 = vmatprep.subr.mxu0 0.0
        %649 = vmatpush1.msra.mxu0 0.0
        %650 = vmatprep.subr.mxu0 0.0
        %651 = vmatpush1.msra.mxu0 0.0
        %652 = vmatprep.subr.mxu0 0.0
        %653 = vmatpush1.msra.mxu0 0.0
        %654 = vmatprep.subr.mxu0 0.0
        %655 = vmatpush1.msra.mxu0 0.0
        %656 = vmatprep.subr.mxu0 0.0
        %657 = vmatpush1.msra.mxu0 0.0
        %658 = vmatprep.subr.mxu0 0.0
        %659 = vmatpush1.msra.mxu0 0.0
        %660 = vmatprep.mubr.f32.mxu0 0.0
        %661 = vmatmul.mubr.f32.gmra.mrb[0].mxu0 %v572
        %v662 = vpop.f32.mrb[0].mxu0
        %v663 = vadd.f32 %v594, %v662
        %v664 = vpop.f32.mrb[0].mxu0
        %665 = vdwg.mxu0
        %v666 = vld [vmem:[%s5] sm:$0xff]
        %v667 = vld [vmem:[%s5 + $0x8] sm:$0xff]
        %v668 = vld [vmem:[%s5 + $0x10] sm:$0xff]
        %v669 = vld [vmem:[%s5 + $0x18] sm:$0xff]
        %v670 = vld [vmem:[%s5 + $0x20] sm:$0xff]
        %v671 = vld [vmem:[%s5 + $0x28] sm:$0xff]
        %v672 = vld [vmem:[%s5 + $0x30] sm:$0xff]
        %v673 = vld [vmem:[%s5 + $0x38] sm:$0xff]
        %v674 = vld [vmem:[%s5 + $0x40] sm:$0xff]
        %v675 = vld [vmem:[%s5 + $0x48] sm:$0xff]
        %v676 = vld [vmem:[%s5 + $0x50] sm:$0xff]
        %v677 = vld [vmem:[%s5 + $0x58] sm:$0xff]
        %v678 = vld [vmem:[%s5 + $0x60] sm:$0xff]
        %v679 = vld [vmem:[%s5 + $0x68] sm:$0xff]
        %v680 = vld [vmem:[%s5 + $0x70] sm:$0xff]
        %v681 = vld [vmem:[%s5 + $0x78] sm:$0xff]
        %v682 = vld [vmem:[%s6] sm:$0x1]
        %v684 = vlaneseq
        %v685 = vshrl.u32 %v684, 7
        %v686 = vsub.s32 0, %v685
        %v687 = vrot.slane %v682, %v686
        %689 = vmatprep.subr.mxu0 0.0
        %690 = vmatpush1.msra.mxu0 %v666
        %691 = vmatprep.subr.mxu0 0.0
        %692 = vmatpush1.msra.mxu0 %v667
        %693 = vmatprep.subr.mxu0 0.0
        %694 = vmatpush1.msra.mxu0 %v668
        %695 = vmatprep.subr.mxu0 0.0
        %696 = vmatpush1.msra.mxu0 %v669
        %697 = vmatprep.subr.mxu0 0.0
        %698 = vmatpush1.msra.mxu0 %v670
        %699 = vmatprep.subr.mxu0 0.0
        %700 = vmatpush1.msra.mxu0 %v671
        %701 = vmatprep.subr.mxu0 0.0
        %702 = vmatpush1.msra.mxu0 %v672
        %703 = vmatprep.subr.mxu0 0.0
        %704 = vmatpush1.msra.mxu0 %v673
        %705 = vmatprep.subr.mxu0 0.0
        %706 = vmatpush1.msra.mxu0 %v674
        %707 = vmatprep.subr.mxu0 0.0
        %708 = vmatpush1.msra.mxu0 %v675
        %709 = vmatprep.subr.mxu0 0.0
        %710 = vmatpush1.msra.mxu0 %v676
        %711 = vmatprep.subr.mxu0 0.0
        %712 = vmatpush1.msra.mxu0 %v677
        %713 = vmatprep.subr.mxu0 0.0
        %714 = vmatpush1.msra.mxu0 %v678
        %715 = vmatprep.subr.mxu0 0.0
        %716 = vmatpush1.msra.mxu0 %v679
        %717 = vmatprep.subr.mxu0 0.0
        %718 = vmatpush1.msra.mxu0 %v680
        %719 = vmatprep.subr.mxu0 0.0
        %720 = vmatpush1.msra.mxu0 %v681
        %721 = vmatprep.subr.mxu0 0.0
        %722 = vmatpush1.msra.mxu0 0.0
        %723 = vmatprep.subr.mxu0 0.0
        %724 = vmatpush1.msra.mxu0 0.0
        %725 = vmatprep.subr.mxu0 0.0
        %726 = vmatpush1.msra.mxu0 0.0
        %727 = vmatprep.subr.mxu0 0.0
        %728 = vmatpush1.msra.mxu0 0.0
        %729 = vmatprep.subr.mxu0 0.0
        %730 = vmatpush1.msra.mxu0 0.0
        %731 = vmatprep.subr.mxu0 0.0
        %732 = vmatpush1.msra.mxu0 0.0
        %733 = vmatprep.subr.mxu0 0.0
        %734 = vmatpush1.msra.mxu0 0.0
        %735 = vmatprep.subr.mxu0 0.0
        %736 = vmatpush1.msra.mxu0 0.0
        %737 = vmatprep.subr.mxu0 0.0
        %738 = vmatpush1.msra.mxu0 0.0
        %739 = vmatprep.subr.mxu0 0.0
        %740 = vmatpush1.msra.mxu0 0.0
        %741 = vmatprep.subr.mxu0 0.0
        %742 = vmatpush1.msra.mxu0 0.0
        %743 = vmatprep.subr.mxu0 0.0
        %744 = vmatpush1.msra.mxu0 0.0
        %745 = vmatprep.subr.mxu0 0.0
        %746 = vmatpush1.msra.mxu0 0.0
        %747 = vmatprep.subr.mxu0 0.0
        %748 = vmatpush1.msra.mxu0 0.0
        %749 = vmatprep.subr.mxu0 0.0
        %750 = vmatpush1.msra.mxu0 0.0
        %751 = vmatprep.subr.mxu0 0.0
        %752 = vmatpush1.msra.mxu0 0.0
        %753 = vmatprep.mubr.f32.mxu0 0.0
        %754 = vmatmul.mubr.f32.gmra.mrb[0].mxu0 %v572
        %v755 = vpop.f32.mrb[0].mxu0
        %v756 = vadd.f32 %v687, %v755
        %v757 = vpop.f32.mrb[0].mxu0
        %758 = vdwg.mxu0
        %v759 = vld [vmem:[%s7] sm:$0xff]
        %v760 = vld [vmem:[%s7 + $0x8] sm:$0xff]
        %v761 = vld [vmem:[%s7 + $0x10] sm:$0xff]
        %v762 = vld [vmem:[%s7 + $0x18] sm:$0xff]
        %v763 = vld [vmem:[%s7 + $0x20] sm:$0xff]
        %v764 = vld [vmem:[%s7 + $0x28] sm:$0xff]
        %v765 = vld [vmem:[%s7 + $0x30] sm:$0xff]
        %v766 = vld [vmem:[%s7 + $0x38] sm:$0xff]
        %v767 = vld [vmem:[%s7 + $0x40] sm:$0xff]
        %v768 = vld [vmem:[%s7 + $0x48] sm:$0xff]
        %v769 = vld [vmem:[%s7 + $0x50] sm:$0xff]
        %v770 = vld [vmem:[%s7 + $0x58] sm:$0xff]
        %v771 = vld [vmem:[%s7 + $0x60] sm:$0xff]
        %v772 = vld [vmem:[%s7 + $0x68] sm:$0xff]
        %v773 = vld [vmem:[%s7 + $0x70] sm:$0xff]
        %v774 = vld [vmem:[%s7 + $0x78] sm:$0xff]
        %v775 = vld [vmem:[%s8] sm:$0x1]
        %v777 = vlaneseq
        %v778 = vshrl.u32 %v777, 7
        %v779 = vsub.s32 0, %v778
        %v780 = vrot.slane %v775, %v779
        %782 = vmatprep.subr.mxu0 0.0
        %783 = vmatpush1.msra.mxu0 %v759
        %784 = vmatprep.subr.mxu0 0.0
        %785 = vmatpush1.msra.mxu0 %v760
        %786 = vmatprep.subr.mxu0 0.0
        %787 = vmatpush1.msra.mxu0 %v761
        %788 = vmatprep.subr.mxu0 0.0
        %789 = vmatpush1.msra.mxu0 %v762
        %790 = vmatprep.subr.mxu0 0.0
        %791 = vmatpush1.msra.mxu0 %v763
        %792 = vmatprep.subr.mxu0 0.0
        %793 = vmatpush1.msra.mxu0 %v764
        %794 = vmatprep.subr.mxu0 0.0
        %795 = vmatpush1.msra.mxu0 %v765
        %796 = vmatprep.subr.mxu0 0.0
        %797 = vmatpush1.msra.mxu0 %v766
        %798 = vmatprep.subr.mxu0 0.0
        %799 = vmatpush1.msra.mxu0 %v767
        %800 = vmatprep.subr.mxu0 0.0
        %801 = vmatpush1.msra.mxu0 %v768
        %802 = vmatprep.subr.mxu0 0.0
        %803 = vmatpush1.msra.mxu0 %v769
        %804 = vmatprep.subr.mxu0 0.0
        %805 = vmatpush1.msra.mxu0 %v770
        %806 = vmatprep.subr.mxu0 0.0
        %807 = vmatpush1.msra.mxu0 %v771
        %808 = vmatprep.subr.mxu0 0.0
        %809 = vmatpush1.msra.mxu0 %v772
        %810 = vmatprep.subr.mxu0 0.0
        %811 = vmatpush1.msra.mxu0 %v773
        %812 = vmatprep.subr.mxu0 0.0
        %813 = vmatpush1.msra.mxu0 %v774
        %814 = vmatprep.subr.mxu0 0.0
        %815 = vmatpush1.msra.mxu0 0.0
        %816 = vmatprep.subr.mxu0 0.0
        %817 = vmatpush1.msra.mxu0 0.0
        %818 = vmatprep.subr.mxu0 0.0
        %819 = vmatpush1.msra.mxu0 0.0
        %820 = vmatprep.subr.mxu0 0.0
        %821 = vmatpush1.msra.mxu0 0.0
        %822 = vmatprep.subr.mxu0 0.0
        %823 = vmatpush1.msra.mxu0 0.0
        %824 = vmatprep.subr.mxu0 0.0
        %825 = vmatpush1.msra.mxu0 0.0
        %826 = vmatprep.subr.mxu0 0.0
        %827 = vmatpush1.msra.mxu0 0.0
        %828 = vmatprep.subr.mxu0 0.0
        %829 = vmatpush1.msra.mxu0 0.0
        %830 = vmatprep.subr.mxu0 0.0
        %831 = vmatpush1.msra.mxu0 0.0
        %832 = vmatprep.subr.mxu0 0.0
        %833 = vmatpush1.msra.mxu0 0.0
        %834 = vmatprep.subr.mxu0 0.0
        %835 = vmatpush1.msra.mxu0 0.0
        %836 = vmatprep.subr.mxu0 0.0
        %837 = vmatpush1.msra.mxu0 0.0
        %838 = vmatprep.subr.mxu0 0.0
        %839 = vmatpush1.msra.mxu0 0.0
        %840 = vmatprep.subr.mxu0 0.0
        %841 = vmatpush1.msra.mxu0 0.0
        %842 = vmatprep.subr.mxu0 0.0
        %843 = vmatpush1.msra.mxu0 0.0
        %844 = vmatprep.subr.mxu0 0.0
        %845 = vmatpush1.msra.mxu0 0.0
        %846 = vmatprep.mubr.f32.mxu0 0.0
        %847 = vmatmul.mubr.f32.gmra.mrb[0].mxu0 %v572
        %v848 = vpop.f32.mrb[0].mxu0
        %v849 = vadd.f32 %v780, %v848
        %v850 = vpop.f32.mrb[0].mxu0
        %851 = vdwg.mxu0
        %vm852 = vcmask 130048
        %v854 = vsel %vm852, %v663, 0
        %v857 = vsel %vm852, %v756, 0
        %859 = vmatprep.subr.mxu0 0.0
        %860 = vmatpush1.xpose.msra.mxu0 %v857
        %861 = vmatprep.subr.mxu0 0.0
        %862 = vmatpush1.xpose.msra.mxu0 0.0
        %863 = vmatprep.subr.mxu0 0.0
        %864 = vmatpush1.xpose.msra.mxu0 0.0
        %865 = vmatprep.subr.mxu0 0.0
        %866 = vmatpush1.xpose.msra.mxu0 0.0
        %867 = vmatprep.subr.mxu0 0.0
        %868 = vmatpush1.xpose.msra.mxu0 0.0
        %869 = vmatprep.subr.mxu0 0.0
        %870 = vmatpush1.xpose.msra.mxu0 0.0
        %871 = vmatprep.subr.mxu0 0.0
        %872 = vmatpush1.xpose.msra.mxu0 0.0
        %873 = vmatprep.subr.mxu0 0.0
        %874 = vmatpush1.xpose.msra.mxu0 0.0
        %875 = vmatprep.subr.mxu0 0.0
        %876 = vmatpush1.xpose.msra.mxu0 0.0
        %877 = vmatprep.subr.mxu0 0.0
        %878 = vmatpush1.xpose.msra.mxu0 0.0
        %879 = vmatprep.subr.mxu0 0.0
        %880 = vmatpush1.xpose.msra.mxu0 0.0
        %881 = vmatprep.subr.mxu0 0.0
        %882 = vmatpush1.xpose.msra.mxu0 0.0
        %883 = vmatprep.subr.mxu0 0.0
        %884 = vmatpush1.xpose.msra.mxu0 0.0
        %885 = vmatprep.subr.mxu0 0.0
        %886 = vmatpush1.xpose.msra.mxu0 0.0
        %887 = vmatprep.subr.mxu0 0.0
        %888 = vmatpush1.xpose.msra.mxu0 0.0
        %889 = vmatprep.subr.mxu0 0.0
        %890 = vmatpush1.xpose.msra.mxu0 0.0
        %891 = vmatprep.subr.mxu0 0.0
        %892 = vmatpush1.xpose.msra.mxu0 0.0
        %893 = vmatprep.subr.mxu0 0.0
        %894 = vmatpush1.xpose.msra.mxu0 0.0
        %895 = vmatprep.subr.mxu0 0.0
        %896 = vmatpush1.xpose.msra.mxu0 0.0
        %897 = vmatprep.subr.mxu0 0.0
        %898 = vmatpush1.xpose.msra.mxu0 0.0
        %899 = vmatprep.subr.mxu0 0.0
        %900 = vmatpush1.xpose.msra.mxu0 0.0
        %901 = vmatprep.subr.mxu0 0.0
        %902 = vmatpush1.xpose.msra.mxu0 0.0
        %903 = vmatprep.subr.mxu0 0.0
        %904 = vmatpush1.xpose.msra.mxu0 0.0
        %905 = vmatprep.subr.mxu0 0.0
        %906 = vmatpush1.xpose.msra.mxu0 0.0
        %907 = vmatprep.subr.mxu0 0.0
        %908 = vmatpush1.xpose.msra.mxu0 0.0
        %909 = vmatprep.subr.mxu0 0.0
        %910 = vmatpush1.xpose.msra.mxu0 0.0
        %911 = vmatprep.subr.mxu0 0.0
        %912 = vmatpush1.xpose.msra.mxu0 0.0
        %913 = vmatprep.subr.mxu0 0.0
        %914 = vmatpush1.xpose.msra.mxu0 0.0
        %915 = vmatprep.subr.mxu0 0.0
        %916 = vmatpush1.xpose.msra.mxu0 0.0
        %917 = vmatprep.subr.mxu0 0.0
        %918 = vmatpush1.xpose.msra.mxu0 0.0
        %919 = vmatprep.subr.mxu0 0.0
        %920 = vmatpush1.xpose.msra.mxu0 0.0
        %921 = vmatprep.subr.mxu0 0.0
        %922 = vmatpush1.xpose.msra.mxu0 0.0
        %923 = vmatprep.mubr.f32.mxu0 0.0
        %924 = vmatmul.mubr.f32.gmra.mrb[0].mxu0 %v854
        %v925 = vpop.f32.mrb[0].mxu0
        %v926 = vadd.f32 0.0, %v925
        %v927 = vpop.f32.mrb[0].mxu0
        %928 = vdwg.mxu0
        %v929 = vmul.f32 %v926, 0.25
        %vm930 = vcmask 64512
        %v931 = vsel %vm930, %v929, -inf
        %932 = vmax.xlane.f32.xlu0 %v931
        %v933 = vpop.xlane.xlu0 %932
        %v934 = vsub.f32 %v929, %v933
        %v935 = vmul.f32 %v934, 1.442695
        %v936 = vpow.pop %v935
        %v937 = vsel %vm930, %v936, 0.0
        %938 = vadd.xlane.f32.xlu0 %v937
        %v939 = vpop.xlane.xlu0 %938
        %v940 = vrcp.pop %v939
        %v941 = vmul.f32 %v936, %v940
        %v943 = vsel %vm930, %v941, 0
        %945 = vmatprep.subr.mxu0 0.0
        %946 = vmatpush1.msra.mxu0 %v849
        %947 = vmatprep.subr.mxu0 0.0
        %948 = vmatpush1.msra.mxu0 0.0
        %949 = vmatprep.subr.mxu0 0.0
        %950 = vmatpush1.msra.mxu0 0.0
        %951 = vmatprep.subr.mxu0 0.0
        %952 = vmatpush1.msra.mxu0 0.0
        %953 = vmatprep.subr.mxu0 0.0
        %954 = vmatpush1.msra.mxu0 0.0
        %955 = vmatprep.subr.mxu0 0.0
        %956 = vmatpush1.msra.mxu0 0.0
        %957 = vmatprep.subr.mxu0 0.0
        %958 = vmatpush1.msra.mxu0 0.0
        %959 = vmatprep.subr.mxu0 0.0
        %960 = vmatpush1.msra.mxu0 0.0
        %961 = vmatprep.subr.mxu0 0.0
        %962 = vmatpush1.msra.mxu0 0.0
        %963 = vmatprep.subr.mxu0 0.0
        %964 = vmatpush1.msra.mxu0 0.0
        %965 = vmatprep.subr.mxu0 0.0
        %966 = vmatpush1.msra.mxu0 0.0
        %967 = vmatprep.subr.mxu0 0.0
        %968 = vmatpush1.msra.mxu0 0.0
        %969 = vmatprep.subr.mxu0 0.0
        %970 = vmatpush1.msra.mxu0 0.0
        %971 = vmatprep.subr.mxu0 0.0
        %972 = vmatpush1.msra.mxu0 0.0
        %973 = vmatprep.subr.mxu0 0.0
        %974 = vmatpush1.msra.mxu0 0.0
        %975 = vmatprep.subr.mxu0 0.0
        %976 = vmatpush1.msra.mxu0 0.0
        %977 = vmatprep.subr.mxu0 0.0
        %978 = vmatpush1.msra.mxu0 0.0
        %979 = vmatprep.subr.mxu0 0.0
        %980 = vmatpush1.msra.mxu0 0.0
        %981 = vmatprep.subr.mxu0 0.0
        %982 = vmatpush1.msra.mxu0 0.0
        %983 = vmatprep.subr.mxu0 0.0
        %984 = vmatpush1.msra.mxu0 0.0
        %985 = vmatprep.subr.mxu0 0.0
        %986 = vmatpush1.msra.mxu0 0.0
        %987 = vmatprep.subr.mxu0 0.0
        %988 = vmatpush1.msra.mxu0 0.0
        %989 = vmatprep.subr.mxu0 0.0
        %990 = vmatpush1.msra.mxu0 0.0
        %991 = vmatprep.subr.mxu0 0.0
        %992 = vmatpush1.msra.mxu0 0.0
        %993 = vmatprep.subr.mxu0 0.0
        %994 = vmatpush1.msra.mxu0 0.0
        %995 = vmatprep.subr.mxu0 0.0
        %996 = vmatpush1.msra.mxu0 0.0
        %997 = vmatprep.subr.mxu0 0.0
        %998 = vmatpush1.msra.mxu0 0.0
        %999 = vmatprep.subr.mxu0 0.0
        %1000 = vmatpush1.msra.mxu0 0.0
        %1001 = vmatprep.subr.mxu0 0.0
        %1002 = vmatpush1.msra.mxu0 0.0
        %1003 = vmatprep.subr.mxu0 0.0
        %1004 = vmatpush1.msra.mxu0 0.0
        %1005 = vmatprep.subr.mxu0 0.0
        %1006 = vmatpush1.msra.mxu0 0.0
        %1007 = vmatprep.subr.mxu0 0.0
        %1008 = vmatpush1.msra.mxu0 0.0
        %1009 = vmatprep.mubr.f32.mxu0 0.0
        %1010 = vmatmul.mubr.f32.gmra.mrb[0].mxu0 %v943
        %v1011 = vpop.f32.mrb[0].mxu0
        %v1012 = vadd.f32 0.0, %v1011
        %v1013 = vpop.f32.mrb[0].mxu0
        %1014 = vdwg.mxu0
        %v1015 = vld [vmem:[%s9] sm:$0xff]
        %v1016 = vld [vmem:[%s9 + $0x8] sm:$0xff]
        %s1017 = scalar_lea.vmem %s3, 128
        %v1018 = vld [vmem:[%s1017] sm:$0xff]
        %v1019 = vld [vmem:[%s1017 + $0x8] sm:$0xff]
        %v1020 = vld [vmem:[%s1017 + $0x10] sm:$0xff]
        %v1021 = vld [vmem:[%s1017 + $0x18] sm:$0xff]
        %v1022 = vld [vmem:[%s1017 + $0x20] sm:$0xff]
        %v1023 = vld [vmem:[%s1017 + $0x28] sm:$0xff]
        %v1024 = vld [vmem:[%s1017 + $0x30] sm:$0xff]
        %v1025 = vld [vmem:[%s1017 + $0x38] sm:$0xff]
        %v1026 = vld [vmem:[%s1017 + $0x40] sm:$0xff]
        %v1027 = vld [vmem:[%s1017 + $0x48] sm:$0xff]
        %v1028 = vld [vmem:[%s1017 + $0x50] sm:$0xff]
        %v1029 = vld [vmem:[%s1017 + $0x58] sm:$0xff]
        %v1030 = vld [vmem:[%s1017 + $0x60] sm:$0xff]
        %v1031 = vld [vmem:[%s1017 + $0x68] sm:$0xff]
        %v1032 = vld [vmem:[%s1017 + $0x70] sm:$0xff]
        %v1033 = vld [vmem:[%s1017 + $0x78] sm:$0xff]
        %s1034 = scalar_lea.vmem %s4, 1
        %v1035 = vld [vmem:[%s1034] sm:$0x1]
        %v1037 = vlaneseq
        %v1038 = vshrl.u32 %v1037, 7
        %v1039 = vsub.s32 0, %v1038
        %v1040 = vrot.slane %v1035, %v1039
        %1042 = vmatprep.subr.mxu0 0.0
        %1043 = vmatpush1.msra.mxu0 %v1018
        %1044 = vmatprep.subr.mxu0 0.0
        %1045 = vmatpush1.msra.mxu0 %v1019
        %1046 = vmatprep.subr.mxu0 0.0
        %1047 = vmatpush1.msra.mxu0 %v1020
        %1048 = vmatprep.subr.mxu0 0.0
        %1049 = vmatpush1.msra.mxu0 %v1021
        %1050 = vmatprep.subr.mxu0 0.0
        %1051 = vmatpush1.msra.mxu0 %v1022
        %1052 = vmatprep.subr.mxu0 0.0
        %1053 = vmatpush1.msra.mxu0 %v1023
        %1054 = vmatprep.subr.mxu0 0.0
        %1055 = vmatpush1.msra.mxu0 %v1024
        %1056 = vmatprep.subr.mxu0 0.0
        %1057 = vmatpush1.msra.mxu0 %v1025
        %1058 = vmatprep.subr.mxu0 0.0
        %1059 = vmatpush1.msra.mxu0 %v1026
        %1060 = vmatprep.subr.mxu0 0.0
        %1061 = vmatpush1.msra.mxu0 %v1027
        %1062 = vmatprep.subr.mxu0 0.0
        %1063 = vmatpush1.msra.mxu0 %v1028
        %1064 = vmatprep.subr.mxu0 0.0
        %1065 = vmatpush1.msra.mxu0 %v1029
        %1066 = vmatprep.subr.mxu0 0.0
        %1067 = vmatpush1.msra.mxu0 %v1030
        %1068 = vmatprep.subr.mxu0 0.0
        %1069 = vmatpush1.msra.mxu0 %v1031
        %1070 = vmatprep.subr.mxu0 0.0
        %1071 = vmatpush1.msra.mxu0 %v1032
        %1072 = vmatprep.subr.mxu0 0.0
        %1073 = vmatpush1.msra.mxu0 %v1033
        %1074 = vmatprep.subr.mxu0 0.0
        %1075 = vmatpush1.msra.mxu0 0.0
        %1076 = vmatprep.subr.mxu0 0.0
        %1077 = vmatpush1.msra.mxu0 0.0
        %1078 = vmatprep.subr.mxu0 0.0
        %1079 = vmatpush1.msra.mxu0 0.0
        %1080 = vmatprep.subr.mxu0 0.0
        %1081 = vmatpush1.msra.mxu0 0.0
        %1082 = vmatprep.subr.mxu0 0.0
        %1083 = vmatpush1.msra.mxu0 0.0
        %1084 = vmatprep.subr.mxu0 0.0
        %1085 = vmatpush1.msra.mxu0 0.0
        %1086 = vmatprep.subr.mxu0 0.0
        %1087 = vmatpush1.msra.mxu0 0.0
        %1088 = vmatprep.subr.mxu0 0.0
        %1089 = vmatpush1.msra.mxu0 0.0
        %1090 = vmatprep.subr.mxu0 0.0
        %1091 = vmatpush1.msra.mxu0 0.0
        %1092 = vmatprep.subr.mxu0 0.0
        %1093 = vmatpush1.msra.mxu0 0.0
        %1094 = vmatprep.subr.mxu0 0.0
        %1095 = vmatpush1.msra.mxu0 0.0
        %1096 = vmatprep.subr.mxu0 0.0
        %1097 = vmatpush1.msra.mxu0 0.0
        %1098 = vmatprep.subr.mxu0 0.0
        %1099 = vmatpush1.msra.mxu0 0.0
        %1100 = vmatprep.subr.mxu0 0.0
        %1101 = vmatpush1.msra.mxu0 0.0
        %1102 = vmatprep.subr.mxu0 0.0
        %1103 = vmatpush1.msra.mxu0 0.0
        %1104 = vmatprep.subr.mxu0 0.0
        %1105 = vmatpush1.msra.mxu0 0.0
        %1106 = vmatprep.mubr.f32.mxu0 0.0
        %1107 = vmatmul.mubr.f32.gmra.mrb[0].mxu0 %v572
        %v1108 = vpop.f32.mrb[0].mxu0
        %v1109 = vadd.f32 %v1040, %v1108
        %v1110 = vpop.f32.mrb[0].mxu0
        %1111 = vdwg.mxu0
        %s1112 = scalar_lea.vmem %s5, 128
        %v1113 = vld [vmem:[%s1112] sm:$0xff]
        %v1114 = vld [vmem:[%s1112 + $0x8] sm:$0xff]
        %v1115 = vld [vmem:[%s1112 + $0x10] sm:$0xff]
        %v1116 = vld [vmem:[%s1112 + $0x18] sm:$0xff]
        %v1117 = vld [vmem:[%s1112 + $0x20] sm:$0xff]
        %v1118 = vld [vmem:[%s1112 + $0x28] sm:$0xff]
        %v1119 = vld [vmem:[%s1112 + $0x30] sm:$0xff]
        %v1120 = vld [vmem:[%s1112 + $0x38] sm:$0xff]
        %v1121 = vld [vmem:[%s1112 + $0x40] sm:$0xff]
        %v1122 = vld [vmem:[%s1112 + $0x48] sm:$0xff]
        %v1123 = vld [vmem:[%s1112 + $0x50] sm:$0xff]
        %v1124 = vld [vmem:[%s1112 + $0x58] sm:$0xff]
        %v1125 = vld [vmem:[%s1112 + $0x60] sm:$0xff]
        %v1126 = vld [vmem:[%s1112 + $0x68] sm:$0xff]
        %v1127 = vld [vmem:[%s1112 + $0x70] sm:$0xff]
        %v1128 = vld [vmem:[%s1112 + $0x78] sm:$0xff]
        %s1129 = scalar_lea.vmem %s6, 1
        %v1130 = vld [vmem:[%s1129] sm:$0x1]
        %v1132 = vlaneseq
        %v1133 = vshrl.u32 %v1132, 7
        %v1134 = vsub.s32 0, %v1133
        %v1135 = vrot.slane %v1130, %v1134
        %1137 = vmatprep.subr.mxu0 0.0
        %1138 = vmatpush1.msra.mxu0 %v1113
        %1139 = vmatprep.subr.mxu0 0.0
        %1140 = vmatpush1.msra.mxu0 %v1114
        %1141 = vmatprep.subr.mxu0 0.0
        %1142 = vmatpush1.msra.mxu0 %v1115
        %1143 = vmatprep.subr.mxu0 0.0
        %1144 = vmatpush1.msra.mxu0 %v1116
        %1145 = vmatprep.subr.mxu0 0.0
        %1146 = vmatpush1.msra.mxu0 %v1117
        %1147 = vmatprep.subr.mxu0 0.0
        %1148 = vmatpush1.msra.mxu0 %v1118
        %1149 = vmatprep.subr.mxu0 0.0
        %1150 = vmatpush1.msra.mxu0 %v1119
        %1151 = vmatprep.subr.mxu0 0.0
        %1152 = vmatpush1.msra.mxu0 %v1120
        %1153 = vmatprep.subr.mxu0 0.0
        %1154 = vmatpush1.msra.mxu0 %v1121
        %1155 = vmatprep.subr.mxu0 0.0
        %1156 = vmatpush1.msra.mxu0 %v1122
        %1157 = vmatprep.subr.mxu0 0.0
        %1158 = vmatpush1.msra.mxu0 %v1123
        %1159 = vmatprep.subr.mxu0 0.0
        %1160 = vmatpush1.msra.mxu0 %v1124
        %1161 = vmatprep.subr.mxu0 0.0
        %1162 = vmatpush1.msra.mxu0 %v1125
        %1163 = vmatprep.subr.mxu0 0.0
        %1164 = vmatpush1.msra.mxu0 %v1126
        %1165 = vmatprep.subr.mxu0 0.0
        %1166 = vmatpush1.msra.mxu0 %v1127
        %1167 = vmatprep.subr.mxu0 0.0
        %1168 = vmatpush1.msra.mxu0 %v1128
        %1169 = vmatprep.subr.mxu0 0.0
        %1170 = vmatpush1.msra.mxu0 0.0
        %1171 = vmatprep.subr.mxu0 0.0
        %1172 = vmatpush1.msra.mxu0 0.0
        %1173 = vmatprep.subr.mxu0 0.0
        %1174 = vmatpush1.msra.mxu0 0.0
        %1175 = vmatprep.subr.mxu0 0.0
        %1176 = vmatpush1.msra.mxu0 0.0
        %1177 = vmatprep.subr.mxu0 0.0
        %1178 = vmatpush1.msra.mxu0 0.0
        %1179 = vmatprep.subr.mxu0 0.0
        %1180 = vmatpush1.msra.mxu0 0.0
        %1181 = vmatprep.subr.mxu0 0.0
        %1182 = vmatpush1.msra.mxu0 0.0
        %1183 = vmatprep.subr.mxu0 0.0
        %1184 = vmatpush1.msra.mxu0 0.0
        %1185 = vmatprep.subr.mxu0 0.0
        %1186 = vmatpush1.msra.mxu0 0.0
        %1187 = vmatprep.subr.mxu0 0.0
        %1188 = vmatpush1.msra.mxu0 0.0
        %1189 = vmatprep.subr.mxu0 0.0
        %1190 = vmatpush1.msra.mxu0 0.0
        %1191 = vmatprep.subr.mxu0 0.0
        %1192 = vmatpush1.msra.mxu0 0.0
        %1193 = vmatprep.subr.mxu0 0.0
        %1194 = vmatpush1.msra.mxu0 0.0
        %1195 = vmatprep.subr.mxu0 0.0
        %1196 = vmatpush1.msra.mxu0 0.0
        %1197 = vmatprep.subr.mxu0 0.0
        %1198 = vmatpush1.msra.mxu0 0.0
        %1199 = vmatprep.subr.mxu0 0.0
        %1200 = vmatpush1.msra.mxu0 0.0
        %1201 = vmatprep.mubr.f32.mxu0 0.0
        %1202 = vmatmul.mubr.f32.gmra.mrb[0].mxu0 %v572
        %v1203 = vpop.f32.mrb[0].mxu0
        %v1204 = vadd.f32 %v1135, %v1203
        %v1205 = vpop.f32.mrb[0].mxu0
        %1206 = vdwg.mxu0
        %s1207 = scalar_lea.vmem %s7, 128
        %v1208 = vld [vmem:[%s1207] sm:$0xff]
        %v1209 = vld [vmem:[%s1207 + $0x8] sm:$0xff]
        %v1210 = vld [vmem:[%s1207 + $0x10] sm:$0xff]
        %v1211 = vld [vmem:[%s1207 + $0x18] sm:$0xff]
        %v1212 = vld [vmem:[%s1207 + $0x20] sm:$0xff]
        %v1213 = vld [vmem:[%s1207 + $0x28] sm:$0xff]
        %v1214 = vld [vmem:[%s1207 + $0x30] sm:$0xff]
        %v1215 = vld [vmem:[%s1207 + $0x38] sm:$0xff]
        %v1216 = vld [vmem:[%s1207 + $0x40] sm:$0xff]
        %v1217 = vld [vmem:[%s1207 + $0x48] sm:$0xff]
        %v1218 = vld [vmem:[%s1207 + $0x50] sm:$0xff]
        %v1219 = vld [vmem:[%s1207 + $0x58] sm:$0xff]
        %v1220 = vld [vmem:[%s1207 + $0x60] sm:$0xff]
        %v1221 = vld [vmem:[%s1207 + $0x68] sm:$0xff]
        %v1222 = vld [vmem:[%s1207 + $0x70] sm:$0xff]
        %v1223 = vld [vmem:[%s1207 + $0x78] sm:$0xff]
        %s1224 = scalar_lea.vmem %s8, 1
        %v1225 = vld [vmem:[%s1224] sm:$0x1]
        %v1227 = vlaneseq
        %v1228 = vshrl.u32 %v1227, 7
        %v1229 = vsub.s32 0, %v1228
        %v1230 = vrot.slane %v1225, %v1229
        %1232 = vmatprep.subr.mxu0 0.0
        %1233 = vmatpush1.msra.mxu0 %v1208
        %1234 = vmatprep.subr.mxu0 0.0
        %1235 = vmatpush1.msra.mxu0 %v1209
        %1236 = vmatprep.subr.mxu0 0.0
        %1237 = vmatpush1.msra.mxu0 %v1210
        %1238 = vmatprep.subr.mxu0 0.0
        %1239 = vmatpush1.msra.mxu0 %v1211
        %1240 = vmatprep.subr.mxu0 0.0
        %1241 = vmatpush1.msra.mxu0 %v1212
        %1242 = vmatprep.subr.mxu0 0.0
        %1243 = vmatpush1.msra.mxu0 %v1213
        %1244 = vmatprep.subr.mxu0 0.0
        %1245 = vmatpush1.msra.mxu0 %v1214
        %1246 = vmatprep.subr.mxu0 0.0
        %1247 = vmatpush1.msra.mxu0 %v1215
        %1248 = vmatprep.subr.mxu0 0.0
        %1249 = vmatpush1.msra.mxu0 %v1216
        %1250 = vmatprep.subr.mxu0 0.0
        %1251 = vmatpush1.msra.mxu0 %v1217
        %1252 = vmatprep.subr.mxu0 0.0
        %1253 = vmatpush1.msra.mxu0 %v1218
        %1254 = vmatprep.subr.mxu0 0.0
        %1255 = vmatpush1.msra.mxu0 %v1219
        %1256 = vmatprep.subr.mxu0 0.0
        %1257 = vmatpush1.msra.mxu0 %v1220
        %1258 = vmatprep.subr.mxu0 0.0
        %1259 = vmatpush1.msra.mxu0 %v1221
        %1260 = vmatprep.subr.mxu0 0.0
        %1261 = vmatpush1.msra.mxu0 %v1222
        %1262 = vmatprep.subr.mxu0 0.0
        %1263 = vmatpush1.msra.mxu0 %v1223
        %1264 = vmatprep.subr.mxu0 0.0
        %1265 = vmatpush1.msra.mxu0 0.0
        %1266 = vmatprep.subr.mxu0 0.0
        %1267 = vmatpush1.msra.mxu0 0.0
        %1268 = vmatprep.subr.mxu0 0.0
        %1269 = vmatpush1.msra.mxu0 0.0
        %1270 = vmatprep.subr.mxu0 0.0
        %1271 = vmatpush1.msra.mxu0 0.0
        %1272 = vmatprep.subr.mxu0 0.0
        %1273 = vmatpush1.msra.mxu0 0.0
        %1274 = vmatprep.subr.mxu0 0.0
        %1275 = vmatpush1.msra.mxu0 0.0
        %1276 = vmatprep.subr.mxu0 0.0
        %1277 = vmatpush1.msra.mxu0 0.0
        %1278 = vmatprep.subr.mxu0 0.0
        %1279 = vmatpush1.msra.mxu0 0.0
        %1280 = vmatprep.subr.mxu0 0.0
        %1281 = vmatpush1.msra.mxu0 0.0
        %1282 = vmatprep.subr.mxu0 0.0
        %1283 = vmatpush1.msra.mxu0 0.0
        %1284 = vmatprep.subr.mxu0 0.0
        %1285 = vmatpush1.msra.mxu0 0.0
        %1286 = vmatprep.subr.mxu0 0.0
        %1287 = vmatpush1.msra.mxu0 0.0
        %1288 = vmatprep.subr.mxu0 0.0
        %1289 = vmatpush1.msra.mxu0 0.0
        %1290 = vmatprep.subr.mxu0 0.0
        %1291 = vmatpush1.msra.mxu0 0.0
        %1292 = vmatprep.subr.mxu0 0.0
        %1293 = vmatpush1.msra.mxu0 0.0
        %1294 = vmatprep.subr.mxu0 0.0
        %1295 = vmatpush1.msra.mxu0 0.0
        %1296 = vmatprep.mubr.f32.mxu0 0.0
        %1297 = vmatmul.mubr.f32.gmra.mrb[0].mxu0 %v572
        %v1298 = vpop.f32.mrb[0].mxu0
        %v1299 = vadd.f32 %v1230, %v1298
        %v1300 = vpop.f32.mrb[0].mxu0
        %1301 = vdwg.mxu0
        %v1303 = vsel %vm852, %v1109, 0
        %v1306 = vsel %vm852, %v1204, 0
        %1308 = vmatprep.subr.mxu0 0.0
        %1309 = vmatpush1.xpose.msra.mxu0 %v1306
        %1310 = vmatprep.subr.mxu0 0.0
        %1311 = vmatpush1.xpose.msra.mxu0 0.0
        %1312 = vmatprep.subr.mxu0 0.0
        %1313 = vmatpush1.xpose.msra.mxu0 0.0
        %1314 = vmatprep.subr.mxu0 0.0
        %1315 = vmatpush1.xpose.msra.mxu0 0.0
        %1316 = vmatprep.subr.mxu0 0.0
        %1317 = vmatpush1.xpose.msra.mxu0 0.0
        %1318 = vmatprep.subr.mxu0 0.0
        %1319 = vmatpush1.xpose.msra.mxu0 0.0
        %1320 = vmatprep.subr.mxu0 0.0
        %1321 = vmatpush1.xpose.msra.mxu0 0.0
        %1322 = vmatprep.subr.mxu0 0.0
        %1323 = vmatpush1.xpose.msra.mxu0 0.0
        %1324 = vmatprep.subr.mxu0 0.0
        %1325 = vmatpush1.xpose.msra.mxu0 0.0
        %1326 = vmatprep.subr.mxu0 0.0
        %1327 = vmatpush1.xpose.msra.mxu0 0.0
        %1328 = vmatprep.subr.mxu0 0.0
        %1329 = vmatpush1.xpose.msra.mxu0 0.0
        %1330 = vmatprep.subr.mxu0 0.0
        %1331 = vmatpush1.xpose.msra.mxu0 0.0
        %1332 = vmatprep.subr.mxu0 0.0
        %1333 = vmatpush1.xpose.msra.mxu0 0.0
        %1334 = vmatprep.subr.mxu0 0.0
        %1335 = vmatpush1.xpose.msra.mxu0 0.0
        %1336 = vmatprep.subr.mxu0 0.0
        %1337 = vmatpush1.xpose.msra.mxu0 0.0
        %1338 = vmatprep.subr.mxu0 0.0
        %1339 = vmatpush1.xpose.msra.mxu0 0.0
        %1340 = vmatprep.subr.mxu0 0.0
        %1341 = vmatpush1.xpose.msra.mxu0 0.0
        %1342 = vmatprep.subr.mxu0 0.0
        %1343 = vmatpush1.xpose.msra.mxu0 0.0
        %1344 = vmatprep.subr.mxu0 0.0
        %1345 = vmatpush1.xpose.msra.mxu0 0.0
        %1346 = vmatprep.subr.mxu0 0.0
        %1347 = vmatpush1.xpose.msra.mxu0 0.0
        %1348 = vmatprep.subr.mxu0 0.0
        %1349 = vmatpush1.xpose.msra.mxu0 0.0
        %1350 = vmatprep.subr.mxu0 0.0
        %1351 = vmatpush1.xpose.msra.mxu0 0.0
        %1352 = vmatprep.subr.mxu0 0.0
        %1353 = vmatpush1.xpose.msra.mxu0 0.0
        %1354 = vmatprep.subr.mxu0 0.0
        %1355 = vmatpush1.xpose.msra.mxu0 0.0
        %1356 = vmatprep.subr.mxu0 0.0
        %1357 = vmatpush1.xpose.msra.mxu0 0.0
        %1358 = vmatprep.subr.mxu0 0.0
        %1359 = vmatpush1.xpose.msra.mxu0 0.0
        %1360 = vmatprep.subr.mxu0 0.0
        %1361 = vmatpush1.xpose.msra.mxu0 0.0
        %1362 = vmatprep.subr.mxu0 0.0
        %1363 = vmatpush1.xpose.msra.mxu0 0.0
        %1364 = vmatprep.subr.mxu0 0.0
        %1365 = vmatpush1.xpose.msra.mxu0 0.0
        %1366 = vmatprep.subr.mxu0 0.0
        %1367 = vmatpush1.xpose.msra.mxu0 0.0
        %1368 = vmatprep.subr.mxu0 0.0
        %1369 = vmatpush1.xpose.msra.mxu0 0.0
        %1370 = vmatprep.subr.mxu0 0.0
        %1371 = vmatpush1.xpose.msra.mxu0 0.0
        %1372 = vmatprep.mubr.f32.mxu0 0.0
        %1373 = vmatmul.mubr.f32.gmra.mrb[0].mxu0 %v1303
        %v1374 = vpop.f32.mrb[0].mxu0
        %v1375 = vadd.f32 0.0, %v1374
        %v1376 = vpop.f32.mrb[0].mxu0
        %1377 = vdwg.mxu0
        %v1378 = vmul.f32 %v1375, 0.25
        %v1379 = vsel %vm930, %v1378, -inf
        %1380 = vmax.xlane.f32.xlu0 %v1379
        %v1381 = vpop.xlane.xlu0 %1380
        %v1382 = vsub.f32 %v1378, %v1381
        %v1383 = vmul.f32 %v1382, 1.442695
        %v1384 = vpow.pop %v1383
        %v1385 = vsel %vm930, %v1384, 0.0
        %1386 = vadd.xlane.f32.xlu0 %v1385
        %v1387 = vpop.xlane.xlu0 %1386
        %v1388 = vrcp.pop %v1387
        %v1389 = vmul.f32 %v1384, %v1388
        %v1391 = vsel %vm930, %v1389, 0
        %1393 = vmatprep.subr.mxu0 0.0
        %1394 = vmatpush1.msra.mxu0 %v1299
        %1395 = vmatprep.subr.mxu0 0.0
        %1396 = vmatpush1.msra.mxu0 0.0
        %1397 = vmatprep.subr.mxu0 0.0
        %1398 = vmatpush1.msra.mxu0 0.0
        %1399 = vmatprep.subr.mxu0 0.0
        %1400 = vmatpush1.msra.mxu0 0.0
        %1401 = vmatprep.subr.mxu0 0.0
        %1402 = vmatpush1.msra.mxu0 0.0
        %1403 = vmatprep.subr.mxu0 0.0
        %1404 = vmatpush1.msra.mxu0 0.0
        %1405 = vmatprep.subr.mxu0 0.0
        %1406 = vmatpush1.msra.mxu0 0.0
        %1407 = vmatprep.subr.mxu0 0.0
        %1408 = vmatpush1.msra.mxu0 0.0
        %1409 = vmatprep.subr.mxu0 0.0
        %1410 = vmatpush1.msra.mxu0 0.0
        %1411 = vmatprep.subr.mxu0 0.0
        %1412 = vmatpush1.msra.mxu0 0.0
        %1413 = vmatprep.subr.mxu0 0.0
        %1414 = vmatpush1.msra.mxu0 0.0
        %1415 = vmatprep.subr.mxu0 0.0
        %1416 = vmatpush1.msra.mxu0 0.0
        %1417 = vmatprep.subr.mxu0 0.0
        %1418 = vmatpush1.msra.mxu0 0.0
        %1419 = vmatprep.subr.mxu0 0.0
        %1420 = vmatpush1.msra.mxu0 0.0
        %1421 = vmatprep.subr.mxu0 0.0
        %1422 = vmatpush1.msra.mxu0 0.0
        %1423 = vmatprep.subr.mxu0 0.0
        %1424 = vmatpush1.msra.mxu0 0.0
        %1425 = vmatprep.subr.mxu0 0.0
        %1426 = vmatpush1.msra.mxu0 0.0
        %1427 = vmatprep.subr.mxu0 0.0
        %1428 = vmatpush1.msra.mxu0 0.0
        %1429 = vmatprep.subr.mxu0 0.0
        %1430 = vmatpush1.msra.mxu0 0.0
        %1431 = vmatprep.subr.mxu0 0.0
        %1432 = vmatpush1.msra.mxu0 0.0
        %1433 = vmatprep.subr.mxu0 0.0
        %1434 = vmatpush1.msra.mxu0 0.0
        %1435 = vmatprep.subr.mxu0 0.0
        %1436 = vmatpush1.msra.mxu0 0.0
        %1437 = vmatprep.subr.mxu0 0.0
        %1438 = vmatpush1.msra.mxu0 0.0
        %1439 = vmatprep.subr.mxu0 0.0
        %1440 = vmatpush1.msra.mxu0 0.0
        %1441 = vmatprep.subr.mxu0 0.0
        %1442 = vmatpush1.msra.mxu0 0.0
        %1443 = vmatprep.subr.mxu0 0.0
        %1444 = vmatpush1.msra.mxu0 0.0
        %1445 = vmatprep.subr.mxu0 0.0
        %1446 = vmatpush1.msra.mxu0 0.0
        %1447 = vmatprep.subr.mxu0 0.0
        %1448 = vmatpush1.msra.mxu0 0.0
        %1449 = vmatprep.subr.mxu0 0.0
        %1450 = vmatpush1.msra.mxu0 0.0
        %1451 = vmatprep.subr.mxu0 0.0
        %1452 = vmatpush1.msra.mxu0 0.0
        %1453 = vmatprep.subr.mxu0 0.0
        %1454 = vmatpush1.msra.mxu0 0.0
        %1455 = vmatprep.subr.mxu0 0.0
        %1456 = vmatpush1.msra.mxu0 0.0
        %1457 = vmatprep.mubr.f32.mxu0 0.0
        %1458 = vmatmul.mubr.f32.gmra.mrb[0].mxu0 %v1391
        %v1459 = vpop.f32.mrb[0].mxu0
        %v1460 = vadd.f32 0.0, %v1459
        %v1461 = vpop.f32.mrb[0].mxu0
        %1462 = vdwg.mxu0
        %s1463 = scalar_lea.vmem %s9, 16
        %v1464 = vld [vmem:[%s1463] sm:$0xff]
        %v1465 = vld [vmem:[%s1463 + $0x8] sm:$0xff]
        %v1467 = vsel %vm852, %v1460, 0
        %1469 = vmatprep.subr.mxu0 0.0
        %1470 = vmatpush1.msra.mxu0 %v1464
        %1471 = vmatprep.subr.mxu0 0.0
        %1472 = vmatpush1.msra.mxu0 %v1465
        %1473 = vmatprep.subr.mxu0 0.0
        %1474 = vmatpush1.msra.mxu0 0.0
        %1475 = vmatprep.subr.mxu0 0.0
        %1476 = vmatpush1.msra.mxu0 0.0
        %1477 = vmatprep.subr.mxu0 0.0
        %1478 = vmatpush1.msra.mxu0 0.0
        %1479 = vmatprep.subr.mxu0 0.0
        %1480 = vmatpush1.msra.mxu0 0.0
        %1481 = vmatprep.subr.mxu0 0.0
        %1482 = vmatpush1.msra.mxu0 0.0
        %1483 = vmatprep.subr.mxu0 0.0
        %1484 = vmatpush1.msra.mxu0 0.0
        %1485 = vmatprep.subr.mxu0 0.0
        %1486 = vmatpush1.msra.mxu0 0.0
        %1487 = vmatprep.subr.mxu0 0.0
        %1488 = vmatpush1.msra.mxu0 0.0
        %1489 = vmatprep.subr.mxu0 0.0
        %1490 = vmatpush1.msra.mxu0 0.0
        %1491 = vmatprep.subr.mxu0 0.0
        %1492 = vmatpush1.msra.mxu0 0.0
        %1493 = vmatprep.subr.mxu0 0.0
        %1494 = vmatpush1.msra.mxu0 0.0
        %1495 = vmatprep.subr.mxu0 0.0
        %1496 = vmatpush1.msra.mxu0 0.0
        %1497 = vmatprep.subr.mxu0 0.0
        %1498 = vmatpush1.msra.mxu0 0.0
        %1499 = vmatprep.subr.mxu0 0.0
        %1500 = vmatpush1.msra.mxu0 0.0
        %1501 = vmatprep.subr.mxu0 0.0
        %1502 = vmatpush1.msra.mxu0 0.0
        %1503 = vmatprep.subr.mxu0 0.0
        %1504 = vmatpush1.msra.mxu0 0.0
        %1505 = vmatprep.subr.mxu0 0.0
        %1506 = vmatpush1.msra.mxu0 0.0
        %1507 = vmatprep.subr.mxu0 0.0
        %1508 = vmatpush1.msra.mxu0 0.0
        %1509 = vmatprep.subr.mxu0 0.0
        %1510 = vmatpush1.msra.mxu0 0.0
        %1511 = vmatprep.subr.mxu0 0.0
        %1512 = vmatpush1.msra.mxu0 0.0
        %1513 = vmatprep.subr.mxu0 0.0
        %1514 = vmatpush1.msra.mxu0 0.0
        %1515 = vmatprep.subr.mxu0 0.0
        %1516 = vmatpush1.msra.mxu0 0.0
        %1517 = vmatprep.subr.mxu0 0.0
        %1518 = vmatpush1.msra.mxu0 0.0
        %1519 = vmatprep.subr.mxu0 0.0
        %1520 = vmatpush1.msra.mxu0 0.0
        %1521 = vmatprep.subr.mxu0 0.0
        %1522 = vmatpush1.msra.mxu0 0.0
        %1523 = vmatprep.subr.mxu0 0.0
        %1524 = vmatpush1.msra.mxu0 0.0
        %1525 = vmatprep.subr.mxu0 0.0
        %1526 = vmatpush1.msra.mxu0 0.0
        %1527 = vmatprep.subr.mxu0 0.0
        %1528 = vmatpush1.msra.mxu0 0.0
        %1529 = vmatprep.subr.mxu0 0.0
        %1530 = vmatpush1.msra.mxu0 0.0
        %1531 = vmatprep.subr.mxu0 0.0
        %1532 = vmatpush1.msra.mxu0 0.0
        %1533 = vmatprep.mubr.f32.mxu0 0.0
        %1534 = vmatmul.mubr.f32.gmra.mrb[0].mxu0 %v1467
        %v1535 = vpop.f32.mrb[0].mxu0
        %v1536 = vadd.f32 0.0, %v1535
        %v1537 = vpop.f32.mrb[0].mxu0
        %1538 = vdwg.mxu0
        %v1540 = vsel %vm852, %v1012, 0
        %1542 = vmatprep.subr.mxu0 0.0
        %1543 = vmatpush1.msra.mxu0 %v1015
        %1544 = vmatprep.subr.mxu0 0.0
        %1545 = vmatpush1.msra.mxu0 %v1016
        %1546 = vmatprep.subr.mxu0 0.0
        %1547 = vmatpush1.msra.mxu0 0.0
        %1548 = vmatprep.subr.mxu0 0.0
        %1549 = vmatpush1.msra.mxu0 0.0
        %1550 = vmatprep.subr.mxu0 0.0
        %1551 = vmatpush1.msra.mxu0 0.0
        %1552 = vmatprep.subr.mxu0 0.0
        %1553 = vmatpush1.msra.mxu0 0.0
        %1554 = vmatprep.subr.mxu0 0.0
        %1555 = vmatpush1.msra.mxu0 0.0
        %1556 = vmatprep.subr.mxu0 0.0
        %1557 = vmatpush1.msra.mxu0 0.0
        %1558 = vmatprep.subr.mxu0 0.0
        %1559 = vmatpush1.msra.mxu0 0.0
        %1560 = vmatprep.subr.mxu0 0.0
        %1561 = vmatpush1.msra.mxu0 0.0
        %1562 = vmatprep.subr.mxu0 0.0
        %1563 = vmatpush1.msra.mxu0 0.0
        %1564 = vmatprep.subr.mxu0 0.0
        %1565 = vmatpush1.msra.mxu0 0.0
        %1566 = vmatprep.subr.mxu0 0.0
        %1567 = vmatpush1.msra.mxu0 0.0
        %1568 = vmatprep.subr.mxu0 0.0
        %1569 = vmatpush1.msra.mxu0 0.0
        %1570 = vmatprep.subr.mxu0 0.0
        %1571 = vmatpush1.msra.mxu0 0.0
        %1572 = vmatprep.subr.mxu0 0.0
        %1573 = vmatpush1.msra.mxu0 0.0
        %1574 = vmatprep.subr.mxu0 0.0
        %1575 = vmatpush1.msra.mxu0 0.0
        %1576 = vmatprep.subr.mxu0 0.0
        %1577 = vmatpush1.msra.mxu0 0.0
        %1578 = vmatprep.subr.mxu0 0.0
        %1579 = vmatpush1.msra.mxu0 0.0
        %1580 = vmatprep.subr.mxu0 0.0
        %1581 = vmatpush1.msra.mxu0 0.0
        %1582 = vmatprep.subr.mxu0 0.0
        %1583 = vmatpush1.msra.mxu0 0.0
        %1584 = vmatprep.subr.mxu0 0.0
        %1585 = vmatpush1.msra.mxu0 0.0
        %1586 = vmatprep.subr.mxu0 0.0
        %1587 = vmatpush1.msra.mxu0 0.0
        %1588 = vmatprep.subr.mxu0 0.0
        %1589 = vmatpush1.msra.mxu0 0.0
        %1590 = vmatprep.subr.mxu0 0.0
        %1591 = vmatpush1.msra.mxu0 0.0
        %1592 = vmatprep.subr.mxu0 0.0
        %1593 = vmatpush1.msra.mxu0 0.0
        %1594 = vmatprep.subr.mxu0 0.0
        %1595 = vmatpush1.msra.mxu0 0.0
        %1596 = vmatprep.subr.mxu0 0.0
        %1597 = vmatpush1.msra.mxu0 0.0
        %1598 = vmatprep.subr.mxu0 0.0
        %1599 = vmatpush1.msra.mxu0 0.0
        %1600 = vmatprep.subr.mxu0 0.0
        %1601 = vmatpush1.msra.mxu0 0.0
        %1602 = vmatprep.subr.mxu0 0.0
        %1603 = vmatpush1.msra.mxu0 0.0
        %1604 = vmatprep.subr.mxu0 0.0
        %1605 = vmatpush1.msra.mxu0 0.0
        %1606 = vmatprep.mubr.f32.mxu0 0.0
        %1607 = vmatmul.mubr.f32.gmra.mrb[0].mxu0 %v1540
        %v1608 = vpop.f32.mrb[0].mxu0
        %v1609 = vadd.f32 %v1536, %v1608
        %v1610 = vpop.f32.mrb[0].mxu0
        %1611 = vdwg.mxu0
        %s1612 = scalar_lea.vmem %s3, 256
        %v1613 = vld [vmem:[%s1612] sm:$0xff]
        %v1614 = vld [vmem:[%s1612 + $0x8] sm:$0xff]
        %v1615 = vld [vmem:[%s1612 + $0x10] sm:$0xff]
        %v1616 = vld [vmem:[%s1612 + $0x18] sm:$0xff]
        %v1617 = vld [vmem:[%s1612 + $0x20] sm:$0xff]
        %v1618 = vld [vmem:[%s1612 + $0x28] sm:$0xff]
        %v1619 = vld [vmem:[%s1612 + $0x30] sm:$0xff]
        %v1620 = vld [vmem:[%s1612 + $0x38] sm:$0xff]
        %v1621 = vld [vmem:[%s1612 + $0x40] sm:$0xff]
        %v1622 = vld [vmem:[%s1612 + $0x48] sm:$0xff]
        %v1623 = vld [vmem:[%s1612 + $0x50] sm:$0xff]
        %v1624 = vld [vmem:[%s1612 + $0x58] sm:$0xff]
        %v1625 = vld [vmem:[%s1612 + $0x60] sm:$0xff]
        %v1626 = vld [vmem:[%s1612 + $0x68] sm:$0xff]
        %v1627 = vld [vmem:[%s1612 + $0x70] sm:$0xff]
        %v1628 = vld [vmem:[%s1612 + $0x78] sm:$0xff]
        %s1629 = scalar_lea.vmem %s4, 2
        %v1630 = vld [vmem:[%s1629] sm:$0x1]
        %v1632 = vlaneseq
        %v1633 = vshrl.u32 %v1632, 7
        %v1634 = vsub.s32 0, %v1633
        %v1635 = vrot.slane %v1630, %v1634
        %1637 = vmatprep.subr.mxu0 0.0
        %1638 = vmatpush1.msra.mxu0 %v1613
        %1639 = vmatprep.subr.mxu0 0.0
        %1640 = vmatpush1.msra.mxu0 %v1614
        %1641 = vmatprep.subr.mxu0 0.0
        %1642 = vmatpush1.msra.mxu0 %v1615
        %1643 = vmatprep.subr.mxu0 0.0
        %1644 = vmatpush1.msra.mxu0 %v1616
        %1645 = vmatprep.subr.mxu0 0.0
        %1646 = vmatpush1.msra.mxu0 %v1617
        %1647 = vmatprep.subr.mxu0 0.0
        %1648 = vmatpush1.msra.mxu0 %v1618
        %1649 = vmatprep.subr.mxu0 0.0
        %1650 = vmatpush1.msra.mxu0 %v1619
        %1651 = vmatprep.subr.mxu0 0.0
        %1652 = vmatpush1.msra.mxu0 %v1620
        %1653 = vmatprep.subr.mxu0 0.0
        %1654 = vmatpush1.msra.mxu0 %v1621
        %1655 = vmatprep.subr.mxu0 0.0
        %1656 = vmatpush1.msra.mxu0 %v1622
        %1657 = vmatprep.subr.mxu0 0.0
        %1658 = vmatpush1.msra.mxu0 %v1623
        %1659 = vmatprep.subr.mxu0 0.0
        %1660 = vmatpush1.msra.mxu0 %v1624
        %1661 = vmatprep.subr.mxu0 0.0
        %1662 = vmatpush1.msra.mxu0 %v1625
        %1663 = vmatprep.subr.mxu0 0.0
        %1664 = vmatpush1.msra.mxu0 %v1626
        %1665 = vmatprep.subr.mxu0 0.0
        %1666 = vmatpush1.msra.mxu0 %v1627
        %1667 = vmatprep.subr.mxu0 0.0
        %1668 = vmatpush1.msra.mxu0 %v1628
        %1669 = vmatprep.subr.mxu0 0.0
        %1670 = vmatpush1.msra.mxu0 0.0
        %1671 = vmatprep.subr.mxu0 0.0
        %1672 = vmatpush1.msra.mxu0 0.0
        %1673 = vmatprep.subr.mxu0 0.0
        %1674 = vmatpush1.msra.mxu0 0.0
        %1675 = vmatprep.subr.mxu0 0.0
        %1676 = vmatpush1.msra.mxu0 0.0
        %1677 = vmatprep.subr.mxu0 0.0
        %1678 = vmatpush1.msra.mxu0 0.0
        %1679 = vmatprep.subr.mxu0 0.0
        %1680 = vmatpush1.msra.mxu0 0.0
        %1681 = vmatprep.subr.mxu0 0.0
        %1682 = vmatpush1.msra.mxu0 0.0
        %1683 = vmatprep.subr.mxu0 0.0
        %1684 = vmatpush1.msra.mxu0 0.0
        %1685 = vmatprep.subr.mxu0 0.0
        %1686 = vmatpush1.msra.mxu0 0.0
        %1687 = vmatprep.subr.mxu0 0.0
        %1688 = vmatpush1.msra.mxu0 0.0
        %1689 = vmatprep.subr.mxu0 0.0
        %1690 = vmatpush1.msra.mxu0 0.0
        %1691 = vmatprep.subr.mxu0 0.0
        %1692 = vmatpush1.msra.mxu0 0.0
        %1693 = vmatprep.subr.mxu0 0.0
        %1694 = vmatpush1.msra.mxu0 0.0
        %1695 = vmatprep.subr.mxu0 0.0
        %1696 = vmatpush1.msra.mxu0 0.0
        %1697 = vmatprep.subr.mxu0 0.0
        %1698 = vmatpush1.msra.mxu0 0.0
        %1699 = vmatprep.subr.mxu0 0.0
        %1700 = vmatpush1.msra.mxu0 0.0
        %1701 = vmatprep.mubr.f32.mxu0 0.0
        %1702 = vmatmul.mubr.f32.gmra.mrb[0].mxu0 %v572
        %v1703 = vpop.f32.mrb[0].mxu0
        %v1704 = vadd.f32 %v1635, %v1703
        %v1705 = vpop.f32.mrb[0].mxu0
        %1706 = vdwg.mxu0
        %s1707 = scalar_lea.vmem %s5, 256
        %v1708 = vld [vmem:[%s1707] sm:$0xff]
        %v1709 = vld [vmem:[%s1707 + $0x8] sm:$0xff]
        %v1710 = vld [vmem:[%s1707 + $0x10] sm:$0xff]
        %v1711 = vld [vmem:[%s1707 + $0x18] sm:$0xff]
        %v1712 = vld [vmem:[%s1707 + $0x20] sm:$0xff]
        %v1713 = vld [vmem:[%s1707 + $0x28] sm:$0xff]
        %v1714 = vld [vmem:[%s1707 + $0x30] sm:$0xff]
        %v1715 = vld [vmem:[%s1707 + $0x38] sm:$0xff]
        %v1716 = vld [vmem:[%s1707 + $0x40] sm:$0xff]
        %v1717 = vld [vmem:[%s1707 + $0x48] sm:$0xff]
        %v1718 = vld [vmem:[%s1707 + $0x50] sm:$0xff]
        %v1719 = vld [vmem:[%s1707 + $0x58] sm:$0xff]
        %v1720 = vld [vmem:[%s1707 + $0x60] sm:$0xff]
        %v1721 = vld [vmem:[%s1707 + $0x68] sm:$0xff]
        %v1722 = vld [vmem:[%s1707 + $0x70] sm:$0xff]
        %v1723 = vld [vmem:[%s1707 + $0x78] sm:$0xff]
        %s1724 = scalar_lea.vmem %s6, 2
        %v1725 = vld [vmem:[%s1724] sm:$0x1]
        %v1727 = vlaneseq
        %v1728 = vshrl.u32 %v1727, 7
        %v1729 = vsub.s32 0, %v1728
        %v1730 = vrot.slane %v1725, %v1729
        %1732 = vmatprep.subr.mxu0 0.0
        %1733 = vmatpush1.msra.mxu0 %v1708
        %1734 = vmatprep.subr.mxu0 0.0
        %1735 = vmatpush1.msra.mxu0 %v1709
        %1736 = vmatprep.subr.mxu0 0.0
        %1737 = vmatpush1.msra.mxu0 %v1710
        %1738 = vmatprep.subr.mxu0 0.0
        %1739 = vmatpush1.msra.mxu0 %v1711
        %1740 = vmatprep.subr.mxu0 0.0
        %1741 = vmatpush1.msra.mxu0 %v1712
        %1742 = vmatprep.subr.mxu0 0.0
        %1743 = vmatpush1.msra.mxu0 %v1713
        %1744 = vmatprep.subr.mxu0 0.0
        %1745 = vmatpush1.msra.mxu0 %v1714
        %1746 = vmatprep.subr.mxu0 0.0
        %1747 = vmatpush1.msra.mxu0 %v1715
        %1748 = vmatprep.subr.mxu0 0.0
        %1749 = vmatpush1.msra.mxu0 %v1716
        %1750 = vmatprep.subr.mxu0 0.0
        %1751 = vmatpush1.msra.mxu0 %v1717
        %1752 = vmatprep.subr.mxu0 0.0
        %1753 = vmatpush1.msra.mxu0 %v1718
        %1754 = vmatprep.subr.mxu0 0.0
        %1755 = vmatpush1.msra.mxu0 %v1719
        %1756 = vmatprep.subr.mxu0 0.0
        %1757 = vmatpush1.msra.mxu0 %v1720
        %1758 = vmatprep.subr.mxu0 0.0
        %1759 = vmatpush1.msra.mxu0 %v1721
        %1760 = vmatprep.subr.mxu0 0.0
        %1761 = vmatpush1.msra.mxu0 %v1722
        %1762 = vmatprep.subr.mxu0 0.0
        %1763 = vmatpush1.msra.mxu0 %v1723
        %1764 = vmatprep.subr.mxu0 0.0
        %1765 = vmatpush1.msra.mxu0 0.0
        %1766 = vmatprep.subr.mxu0 0.0
        %1767 = vmatpush1.msra.mxu0 0.0
        %1768 = vmatprep.subr.mxu0 0.0
        %1769 = vmatpush1.msra.mxu0 0.0
        %1770 = vmatprep.subr.mxu0 0.0
        %1771 = vmatpush1.msra.mxu0 0.0
        %1772 = vmatprep.subr.mxu0 0.0
        %1773 = vmatpush1.msra.mxu0 0.0
        %1774 = vmatprep.subr.mxu0 0.0
        %1775 = vmatpush1.msra.mxu0 0.0
        %1776 = vmatprep.subr.mxu0 0.0
        %1777 = vmatpush1.msra.mxu0 0.0
        %1778 = vmatprep.subr.mxu0 0.0
        %1779 = vmatpush1.msra.mxu0 0.0
        %1780 = vmatprep.subr.mxu0 0.0
        %1781 = vmatpush1.msra.mxu0 0.0
        %1782 = vmatprep.subr.mxu0 0.0
        %1783 = vmatpush1.msra.mxu0 0.0
        %1784 = vmatprep.subr.mxu0 0.0
        %1785 = vmatpush1.msra.mxu0 0.0
        %1786 = vmatprep.subr.mxu0 0.0
        %1787 = vmatpush1.msra.mxu0 0.0
        %1788 = vmatprep.subr.mxu0 0.0
        %1789 = vmatpush1.msra.mxu0 0.0
        %1790 = vmatprep.subr.mxu0 0.0
        %1791 = vmatpush1.msra.mxu0 0.0
        %1792 = vmatprep.subr.mxu0 0.0
        %1793 = vmatpush1.msra.mxu0 0.0
        %1794 = vmatprep.subr.mxu0 0.0
        %1795 = vmatpush1.msra.mxu0 0.0
        %1796 = vmatprep.mubr.f32.mxu0 0.0
        %1797 = vmatmul.mubr.f32.gmra.mrb[0].mxu0 %v572
        %v1798 = vpop.f32.mrb[0].mxu0
        %v1799 = vadd.f32 %v1730, %v1798
        %v1800 = vpop.f32.mrb[0].mxu0
        %1801 = vdwg.mxu0
        %s1802 = scalar_lea.vmem %s7, 256
        %v1803 = vld [vmem:[%s1802] sm:$0xff]
        %v1804 = vld [vmem:[%s1802 + $0x8] sm:$0xff]
        %v1805 = vld [vmem:[%s1802 + $0x10] sm:$0xff]
        %v1806 = vld [vmem:[%s1802 + $0x18] sm:$0xff]
        %v1807 = vld [vmem:[%s1802 + $0x20] sm:$0xff]
        %v1808 = vld [vmem:[%s1802 + $0x28] sm:$0xff]
        %v1809 = vld [vmem:[%s1802 + $0x30] sm:$0xff]
        %v1810 = vld [vmem:[%s1802 + $0x38] sm:$0xff]
        %v1811 = vld [vmem:[%s1802 + $0x40] sm:$0xff]
        %v1812 = vld [vmem:[%s1802 + $0x48] sm:$0xff]
        %v1813 = vld [vmem:[%s1802 + $0x50] sm:$0xff]
        %v1814 = vld [vmem:[%s1802 + $0x58] sm:$0xff]
        %v1815 = vld [vmem:[%s1802 + $0x60] sm:$0xff]
        %v1816 = vld [vmem:[%s1802 + $0x68] sm:$0xff]
        %v1817 = vld [vmem:[%s1802 + $0x70] sm:$0xff]
        %v1818 = vld [vmem:[%s1802 + $0x78] sm:$0xff]
        %s1819 = scalar_lea.vmem %s8, 2
        %v1820 = vld [vmem:[%s1819] sm:$0x1]
        %v1822 = vlaneseq
        %v1823 = vshrl.u32 %v1822, 7
        %v1824 = vsub.s32 0, %v1823
        %v1825 = vrot.slane %v1820, %v1824
        %1827 = vmatprep.subr.mxu0 0.0
        %1828 = vmatpush1.msra.mxu0 %v1803
        %1829 = vmatprep.subr.mxu0 0.0
        %1830 = vmatpush1.msra.mxu0 %v1804
        %1831 = vmatprep.subr.mxu0 0.0
        %1832 = vmatpush1.msra.mxu0 %v1805
        %1833 = vmatprep.subr.mxu0 0.0
        %1834 = vmatpush1.msra.mxu0 %v1806
        %1835 = vmatprep.subr.mxu0 0.0
        %1836 = vmatpush1.msra.mxu0 %v1807
        %1837 = vmatprep.subr.mxu0 0.0
        %1838 = vmatpush1.msra.mxu0 %v1808
        %1839 = vmatprep.subr.mxu0 0.0
        %1840 = vmatpush1.msra.mxu0 %v1809
        %1841 = vmatprep.subr.mxu0 0.0
        %1842 = vmatpush1.msra.mxu0 %v1810
        %1843 = vmatprep.subr.mxu0 0.0
        %1844 = vmatpush1.msra.mxu0 %v1811
        %1845 = vmatprep.subr.mxu0 0.0
        %1846 = vmatpush1.msra.mxu0 %v1812
        %1847 = vmatprep.subr.mxu0 0.0
        %1848 = vmatpush1.msra.mxu0 %v1813
        %1849 = vmatprep.subr.mxu0 0.0
        %1850 = vmatpush1.msra.mxu0 %v1814
        %1851 = vmatprep.subr.mxu0 0.0
        %1852 = vmatpush1.msra.mxu0 %v1815
        %1853 = vmatprep.subr.mxu0 0.0
        %1854 = vmatpush1.msra.mxu0 %v1816
        %1855 = vmatprep.subr.mxu0 0.0
        %1856 = vmatpush1.msra.mxu0 %v1817
        %1857 = vmatprep.subr.mxu0 0.0
        %1858 = vmatpush1.msra.mxu0 %v1818
        %1859 = vmatprep.subr.mxu0 0.0
        %1860 = vmatpush1.msra.mxu0 0.0
        %1861 = vmatprep.subr.mxu0 0.0
        %1862 = vmatpush1.msra.mxu0 0.0
        %1863 = vmatprep.subr.mxu0 0.0
        %1864 = vmatpush1.msra.mxu0 0.0
        %1865 = vmatprep.subr.mxu0 0.0
        %1866 = vmatpush1.msra.mxu0 0.0
        %1867 = vmatprep.subr.mxu0 0.0
        %1868 = vmatpush1.msra.mxu0 0.0
        %1869 = vmatprep.subr.mxu0 0.0
        %1870 = vmatpush1.msra.mxu0 0.0
        %1871 = vmatprep.subr.mxu0 0.0
        %1872 = vmatpush1.msra.mxu0 0.0
        %1873 = vmatprep.subr.mxu0 0.0
        %1874 = vmatpush1.msra.mxu0 0.0
        %1875 = vmatprep.subr.mxu0 0.0
        %1876 = vmatpush1.msra.mxu0 0.0
        %1877 = vmatprep.subr.mxu0 0.0
        %1878 = vmatpush1.msra.mxu0 0.0
        %1879 = vmatprep.subr.mxu0 0.0
        %1880 = vmatpush1.msra.mxu0 0.0
        %1881 = vmatprep.subr.mxu0 0.0
        %1882 = vmatpush1.msra.mxu0 0.0
        %1883 = vmatprep.subr.mxu0 0.0
        %1884 = vmatpush1.msra.mxu0 0.0
        %1885 = vmatprep.subr.mxu0 0.0
        %1886 = vmatpush1.msra.mxu0 0.0
        %1887 = vmatprep.subr.mxu0 0.0
        %1888 = vmatpush1.msra.mxu0 0.0
        %1889 = vmatprep.subr.mxu0 0.0
        %1890 = vmatpush1.msra.mxu0 0.0
        %1891 = vmatprep.mubr.f32.mxu0 0.0
        %1892 = vmatmul.mubr.f32.gmra.mrb[0].mxu0 %v572
        %v1893 = vpop.f32.mrb[0].mxu0
        %v1894 = vadd.f32 %v1825, %v1893
        %v1895 = vpop.f32.mrb[0].mxu0
        %1896 = vdwg.mxu0
        %v1898 = vsel %vm852, %v1704, 0
        %v1901 = vsel %vm852, %v1799, 0
        %1903 = vmatprep.subr.mxu0 0.0
        %1904 = vmatpush1.xpose.msra.mxu0 %v1901
        %1905 = vmatprep.subr.mxu0 0.0
        %1906 = vmatpush1.xpose.msra.mxu0 0.0
        %1907 = vmatprep.subr.mxu0 0.0
        %1908 = vmatpush1.xpose.msra.mxu0 0.0
        %1909 = vmatprep.subr.mxu0 0.0
        %1910 = vmatpush1.xpose.msra.mxu0 0.0
        %1911 = vmatprep.subr.mxu0 0.0
        %1912 = vmatpush1.xpose.msra.mxu0 0.0
        %1913 = vmatprep.subr.mxu0 0.0
        %1914 = vmatpush1.xpose.msra.mxu0 0.0
        %1915 = vmatprep.subr.mxu0 0.0
        %1916 = vmatpush1.xpose.msra.mxu0 0.0
        %1917 = vmatprep.subr.mxu0 0.0
        %1918 = vmatpush1.xpose.msra.mxu0 0.0
        %1919 = vmatprep.subr.mxu0 0.0
        %1920 = vmatpush1.xpose.msra.mxu0 0.0
        %1921 = vmatprep.subr.mxu0 0.0
        %1922 = vmatpush1.xpose.msra.mxu0 0.0
        %1923 = vmatprep.subr.mxu0 0.0
        %1924 = vmatpush1.xpose.msra.mxu0 0.0
        %1925 = vmatprep.subr.mxu0 0.0
        %1926 = vmatpush1.xpose.msra.mxu0 0.0
        %1927 = vmatprep.subr.mxu0 0.0
        %1928 = vmatpush1.xpose.msra.mxu0 0.0
        %1929 = vmatprep.subr.mxu0 0.0
        %1930 = vmatpush1.xpose.msra.mxu0 0.0
        %1931 = vmatprep.subr.mxu0 0.0
        %1932 = vmatpush1.xpose.msra.mxu0 0.0
        %1933 = vmatprep.subr.mxu0 0.0
        %1934 = vmatpush1.xpose.msra.mxu0 0.0
        %1935 = vmatprep.subr.mxu0 0.0
        %1936 = vmatpush1.xpose.msra.mxu0 0.0
        %1937 = vmatprep.subr.mxu0 0.0
        %1938 = vmatpush1.xpose.msra.mxu0 0.0
        %1939 = vmatprep.subr.mxu0 0.0
        %1940 = vmatpush1.xpose.msra.mxu0 0.0
        %1941 = vmatprep.subr.mxu0 0.0
        %1942 = vmatpush1.xpose.msra.mxu0 0.0
        %1943 = vmatprep.subr.mxu0 0.0
        %1944 = vmatpush1.xpose.msra.mxu0 0.0
        %1945 = vmatprep.subr.mxu0 0.0
        %1946 = vmatpush1.xpose.msra.mxu0 0.0
        %1947 = vmatprep.subr.mxu0 0.0
        %1948 = vmatpush1.xpose.msra.mxu0 0.0
        %1949 = vmatprep.subr.mxu0 0.0
        %1950 = vmatpush1.xpose.msra.mxu0 0.0
        %1951 = vmatprep.subr.mxu0 0.0
        %1952 = vmatpush1.xpose.msra.mxu0 0.0
        %1953 = vmatprep.subr.mxu0 0.0
        %1954 = vmatpush1.xpose.msra.mxu0 0.0
        %1955 = vmatprep.subr.mxu0 0.0
        %1956 = vmatpush1.xpose.msra.mxu0 0.0
        %1957 = vmatprep.subr.mxu0 0.0
        %1958 = vmatpush1.xpose.msra.mxu0 0.0
        %1959 = vmatprep.subr.mxu0 0.0
        %1960 = vmatpush1.xpose.msra.mxu0 0.0
        %1961 = vmatprep.subr.mxu0 0.0
        %1962 = vmatpush1.xpose.msra.mxu0 0.0
        %1963 = vmatprep.subr.mxu0 0.0
        %1964 = vmatpush1.xpose.msra.mxu0 0.0
        %1965 = vmatprep.subr.mxu0 0.0
        %1966 = vmatpush1.xpose.msra.mxu0 0.0
        %1967 = vmatprep.mubr.f32.mxu0 0.0
        %1968 = vmatmul.mubr.f32.gmra.mrb[0].mxu0 %v1898
        %v1969 = vpop.f32.mrb[0].mxu0
        %v1970 = vadd.f32 0.0, %v1969
        %v1971 = vpop.f32.mrb[0].mxu0
        %1972 = vdwg.mxu0
        %v1973 = vmul.f32 %v1970, 0.25
        %v1974 = vsel %vm930, %v1973, -inf
        %1975 = vmax.xlane.f32.xlu0 %v1974
        %v1976 = vpop.xlane.xlu0 %1975
        %v1977 = vsub.f32 %v1973, %v1976
        %v1978 = vmul.f32 %v1977, 1.442695
        %v1979 = vpow.pop %v1978
        %v1980 = vsel %vm930, %v1979, 0.0
        %1981 = vadd.xlane.f32.xlu0 %v1980
        %v1982 = vpop.xlane.xlu0 %1981
        %v1983 = vrcp.pop %v1982
        %v1984 = vmul.f32 %v1979, %v1983
        %v1986 = vsel %vm930, %v1984, 0
        %1988 = vmatprep.subr.mxu0 0.0
        %1989 = vmatpush1.msra.mxu0 %v1894
        %1990 = vmatprep.subr.mxu0 0.0
        %1991 = vmatpush1.msra.mxu0 0.0
        %1992 = vmatprep.subr.mxu0 0.0
        %1993 = vmatpush1.msra.mxu0 0.0
        %1994 = vmatprep.subr.mxu0 0.0
        %1995 = vmatpush1.msra.mxu0 0.0
        %1996 = vmatprep.subr.mxu0 0.0
        %1997 = vmatpush1.msra.mxu0 0.0
        %1998 = vmatprep.subr.mxu0 0.0
        %1999 = vmatpush1.msra.mxu0 0.0
        %2000 = vmatprep.subr.mxu0 0.0
        %2001 = vmatpush1.msra.mxu0 0.0
        %2002 = vmatprep.subr.mxu0 0.0
        %2003 = vmatpush1.msra.mxu0 0.0
        %2004 = vmatprep.subr.mxu0 0.0
        %2005 = vmatpush1.msra.mxu0 0.0
        %2006 = vmatprep.subr.mxu0 0.0
        %2007 = vmatpush1.msra.mxu0 0.0
        %2008 = vmatprep.subr.mxu0 0.0
        %2009 = vmatpush1.msra.mxu0 0.0
        %2010 = vmatprep.subr.mxu0 0.0
        %2011 = vmatpush1.msra.mxu0 0.0
        %2012 = vmatprep.subr.mxu0 0.0
        %2013 = vmatpush1.msra.mxu0 0.0
        %2014 = vmatprep.subr.mxu0 0.0
        %2015 = vmatpush1.msra.mxu0 0.0
        %2016 = vmatprep.subr.mxu0 0.0
        %2017 = vmatpush1.msra.mxu0 0.0
        %2018 = vmatprep.subr.mxu0 0.0
        %2019 = vmatpush1.msra.mxu0 0.0
        %2020 = vmatprep.subr.mxu0 0.0
        %2021 = vmatpush1.msra.mxu0 0.0
        %2022 = vmatprep.subr.mxu0 0.0
        %2023 = vmatpush1.msra.mxu0 0.0
        %2024 = vmatprep.subr.mxu0 0.0
        %2025 = vmatpush1.msra.mxu0 0.0
        %2026 = vmatprep.subr.mxu0 0.0
        %2027 = vmatpush1.msra.mxu0 0.0
        %2028 = vmatprep.subr.mxu0 0.0
        %2029 = vmatpush1.msra.mxu0 0.0
        %2030 = vmatprep.subr.mxu0 0.0
        %2031 = vmatpush1.msra.mxu0 0.0
        %2032 = vmatprep.subr.mxu0 0.0
        %2033 = vmatpush1.msra.mxu0 0.0
        %2034 = vmatprep.subr.mxu0 0.0
        %2035 = vmatpush1.msra.mxu0 0.0
        %2036 = vmatprep.subr.mxu0 0.0
        %2037 = vmatpush1.msra.mxu0 0.0
        %2038 = vmatprep.subr.mxu0 0.0
        %2039 = vmatpush1.msra.mxu0 0.0
        %2040 = vmatprep.subr.mxu0 0.0
        %2041 = vmatpush1.msra.mxu0 0.0
        %2042 = vmatprep.subr.mxu0 0.0
        %2043 = vmatpush1.msra.mxu0 0.0
        %2044 = vmatprep.subr.mxu0 0.0
        %2045 = vmatpush1.msra.mxu0 0.0
        %2046 = vmatprep.subr.mxu0 0.0
        %2047 = vmatpush1.msra.mxu0 0.0
        %2048 = vmatprep.subr.mxu0 0.0
        %2049 = vmatpush1.msra.mxu0 0.0
        %2050 = vmatprep.subr.mxu0 0.0
        %2051 = vmatpush1.msra.mxu0 0.0
        %2052 = vmatprep.mubr.f32.mxu0 0.0
        %2053 = vmatmul.mubr.f32.gmra.mrb[0].mxu0 %v1986
        %v2054 = vpop.f32.mrb[0].mxu0
        %v2055 = vadd.f32 0.0, %v2054
        %v2056 = vpop.f32.mrb[0].mxu0
        %2057 = vdwg.mxu0
        %s2058 = scalar_lea.vmem %s9, 32
        %v2059 = vld [vmem:[%s2058] sm:$0xff]
        %v2060 = vld [vmem:[%s2058 + $0x8] sm:$0xff]
        %v2062 = vsel %vm852, %v2055, 0
        %2064 = vmatprep.subr.mxu0 0.0
        %2065 = vmatpush1.msra.mxu0 %v2059
        %2066 = vmatprep.subr.mxu0 0.0
        %2067 = vmatpush1.msra.mxu0 %v2060
        %2068 = vmatprep.subr.mxu0 0.0
        %2069 = vmatpush1.msra.mxu0 0.0
        %2070 = vmatprep.subr.mxu0 0.0
        %2071 = vmatpush1.msra.mxu0 0.0
        %2072 = vmatprep.subr.mxu0 0.0
        %2073 = vmatpush1.msra.mxu0 0.0
        %2074 = vmatprep.subr.mxu0 0.0
        %2075 = vmatpush1.msra.mxu0 0.0
        %2076 = vmatprep.subr.mxu0 0.0
        %2077 = vmatpush1.msra.mxu0 0.0
        %2078 = vmatprep.subr.mxu0 0.0
        %2079 = vmatpush1.msra.mxu0 0.0
        %2080 = vmatprep.subr.mxu0 0.0
        %2081 = vmatpush1.msra.mxu0 0.0
        %2082 = vmatprep.subr.mxu0 0.0
        %2083 = vmatpush1.msra.mxu0 0.0
        %2084 = vmatprep.subr.mxu0 0.0
        %2085 = vmatpush1.msra.mxu0 0.0
        %2086 = vmatprep.subr.mxu0 0.0
        %2087 = vmatpush1.msra.mxu0 0.0
        %2088 = vmatprep.subr.mxu0 0.0
        %2089 = vmatpush1.msra.mxu0 0.0
        %2090 = vmatprep.subr.mxu0 0.0
        %2091 = vmatpush1.msra.mxu0 0.0
        %2092 = vmatprep.subr.mxu0 0.0
        %2093 = vmatpush1.msra.mxu0 0.0
        %2094 = vmatprep.subr.mxu0 0.0
        %2095 = vmatpush1.msra.mxu0 0.0
        %2096 = vmatprep.subr.mxu0 0.0
        %2097 = vmatpush1.msra.mxu0 0.0
        %2098 = vmatprep.subr.mxu0 0.0
        %2099 = vmatpush1.msra.mxu0 0.0
        %2100 = vmatprep.subr.mxu0 0.0
        %2101 = vmatpush1.msra.mxu0 0.0
        %2102 = vmatprep.subr.mxu0 0.0
        %2103 = vmatpush1.msra.mxu0 0.0
        %2104 = vmatprep.subr.mxu0 0.0
        %2105 = vmatpush1.msra.mxu0 0.0
        %2106 = vmatprep.subr.mxu0 0.0
        %2107 = vmatpush1.msra.mxu0 0.0
        %2108 = vmatprep.subr.mxu0 0.0
        %2109 = vmatpush1.msra.mxu0 0.0
        %2110 = vmatprep.subr.mxu0 0.0
        %2111 = vmatpush1.msra.mxu0 0.0
        %2112 = vmatprep.subr.mxu0 0.0
        %2113 = vmatpush1.msra.mxu0 0.0
        %2114 = vmatprep.subr.mxu0 0.0
        %2115 = vmatpush1.msra.mxu0 0.0
        %2116 = vmatprep.subr.mxu0 0.0
        %2117 = vmatpush1.msra.mxu0 0.0
        %2118 = vmatprep.subr.mxu0 0.0
        %2119 = vmatpush1.msra.mxu0 0.0
        %2120 = vmatprep.subr.mxu0 0.0
        %2121 = vmatpush1.msra.mxu0 0.0
        %2122 = vmatprep.subr.mxu0 0.0
        %2123 = vmatpush1.msra.mxu0 0.0
        %2124 = vmatprep.subr.mxu0 0.0
        %2125 = vmatpush1.msra.mxu0 0.0
        %2126 = vmatprep.subr.mxu0 0.0
        %2127 = vmatpush1.msra.mxu0 0.0
        %2128 = vmatprep.mubr.f32.mxu0 0.0
        %2129 = vmatmul.mubr.f32.gmra.mrb[0].mxu0 %v2062
        %v2130 = vpop.f32.mrb[0].mxu0
        %v2131 = vadd.f32 0.0, %v2130
        %v2132 = vpop.f32.mrb[0].mxu0
        %2133 = vdwg.mxu0
        %v2134 = vadd.f32 %v1609, %v2131
        %s2135 = scalar_lea.vmem %s3, 384
        %v2136 = vld [vmem:[%s2135] sm:$0xff]
        %v2137 = vld [vmem:[%s2135 + $0x8] sm:$0xff]
        %v2138 = vld [vmem:[%s2135 + $0x10] sm:$0xff]
        %v2139 = vld [vmem:[%s2135 + $0x18] sm:$0xff]
        %v2140 = vld [vmem:[%s2135 + $0x20] sm:$0xff]
        %v2141 = vld [vmem:[%s2135 + $0x28] sm:$0xff]
        %v2142 = vld [vmem:[%s2135 + $0x30] sm:$0xff]
        %v2143 = vld [vmem:[%s2135 + $0x38] sm:$0xff]
        %v2144 = vld [vmem:[%s2135 + $0x40] sm:$0xff]
        %v2145 = vld [vmem:[%s2135 + $0x48] sm:$0xff]
        %v2146 = vld [vmem:[%s2135 + $0x50] sm:$0xff]
        %v2147 = vld [vmem:[%s2135 + $0x58] sm:$0xff]
        %v2148 = vld [vmem:[%s2135 + $0x60] sm:$0xff]
        %v2149 = vld [vmem:[%s2135 + $0x68] sm:$0xff]
        %v2150 = vld [vmem:[%s2135 + $0x70] sm:$0xff]
        %v2151 = vld [vmem:[%s2135 + $0x78] sm:$0xff]
        %s2152 = scalar_lea.vmem %s4, 3
        %v2153 = vld [vmem:[%s2152] sm:$0x1]
        %v2155 = vlaneseq
        %v2156 = vshrl.u32 %v2155, 7
        %v2157 = vsub.s32 0, %v2156
        %v2158 = vrot.slane %v2153, %v2157
        %2160 = vmatprep.subr.mxu0 0.0
        %2161 = vmatpush1.msra.mxu0 %v2136
        %2162 = vmatprep.subr.mxu0 0.0
        %2163 = vmatpush1.msra.mxu0 %v2137
        %2164 = vmatprep.subr.mxu0 0.0
        %2165 = vmatpush1.msra.mxu0 %v2138
        %2166 = vmatprep.subr.mxu0 0.0
        %2167 = vmatpush1.msra.mxu0 %v2139
        %2168 = vmatprep.subr.mxu0 0.0
        %2169 = vmatpush1.msra.mxu0 %v2140
        %2170 = vmatprep.subr.mxu0 0.0
        %2171 = vmatpush1.msra.mxu0 %v2141
        %2172 = vmatprep.subr.mxu0 0.0
        %2173 = vmatpush1.msra.mxu0 %v2142
        %2174 = vmatprep.subr.mxu0 0.0
        %2175 = vmatpush1.msra.mxu0 %v2143
        %2176 = vmatprep.subr.mxu0 0.0
        %2177 = vmatpush1.msra.mxu0 %v2144
        %2178 = vmatprep.subr.mxu0 0.0
        %2179 = vmatpush1.msra.mxu0 %v2145
        %2180 = vmatprep.subr.mxu0 0.0
        %2181 = vmatpush1.msra.mxu0 %v2146
        %2182 = vmatprep.subr.mxu0 0.0
        %2183 = vmatpush1.msra.mxu0 %v2147
        %2184 = vmatprep.subr.mxu0 0.0
        %2185 = vmatpush1.msra.mxu0 %v2148
        %2186 = vmatprep.subr.mxu0 0.0
        %2187 = vmatpush1.msra.mxu0 %v2149
        %2188 = vmatprep.subr.mxu0 0.0
        %2189 = vmatpush1.msra.mxu0 %v2150
        %2190 = vmatprep.subr.mxu0 0.0
        %2191 = vmatpush1.msra.mxu0 %v2151
        %2192 = vmatprep.subr.mxu0 0.0
        %2193 = vmatpush1.msra.mxu0 0.0
        %2194 = vmatprep.subr.mxu0 0.0
        %2195 = vmatpush1.msra.mxu0 0.0
        %2196 = vmatprep.subr.mxu0 0.0
        %2197 = vmatpush1.msra.mxu0 0.0
        %2198 = vmatprep.subr.mxu0 0.0
        %2199 = vmatpush1.msra.mxu0 0.0
        %2200 = vmatprep.subr.mxu0 0.0
        %2201 = vmatpush1.msra.mxu0 0.0
        %2202 = vmatprep.subr.mxu0 0.0
        %2203 = vmatpush1.msra.mxu0 0.0
        %2204 = vmatprep.subr.mxu0 0.0
        %2205 = vmatpush1.msra.mxu0 0.0
        %2206 = vmatprep.subr.mxu0 0.0
        %2207 = vmatpush1.msra.mxu0 0.0
        %2208 = vmatprep.subr.mxu0 0.0
        %2209 = vmatpush1.msra.mxu0 0.0
        %2210 = vmatprep.subr.mxu0 0.0
        %2211 = vmatpush1.msra.mxu0 0.0
        %2212 = vmatprep.subr.mxu0 0.0
        %2213 = vmatpush1.msra.mxu0 0.0
        %2214 = vmatprep.subr.mxu0 0.0
        %2215 = vmatpush1.msra.mxu0 0.0
        %2216 = vmatprep.subr.mxu0 0.0
        %2217 = vmatpush1.msra.mxu0 0.0
        %2218 = vmatprep.subr.mxu0 0.0
        %2219 = vmatpush1.msra.mxu0 0.0
        %2220 = vmatprep.subr.mxu0 0.0
        %2221 = vmatpush1.msra.mxu0 0.0
        %2222 = vmatprep.subr.mxu0 0.0
        %2223 = vmatpush1.msra.mxu0 0.0
        %2224 = vmatprep.mubr.f32.mxu0 0.0
        %2225 = vmatmul.mubr.f32.gmra.mrb[0].mxu0 %v572
        %v2226 = vpop.f32.mrb[0].mxu0
        %v2227 = vadd.f32 %v2158, %v2226
        %v2228 = vpop.f32.mrb[0].mxu0
        %2229 = vdwg.mxu0
        %s2230 = scalar_lea.vmem %s5, 384
        %v2231 = vld [vmem:[%s2230] sm:$0xff]
        %v2232 = vld [vmem:[%s2230 + $0x8] sm:$0xff]
        %v2233 = vld [vmem:[%s2230 + $0x10] sm:$0xff]
        %v2234 = vld [vmem:[%s2230 + $0x18] sm:$0xff]
        %v2235 = vld [vmem:[%s2230 + $0x20] sm:$0xff]
        %v2236 = vld [vmem:[%s2230 + $0x28] sm:$0xff]
        %v2237 = vld [vmem:[%s2230 + $0x30] sm:$0xff]
        %v2238 = vld [vmem:[%s2230 + $0x38] sm:$0xff]
        %v2239 = vld [vmem:[%s2230 + $0x40] sm:$0xff]
        %v2240 = vld [vmem:[%s2230 + $0x48] sm:$0xff]
        %v2241 = vld [vmem:[%s2230 + $0x50] sm:$0xff]
        %v2242 = vld [vmem:[%s2230 + $0x58] sm:$0xff]
        %v2243 = vld [vmem:[%s2230 + $0x60] sm:$0xff]
        %v2244 = vld [vmem:[%s2230 + $0x68] sm:$0xff]
        %v2245 = vld [vmem:[%s2230 + $0x70] sm:$0xff]
        %v2246 = vld [vmem:[%s2230 + $0x78] sm:$0xff]
        %s2247 = scalar_lea.vmem %s6, 3
        %v2248 = vld [vmem:[%s2247] sm:$0x1]
        %v2250 = vlaneseq
        %v2251 = vshrl.u32 %v2250, 7
        %v2252 = vsub.s32 0, %v2251
        %v2253 = vrot.slane %v2248, %v2252
        %2255 = vmatprep.subr.mxu0 0.0
        %2256 = vmatpush1.msra.mxu0 %v2231
        %2257 = vmatprep.subr.mxu0 0.0
        %2258 = vmatpush1.msra.mxu0 %v2232
        %2259 = vmatprep.subr.mxu0 0.0
        %2260 = vmatpush1.msra.mxu0 %v2233
        %2261 = vmatprep.subr.mxu0 0.0
        %2262 = vmatpush1.msra.mxu0 %v2234
        %2263 = vmatprep.subr.mxu0 0.0
        %2264 = vmatpush1.msra.mxu0 %v2235
        %2265 = vmatprep.subr.mxu0 0.0
        %2266 = vmatpush1.msra.mxu0 %v2236
        %2267 = vmatprep.subr.mxu0 0.0
        %2268 = vmatpush1.msra.mxu0 %v2237
        %2269 = vmatprep.subr.mxu0 0.0
        %2270 = vmatpush1.msra.mxu0 %v2238
        %2271 = vmatprep.subr.mxu0 0.0
        %2272 = vmatpush1.msra.mxu0 %v2239
        %2273 = vmatprep.subr.mxu0 0.0
        %2274 = vmatpush1.msra.mxu0 %v2240
        %2275 = vmatprep.subr.mxu0 0.0
        %2276 = vmatpush1.msra.mxu0 %v2241
        %2277 = vmatprep.subr.mxu0 0.0
        %2278 = vmatpush1.msra.mxu0 %v2242
        %2279 = vmatprep.subr.mxu0 0.0
        %2280 = vmatpush1.msra.mxu0 %v2243
        %2281 = vmatprep.subr.mxu0 0.0
        %2282 = vmatpush1.msra.mxu0 %v2244
        %2283 = vmatprep.subr.mxu0 0.0
        %2284 = vmatpush1.msra.mxu0 %v2245
        %2285 = vmatprep.subr.mxu0 0.0
        %2286 = vmatpush1.msra.mxu0 %v2246
        %2287 = vmatprep.subr.mxu0 0.0
        %2288 = vmatpush1.msra.mxu0 0.0
        %2289 = vmatprep.subr.mxu0 0.0
        %2290 = vmatpush1.msra.mxu0 0.0
        %2291 = vmatprep.subr.mxu0 0.0
        %2292 = vmatpush1.msra.mxu0 0.0
        %2293 = vmatprep.subr.mxu0 0.0
        %2294 = vmatpush1.msra.mxu0 0.0
        %2295 = vmatprep.subr.mxu0 0.0
        %2296 = vmatpush1.msra.mxu0 0.0
        %2297 = vmatprep.subr.mxu0 0.0
        %2298 = vmatpush1.msra.mxu0 0.0
        %2299 = vmatprep.subr.mxu0 0.0
        %2300 = vmatpush1.msra.mxu0 0.0
        %2301 = vmatprep.subr.mxu0 0.0
        %2302 = vmatpush1.msra.mxu0 0.0
        %2303 = vmatprep.subr.mxu0 0.0
        %2304 = vmatpush1.msra.mxu0 0.0
        %2305 = vmatprep.subr.mxu0 0.0
        %2306 = vmatpush1.msra.mxu0 0.0
        %2307 = vmatprep.subr.mxu0 0.0
        %2308 = vmatpush1.msra.mxu0 0.0
        %2309 = vmatprep.subr.mxu0 0.0
        %2310 = vmatpush1.msra.mxu0 0.0
        %2311 = vmatprep.subr.mxu0 0.0
        %2312 = vmatpush1.msra.mxu0 0.0
        %2313 = vmatprep.subr.mxu0 0.0
        %2314 = vmatpush1.msra.mxu0 0.0
        %2315 = vmatprep.subr.mxu0 0.0
        %2316 = vmatpush1.msra.mxu0 0.0
        %2317 = vmatprep.subr.mxu0 0.0
        %2318 = vmatpush1.msra.mxu0 0.0
        %2319 = vmatprep.mubr.f32.mxu0 0.0
        %2320 = vmatmul.mubr.f32.gmra.mrb[0].mxu0 %v572
        %v2321 = vpop.f32.mrb[0].mxu0
        %v2322 = vadd.f32 %v2253, %v2321
        %v2323 = vpop.f32.mrb[0].mxu0
        %2324 = vdwg.mxu0
        %s2325 = scalar_lea.vmem %s7, 384
        %v2326 = vld [vmem:[%s2325] sm:$0xff]
        %v2327 = vld [vmem:[%s2325 + $0x8] sm:$0xff]
        %v2328 = vld [vmem:[%s2325 + $0x10] sm:$0xff]
        %v2329 = vld [vmem:[%s2325 + $0x18] sm:$0xff]
        %v2330 = vld [vmem:[%s2325 + $0x20] sm:$0xff]
        %v2331 = vld [vmem:[%s2325 + $0x28] sm:$0xff]
        %v2332 = vld [vmem:[%s2325 + $0x30] sm:$0xff]
        %v2333 = vld [vmem:[%s2325 + $0x38] sm:$0xff]
        %v2334 = vld [vmem:[%s2325 + $0x40] sm:$0xff]
        %v2335 = vld [vmem:[%s2325 + $0x48] sm:$0xff]
        %v2336 = vld [vmem:[%s2325 + $0x50] sm:$0xff]
        %v2337 = vld [vmem:[%s2325 + $0x58] sm:$0xff]
        %v2338 = vld [vmem:[%s2325 + $0x60] sm:$0xff]
        %v2339 = vld [vmem:[%s2325 + $0x68] sm:$0xff]
        %v2340 = vld [vmem:[%s2325 + $0x70] sm:$0xff]
        %v2341 = vld [vmem:[%s2325 + $0x78] sm:$0xff]
        %s2342 = scalar_lea.vmem %s8, 3
        %v2343 = vld [vmem:[%s2342] sm:$0x1]
        %v2345 = vlaneseq
        %v2346 = vshrl.u32 %v2345, 7
        %v2347 = vsub.s32 0, %v2346
        %v2348 = vrot.slane %v2343, %v2347
        %2350 = vmatprep.subr.mxu0 0.0
        %2351 = vmatpush1.msra.mxu0 %v2326
        %2352 = vmatprep.subr.mxu0 0.0
        %2353 = vmatpush1.msra.mxu0 %v2327
        %2354 = vmatprep.subr.mxu0 0.0
        %2355 = vmatpush1.msra.mxu0 %v2328
        %2356 = vmatprep.subr.mxu0 0.0
        %2357 = vmatpush1.msra.mxu0 %v2329
        %2358 = vmatprep.subr.mxu0 0.0
        %2359 = vmatpush1.msra.mxu0 %v2330
        %2360 = vmatprep.subr.mxu0 0.0
        %2361 = vmatpush1.msra.mxu0 %v2331
        %2362 = vmatprep.subr.mxu0 0.0
        %2363 = vmatpush1.msra.mxu0 %v2332
        %2364 = vmatprep.subr.mxu0 0.0
        %2365 = vmatpush1.msra.mxu0 %v2333
        %2366 = vmatprep.subr.mxu0 0.0
        %2367 = vmatpush1.msra.mxu0 %v2334
        %2368 = vmatprep.subr.mxu0 0.0
        %2369 = vmatpush1.msra.mxu0 %v2335
        %2370 = vmatprep.subr.mxu0 0.0
        %2371 = vmatpush1.msra.mxu0 %v2336
        %2372 = vmatprep.subr.mxu0 0.0
        %2373 = vmatpush1.msra.mxu0 %v2337
        %2374 = vmatprep.subr.mxu0 0.0
        %2375 = vmatpush1.msra.mxu0 %v2338
        %2376 = vmatprep.subr.mxu0 0.0
        %2377 = vmatpush1.msra.mxu0 %v2339
        %2378 = vmatprep.subr.mxu0 0.0
        %2379 = vmatpush1.msra.mxu0 %v2340
        %2380 = vmatprep.subr.mxu0 0.0
        %2381 = vmatpush1.msra.mxu0 %v2341
        %2382 = vmatprep.subr.mxu0 0.0
        %2383 = vmatpush1.msra.mxu0 0.0
        %2384 = vmatprep.subr.mxu0 0.0
        %2385 = vmatpush1.msra.mxu0 0.0
        %2386 = vmatprep.subr.mxu0 0.0
        %2387 = vmatpush1.msra.mxu0 0.0
        %2388 = vmatprep.subr.mxu0 0.0
        %2389 = vmatpush1.msra.mxu0 0.0
        %2390 = vmatprep.subr.mxu0 0.0
        %2391 = vmatpush1.msra.mxu0 0.0
        %2392 = vmatprep.subr.mxu0 0.0
        %2393 = vmatpush1.msra.mxu0 0.0
        %2394 = vmatprep.subr.mxu0 0.0
        %2395 = vmatpush1.msra.mxu0 0.0
        %2396 = vmatprep.subr.mxu0 0.0
        %2397 = vmatpush1.msra.mxu0 0.0
        %2398 = vmatprep.subr.mxu0 0.0
        %2399 = vmatpush1.msra.mxu0 0.0
        %2400 = vmatprep.subr.mxu0 0.0
        %2401 = vmatpush1.msra.mxu0 0.0
        %2402 = vmatprep.subr.mxu0 0.0
        %2403 = vmatpush1.msra.mxu0 0.0
        %2404 = vmatprep.subr.mxu0 0.0
        %2405 = vmatpush1.msra.mxu0 0.0
        %2406 = vmatprep.subr.mxu0 0.0
        %2407 = vmatpush1.msra.mxu0 0.0
        %2408 = vmatprep.subr.mxu0 0.0
        %2409 = vmatpush1.msra.mxu0 0.0
        %2410 = vmatprep.subr.mxu0 0.0
        %2411 = vmatpush1.msra.mxu0 0.0
        %2412 = vmatprep.subr.mxu0 0.0
        %2413 = vmatpush1.msra.mxu0 0.0
        %2414 = vmatprep.mubr.f32.mxu0 0.0
        %2415 = vmatmul.mubr.f32.gmra.mrb[0].mxu0 %v572
        %v2416 = vpop.f32.mrb[0].mxu0
        %v2417 = vadd.f32 %v2348, %v2416
        %v2418 = vpop.f32.mrb[0].mxu0
        %2419 = vdwg.mxu0
        %v2421 = vsel %vm852, %v2227, 0
        %v2424 = vsel %vm852, %v2322, 0
        %2426 = vmatprep.subr.mxu0 0.0
        %2427 = vmatpush1.xpose.msra.mxu0 %v2424
        %2428 = vmatprep.subr.mxu0 0.0
        %2429 = vmatpush1.xpose.msra.mxu0 0.0
        %2430 = vmatprep.subr.mxu0 0.0
        %2431 = vmatpush1.xpose.msra.mxu0 0.0
        %2432 = vmatprep.subr.mxu0 0.0
        %2433 = vmatpush1.xpose.msra.mxu0 0.0
        %2434 = vmatprep.subr.mxu0 0.0
        %2435 = vmatpush1.xpose.msra.mxu0 0.0
        %2436 = vmatprep.subr.mxu0 0.0
        %2437 = vmatpush1.xpose.msra.mxu0 0.0
        %2438 = vmatprep.subr.mxu0 0.0
        %2439 = vmatpush1.xpose.msra.mxu0 0.0
        %2440 = vmatprep.subr.mxu0 0.0
        %2441 = vmatpush1.xpose.msra.mxu0 0.0
        %2442 = vmatprep.subr.mxu0 0.0
        %2443 = vmatpush1.xpose.msra.mxu0 0.0
        %2444 = vmatprep.subr.mxu0 0.0
        %2445 = vmatpush1.xpose.msra.mxu0 0.0
        %2446 = vmatprep.subr.mxu0 0.0
        %2447 = vmatpush1.xpose.msra.mxu0 0.0
        %2448 = vmatprep.subr.mxu0 0.0
        %2449 = vmatpush1.xpose.msra.mxu0 0.0
        %2450 = vmatprep.subr.mxu0 0.0
        %2451 = vmatpush1.xpose.msra.mxu0 0.0
        %2452 = vmatprep.subr.mxu0 0.0
        %2453 = vmatpush1.xpose.msra.mxu0 0.0
        %2454 = vmatprep.subr.mxu0 0.0
        %2455 = vmatpush1.xpose.msra.mxu0 0.0
        %2456 = vmatprep.subr.mxu0 0.0
        %2457 = vmatpush1.xpose.msra.mxu0 0.0
        %2458 = vmatprep.subr.mxu0 0.0
        %2459 = vmatpush1.xpose.msra.mxu0 0.0
        %2460 = vmatprep.subr.mxu0 0.0
        %2461 = vmatpush1.xpose.msra.mxu0 0.0
        %2462 = vmatprep.subr.mxu0 0.0
        %2463 = vmatpush1.xpose.msra.mxu0 0.0
        %2464 = vmatprep.subr.mxu0 0.0
        %2465 = vmatpush1.xpose.msra.mxu0 0.0
        %2466 = vmatprep.subr.mxu0 0.0
        %2467 = vmatpush1.xpose.msra.mxu0 0.0
        %2468 = vmatprep.subr.mxu0 0.0
        %2469 = vmatpush1.xpose.msra.mxu0 0.0
        %2470 = vmatprep.subr.mxu0 0.0
        %2471 = vmatpush1.xpose.msra.mxu0 0.0
        %2472 = vmatprep.subr.mxu0 0.0
        %2473 = vmatpush1.xpose.msra.mxu0 0.0
        %2474 = vmatprep.subr.mxu0 0.0
        %2475 = vmatpush1.xpose.msra.mxu0 0.0
        %2476 = vmatprep.subr.mxu0 0.0
        %2477 = vmatpush1.xpose.msra.mxu0 0.0
        %2478 = vmatprep.subr.mxu0 0.0
        %2479 = vmatpush1.xpose.msra.mxu0 0.0
        %2480 = vmatprep.subr.mxu0 0.0
        %2481 = vmatpush1.xpose.msra.mxu0 0.0
        %2482 = vmatprep.subr.mxu0 0.0
        %2483 = vmatpush1.xpose.msra.mxu0 0.0
        %2484 = vmatprep.subr.mxu0 0.0
        %2485 = vmatpush1.xpose.msra.mxu0 0.0
        %2486 = vmatprep.subr.mxu0 0.0
        %2487 = vmatpush1.xpose.msra.mxu0 0.0
        %2488 = vmatprep.subr.mxu0 0.0
        %2489 = vmatpush1.xpose.msra.mxu0 0.0
        %2490 = vmatprep.mubr.f32.mxu0 0.0
        %2491 = vmatmul.mubr.f32.gmra.mrb[0].mxu0 %v2421
        %v2492 = vpop.f32.mrb[0].mxu0
        %v2493 = vadd.f32 0.0, %v2492
        %v2494 = vpop.f32.mrb[0].mxu0
        %2495 = vdwg.mxu0
        %v2496 = vmul.f32 %v2493, 0.25
        %v2497 = vsel %vm930, %v2496, -inf
        %2498 = vmax.xlane.f32.xlu0 %v2497
        %v2499 = vpop.xlane.xlu0 %2498
        %v2500 = vsub.f32 %v2496, %v2499
        %v2501 = vmul.f32 %v2500, 1.442695
        %v2502 = vpow.pop %v2501
        %v2503 = vsel %vm930, %v2502, 0.0
        %2504 = vadd.xlane.f32.xlu0 %v2503
        %v2505 = vpop.xlane.xlu0 %2504
        %v2506 = vrcp.pop %v2505
        %v2507 = vmul.f32 %v2502, %v2506
        %v2509 = vsel %vm930, %v2507, 0
        %2511 = vmatprep.subr.mxu0 0.0
        %2512 = vmatpush1.msra.mxu0 %v2417
        %2513 = vmatprep.subr.mxu0 0.0
        %2514 = vmatpush1.msra.mxu0 0.0
        %2515 = vmatprep.subr.mxu0 0.0
        %2516 = vmatpush1.msra.mxu0 0.0
        %2517 = vmatprep.subr.mxu0 0.0
        %2518 = vmatpush1.msra.mxu0 0.0
        %2519 = vmatprep.subr.mxu0 0.0
        %2520 = vmatpush1.msra.mxu0 0.0
        %2521 = vmatprep.subr.mxu0 0.0
        %2522 = vmatpush1.msra.mxu0 0.0
        %2523 = vmatprep.subr.mxu0 0.0
        %2524 = vmatpush1.msra.mxu0 0.0
        %2525 = vmatprep.subr.mxu0 0.0
        %2526 = vmatpush1.msra.mxu0 0.0
        %2527 = vmatprep.subr.mxu0 0.0
        %2528 = vmatpush1.msra.mxu0 0.0
        %2529 = vmatprep.subr.mxu0 0.0
        %2530 = vmatpush1.msra.mxu0 0.0
        %2531 = vmatprep.subr.mxu0 0.0
        %2532 = vmatpush1.msra.mxu0 0.0
        %2533 = vmatprep.subr.mxu0 0.0
        %2534 = vmatpush1.msra.mxu0 0.0
        %2535 = vmatprep.subr.mxu0 0.0
        %2536 = vmatpush1.msra.mxu0 0.0
        %2537 = vmatprep.subr.mxu0 0.0
        %2538 = vmatpush1.msra.mxu0 0.0
        %2539 = vmatprep.subr.mxu0 0.0
        %2540 = vmatpush1.msra.mxu0 0.0
        %2541 = vmatprep.subr.mxu0 0.0
        %2542 = vmatpush1.msra.mxu0 0.0
        %2543 = vmatprep.subr.mxu0 0.0
        %2544 = vmatpush1.msra.mxu0 0.0
        %2545 = vmatprep.subr.mxu0 0.0
        %2546 = vmatpush1.msra.mxu0 0.0
        %2547 = vmatprep.subr.mxu0 0.0
        %2548 = vmatpush1.msra.mxu0 0.0
        %2549 = vmatprep.subr.mxu0 0.0
        %2550 = vmatpush1.msra.mxu0 0.0
        %2551 = vmatprep.subr.mxu0 0.0
        %2552 = vmatpush1.msra.mxu0 0.0
        %2553 = vmatprep.subr.mxu0 0.0
        %2554 = vmatpush1.msra.mxu0 0.0
        %2555 = vmatprep.subr.mxu0 0.0
        %2556 = vmatpush1.msra.mxu0 0.0
        %2557 = vmatprep.subr.mxu0 0.0
        %2558 = vmatpush1.msra.mxu0 0.0
        %2559 = vmatprep.subr.mxu0 0.0
        %2560 = vmatpush1.msra.mxu0 0.0
        %2561 = vmatprep.subr.mxu0 0.0
        %2562 = vmatpush1.msra.mxu0 0.0
        %2563 = vmatprep.subr.mxu0 0.0
        %2564 = vmatpush1.msra.mxu0 0.0
        %2565 = vmatprep.subr.mxu0 0.0
        %2566 = vmatpush1.msra.mxu0 0.0
        %2567 = vmatprep.subr.mxu0 0.0
        %2568 = vmatpush1.msra.mxu0 0.0
        %2569 = vmatprep.subr.mxu0 0.0
        %2570 = vmatpush1.msra.mxu0 0.0
        %2571 = vmatprep.subr.mxu0 0.0
        %2572 = vmatpush1.msra.mxu0 0.0
        %2573 = vmatprep.subr.mxu0 0.0
        %2574 = vmatpush1.msra.mxu0 0.0
        %2575 = vmatprep.mubr.f32.mxu0 0.0
        %2576 = vmatmul.mubr.f32.gmra.mrb[0].mxu0 %v2509
        %v2577 = vpop.f32.mrb[0].mxu0
        %v2578 = vadd.f32 0.0, %v2577
        %v2579 = vpop.f32.mrb[0].mxu0
        %2580 = vdwg.mxu0
        %s2581 = scalar_lea.vmem %s9, 48
        %v2582 = vld [vmem:[%s2581] sm:$0xff]
        %v2583 = vld [vmem:[%s2581 + $0x8] sm:$0xff]
        %v2585 = vsel %vm852, %v2578, 0
        %2587 = vmatprep.subr.mxu0 0.0
        %2588 = vmatpush1.msra.mxu0 %v2582
        %2589 = vmatprep.subr.mxu0 0.0
        %2590 = vmatpush1.msra.mxu0 %v2583
        %2591 = vmatprep.subr.mxu0 0.0
        %2592 = vmatpush1.msra.mxu0 0.0
        %2593 = vmatprep.subr.mxu0 0.0
        %2594 = vmatpush1.msra.mxu0 0.0
        %2595 = vmatprep.subr.mxu0 0.0
        %2596 = vmatpush1.msra.mxu0 0.0
        %2597 = vmatprep.subr.mxu0 0.0
        %2598 = vmatpush1.msra.mxu0 0.0
        %2599 = vmatprep.subr.mxu0 0.0
        %2600 = vmatpush1.msra.mxu0 0.0
        %2601 = vmatprep.subr.mxu0 0.0
        %2602 = vmatpush1.msra.mxu0 0.0
        %2603 = vmatprep.subr.mxu0 0.0
        %2604 = vmatpush1.msra.mxu0 0.0
        %2605 = vmatprep.subr.mxu0 0.0
        %2606 = vmatpush1.msra.mxu0 0.0
        %2607 = vmatprep.subr.mxu0 0.0
        %2608 = vmatpush1.msra.mxu0 0.0
        %2609 = vmatprep.subr.mxu0 0.0
        %2610 = vmatpush1.msra.mxu0 0.0
        %2611 = vmatprep.subr.mxu0 0.0
        %2612 = vmatpush1.msra.mxu0 0.0
        %2613 = vmatprep.subr.mxu0 0.0
        %2614 = vmatpush1.msra.mxu0 0.0
        %2615 = vmatprep.subr.mxu0 0.0
        %2616 = vmatpush1.msra.mxu0 0.0
        %2617 = vmatprep.subr.mxu0 0.0
        %2618 = vmatpush1.msra.mxu0 0.0
        %2619 = vmatprep.subr.mxu0 0.0
        %2620 = vmatpush1.msra.mxu0 0.0
        %2621 = vmatprep.subr.mxu0 0.0
        %2622 = vmatpush1.msra.mxu0 0.0
        %2623 = vmatprep.subr.mxu0 0.0
        %2624 = vmatpush1.msra.mxu0 0.0
        %2625 = vmatprep.subr.mxu0 0.0
        %2626 = vmatpush1.msra.mxu0 0.0
        %2627 = vmatprep.subr.mxu0 0.0
        %2628 = vmatpush1.msra.mxu0 0.0
        %2629 = vmatprep.subr.mxu0 0.0
        %2630 = vmatpush1.msra.mxu0 0.0
        %2631 = vmatprep.subr.mxu0 0.0
        %2632 = vmatpush1.msra.mxu0 0.0
        %2633 = vmatprep.subr.mxu0 0.0
        %2634 = vmatpush1.msra.mxu0 0.0
        %2635 = vmatprep.subr.mxu0 0.0
        %2636 = vmatpush1.msra.mxu0 0.0
        %2637 = vmatprep.subr.mxu0 0.0
        %2638 = vmatpush1.msra.mxu0 0.0
        %2639 = vmatprep.subr.mxu0 0.0
        %2640 = vmatpush1.msra.mxu0 0.0
        %2641 = vmatprep.subr.mxu0 0.0
        %2642 = vmatpush1.msra.mxu0 0.0
        %2643 = vmatprep.subr.mxu0 0.0
        %2644 = vmatpush1.msra.mxu0 0.0
        %2645 = vmatprep.subr.mxu0 0.0
        %2646 = vmatpush1.msra.mxu0 0.0
        %2647 = vmatprep.subr.mxu0 0.0
        %2648 = vmatpush1.msra.mxu0 0.0
        %2649 = vmatprep.subr.mxu0 0.0
        %2650 = vmatpush1.msra.mxu0 0.0
        %2651 = vmatprep.mubr.f32.mxu0 0.0
        %2652 = vmatmul.mubr.f32.gmra.mrb[0].mxu0 %v2585
        %v2653 = vpop.f32.mrb[0].mxu0
        %v2654 = vadd.f32 0.0, %v2653
        %v2655 = vpop.f32.mrb[0].mxu0
        %2656 = vdwg.mxu0
        %v2657 = vadd.f32 %v2134, %v2654
        %s2658 = scalar_lea.vmem %s3, 512
        %v2659 = vld [vmem:[%s2658] sm:$0xff]
        %v2660 = vld [vmem:[%s2658 + $0x8] sm:$0xff]
        %v2661 = vld [vmem:[%s2658 + $0x10] sm:$0xff]
        %v2662 = vld [vmem:[%s2658 + $0x18] sm:$0xff]
        %v2663 = vld [vmem:[%s2658 + $0x20] sm:$0xff]
        %v2664 = vld [vmem:[%s2658 + $0x28] sm:$0xff]
        %v2665 = vld [vmem:[%s2658 + $0x30] sm:$0xff]
        %v2666 = vld [vmem:[%s2658 + $0x38] sm:$0xff]
        %v2667 = vld [vmem:[%s2658 + $0x40] sm:$0xff]
        %v2668 = vld [vmem:[%s2658 + $0x48] sm:$0xff]
        %v2669 = vld [vmem:[%s2658 + $0x50] sm:$0xff]
        %v2670 = vld [vmem:[%s2658 + $0x58] sm:$0xff]
        %v2671 = vld [vmem:[%s2658 + $0x60] sm:$0xff]
        %v2672 = vld [vmem:[%s2658 + $0x68] sm:$0xff]
        %v2673 = vld [vmem:[%s2658 + $0x70] sm:$0xff]
        %v2674 = vld [vmem:[%s2658 + $0x78] sm:$0xff]
        %s2675 = scalar_lea.vmem %s4, 4
        %v2676 = vld [vmem:[%s2675] sm:$0x1]
        %v2678 = vlaneseq
        %v2679 = vshrl.u32 %v2678, 7
        %v2680 = vsub.s32 0, %v2679
        %v2681 = vrot.slane %v2676, %v2680
        %2683 = vmatprep.subr.mxu0 0.0
        %2684 = vmatpush1.msra.mxu0 %v2659
        %2685 = vmatprep.subr.mxu0 0.0
        %2686 = vmatpush1.msra.mxu0 %v2660
        %2687 = vmatprep.subr.mxu0 0.0
        %2688 = vmatpush1.msra.mxu0 %v2661
        %2689 = vmatprep.subr.mxu0 0.0
        %2690 = vmatpush1.msra.mxu0 %v2662
        %2691 = vmatprep.subr.mxu0 0.0
        %2692 = vmatpush1.msra.mxu0 %v2663
        %2693 = vmatprep.subr.mxu0 0.0
        %2694 = vmatpush1.msra.mxu0 %v2664
        %2695 = vmatprep.subr.mxu0 0.0
        %2696 = vmatpush1.msra.mxu0 %v2665
        %2697 = vmatprep.subr.mxu0 0.0
        %2698 = vmatpush1.msra.mxu0 %v2666
        %2699 = vmatprep.subr.mxu0 0.0
        %2700 = vmatpush1.msra.mxu0 %v2667
        %2701 = vmatprep.subr.mxu0 0.0
        %2702 = vmatpush1.msra.mxu0 %v2668
        %2703 = vmatprep.subr.mxu0 0.0
        %2704 = vmatpush1.msra.mxu0 %v2669
        %2705 = vmatprep.subr.mxu0 0.0
        %2706 = vmatpush1.msra.mxu0 %v2670
        %2707 = vmatprep.subr.mxu0 0.0
        %2708 = vmatpush1.msra.mxu0 %v2671
        %2709 = vmatprep.subr.mxu0 0.0
        %2710 = vmatpush1.msra.mxu0 %v2672
        %2711 = vmatprep.subr.mxu0 0.0
        %2712 = vmatpush1.msra.mxu0 %v2673
        %2713 = vmatprep.subr.mxu0 0.0
        %2714 = vmatpush1.msra.mxu0 %v2674
        %2715 = vmatprep.subr.mxu0 0.0
        %2716 = vmatpush1.msra.mxu0 0.0
        %2717 = vmatprep.subr.mxu0 0.0
        %2718 = vmatpush1.msra.mxu0 0.0
        %2719 = vmatprep.subr.mxu0 0.0
        %2720 = vmatpush1.msra.mxu0 0.0
        %2721 = vmatprep.subr.mxu0 0.0
        %2722 = vmatpush1.msra.mxu0 0.0
        %2723 = vmatprep.subr.mxu0 0.0
        %2724 = vmatpush1.msra.mxu0 0.0
        %2725 = vmatprep.subr.mxu0 0.0
        %2726 = vmatpush1.msra.mxu0 0.0
        %2727 = vmatprep.subr.mxu0 0.0
        %2728 = vmatpush1.msra.mxu0 0.0
        %2729 = vmatprep.subr.mxu0 0.0
        %2730 = vmatpush1.msra.mxu0 0.0
        %2731 = vmatprep.subr.mxu0 0.0
        %2732 = vmatpush1.msra.mxu0 0.0
        %2733 = vmatprep.subr.mxu0 0.0
        %2734 = vmatpush1.msra.mxu0 0.0
        %2735 = vmatprep.subr.mxu0 0.0
        %2736 = vmatpush1.msra.mxu0 0.0
        %2737 = vmatprep.subr.mxu0 0.0
        %2738 = vmatpush1.msra.mxu0 0.0
        %2739 = vmatprep.subr.mxu0 0.0
        %2740 = vmatpush1.msra.mxu0 0.0
        %2741 = vmatprep.subr.mxu0 0.0
        %2742 = vmatpush1.msra.mxu0 0.0
        %2743 = vmatprep.subr.mxu0 0.0
        %2744 = vmatpush1.msra.mxu0 0.0
        %2745 = vmatprep.subr.mxu0 0.0
        %2746 = vmatpush1.msra.mxu0 0.0
        %2747 = vmatprep.mubr.f32.mxu0 0.0
        %2748 = vmatmul.mubr.f32.gmra.mrb[0].mxu0 %v572
        %v2749 = vpop.f32.mrb[0].mxu0
        %v2750 = vadd.f32 %v2681, %v2749
        %v2751 = vpop.f32.mrb[0].mxu0
        %2752 = vdwg.mxu0
        %s2753 = scalar_lea.vmem %s5, 512
        %v2754 = vld [vmem:[%s2753] sm:$0xff]
        %v2755 = vld [vmem:[%s2753 + $0x8] sm:$0xff]
        %v2756 = vld [vmem:[%s2753 + $0x10] sm:$0xff]
        %v2757 = vld [vmem:[%s2753 + $0x18] sm:$0xff]
        %v2758 = vld [vmem:[%s2753 + $0x20] sm:$0xff]
        %v2759 = vld [vmem:[%s2753 + $0x28] sm:$0xff]
        %v2760 = vld [vmem:[%s2753 + $0x30] sm:$0xff]
        %v2761 = vld [vmem:[%s2753 + $0x38] sm:$0xff]
        %v2762 = vld [vmem:[%s2753 + $0x40] sm:$0xff]
        %v2763 = vld [vmem:[%s2753 + $0x48] sm:$0xff]
        %v2764 = vld [vmem:[%s2753 + $0x50] sm:$0xff]
        %v2765 = vld [vmem:[%s2753 + $0x58] sm:$0xff]
        %v2766 = vld [vmem:[%s2753 + $0x60] sm:$0xff]
        %v2767 = vld [vmem:[%s2753 + $0x68] sm:$0xff]
        %v2768 = vld [vmem:[%s2753 + $0x70] sm:$0xff]
        %v2769 = vld [vmem:[%s2753 + $0x78] sm:$0xff]
        %s2770 = scalar_lea.vmem %s6, 4
        %v2771 = vld [vmem:[%s2770] sm:$0x1]
        %v2773 = vlaneseq
        %v2774 = vshrl.u32 %v2773, 7
        %v2775 = vsub.s32 0, %v2774
        %v2776 = vrot.slane %v2771, %v2775
        %2778 = vmatprep.subr.mxu0 0.0
        %2779 = vmatpush1.msra.mxu0 %v2754
        %2780 = vmatprep.subr.mxu0 0.0
        %2781 = vmatpush1.msra.mxu0 %v2755
        %2782 = vmatprep.subr.mxu0 0.0
        %2783 = vmatpush1.msra.mxu0 %v2756
        %2784 = vmatprep.subr.mxu0 0.0
        %2785 = vmatpush1.msra.mxu0 %v2757
        %2786 = vmatprep.subr.mxu0 0.0
        %2787 = vmatpush1.msra.mxu0 %v2758
        %2788 = vmatprep.subr.mxu0 0.0
        %2789 = vmatpush1.msra.mxu0 %v2759
        %2790 = vmatprep.subr.mxu0 0.0
        %2791 = vmatpush1.msra.mxu0 %v2760
        %2792 = vmatprep.subr.mxu0 0.0
        %2793 = vmatpush1.msra.mxu0 %v2761
        %2794 = vmatprep.subr.mxu0 0.0
        %2795 = vmatpush1.msra.mxu0 %v2762
        %2796 = vmatprep.subr.mxu0 0.0
        %2797 = vmatpush1.msra.mxu0 %v2763
        %2798 = vmatprep.subr.mxu0 0.0
        %2799 = vmatpush1.msra.mxu0 %v2764
        %2800 = vmatprep.subr.mxu0 0.0
        %2801 = vmatpush1.msra.mxu0 %v2765
        %2802 = vmatprep.subr.mxu0 0.0
        %2803 = vmatpush1.msra.mxu0 %v2766
        %2804 = vmatprep.subr.mxu0 0.0
        %2805 = vmatpush1.msra.mxu0 %v2767
        %2806 = vmatprep.subr.mxu0 0.0
        %2807 = vmatpush1.msra.mxu0 %v2768
        %2808 = vmatprep.subr.mxu0 0.0
        %2809 = vmatpush1.msra.mxu0 %v2769
        %2810 = vmatprep.subr.mxu0 0.0
        %2811 = vmatpush1.msra.mxu0 0.0
        %2812 = vmatprep.subr.mxu0 0.0
        %2813 = vmatpush1.msra.mxu0 0.0
        %2814 = vmatprep.subr.mxu0 0.0
        %2815 = vmatpush1.msra.mxu0 0.0
        %2816 = vmatprep.subr.mxu0 0.0
        %2817 = vmatpush1.msra.mxu0 0.0
        %2818 = vmatprep.subr.mxu0 0.0
        %2819 = vmatpush1.msra.mxu0 0.0
        %2820 = vmatprep.subr.mxu0 0.0
        %2821 = vmatpush1.msra.mxu0 0.0
        %2822 = vmatprep.subr.mxu0 0.0
        %2823 = vmatpush1.msra.mxu0 0.0
        %2824 = vmatprep.subr.mxu0 0.0
        %2825 = vmatpush1.msra.mxu0 0.0
        %2826 = vmatprep.subr.mxu0 0.0
        %2827 = vmatpush1.msra.mxu0 0.0
        %2828 = vmatprep.subr.mxu0 0.0
        %2829 = vmatpush1.msra.mxu0 0.0
        %2830 = vmatprep.subr.mxu0 0.0
        %2831 = vmatpush1.msra.mxu0 0.0
        %2832 = vmatprep.subr.mxu0 0.0
        %2833 = vmatpush1.msra.mxu0 0.0
        %2834 = vmatprep.subr.mxu0 0.0
        %2835 = vmatpush1.msra.mxu0 0.0
        %2836 = vmatprep.subr.mxu0 0.0
        %2837 = vmatpush1.msra.mxu0 0.0
        %2838 = vmatprep.subr.mxu0 0.0
        %2839 = vmatpush1.msra.mxu0 0.0
        %2840 = vmatprep.subr.mxu0 0.0
        %2841 = vmatpush1.msra.mxu0 0.0
        %2842 = vmatprep.mubr.f32.mxu0 0.0
        %2843 = vmatmul.mubr.f32.gmra.mrb[0].mxu0 %v572
        %v2844 = vpop.f32.mrb[0].mxu0
        %v2845 = vadd.f32 %v2776, %v2844
        %v2846 = vpop.f32.mrb[0].mxu0
        %2847 = vdwg.mxu0
        %s2848 = scalar_lea.vmem %s7, 512
        %v2849 = vld [vmem:[%s2848] sm:$0xff]
        %v2850 = vld [vmem:[%s2848 + $0x8] sm:$0xff]
        %v2851 = vld [vmem:[%s2848 + $0x10] sm:$0xff]
        %v2852 = vld [vmem:[%s2848 + $0x18] sm:$0xff]
        %v2853 = vld [vmem:[%s2848 + $0x20] sm:$0xff]
        %v2854 = vld [vmem:[%s2848 + $0x28] sm:$0xff]
        %v2855 = vld [vmem:[%s2848 + $0x30] sm:$0xff]
        %v2856 = vld [vmem:[%s2848 + $0x38] sm:$0xff]
        %v2857 = vld [vmem:[%s2848 + $0x40] sm:$0xff]
        %v2858 = vld [vmem:[%s2848 + $0x48] sm:$0xff]
        %v2859 = vld [vmem:[%s2848 + $0x50] sm:$0xff]
        %v2860 = vld [vmem:[%s2848 + $0x58] sm:$0xff]
        %v2861 = vld [vmem:[%s2848 + $0x60] sm:$0xff]
        %v2862 = vld [vmem:[%s2848 + $0x68] sm:$0xff]
        %v2863 = vld [vmem:[%s2848 + $0x70] sm:$0xff]
        %v2864 = vld [vmem:[%s2848 + $0x78] sm:$0xff]
        %s2865 = scalar_lea.vmem %s8, 4
        %v2866 = vld [vmem:[%s2865] sm:$0x1]
        %v2868 = vlaneseq
        %v2869 = vshrl.u32 %v2868, 7
        %v2870 = vsub.s32 0, %v2869
        %v2871 = vrot.slane %v2866, %v2870
        %2873 = vmatprep.subr.mxu0 0.0
        %2874 = vmatpush1.msra.mxu0 %v2849
        %2875 = vmatprep.subr.mxu0 0.0
        %2876 = vmatpush1.msra.mxu0 %v2850
        %2877 = vmatprep.subr.mxu0 0.0
        %2878 = vmatpush1.msra.mxu0 %v2851
        %2879 = vmatprep.subr.mxu0 0.0
        %2880 = vmatpush1.msra.mxu0 %v2852
        %2881 = vmatprep.subr.mxu0 0.0
        %2882 = vmatpush1.msra.mxu0 %v2853
        %2883 = vmatprep.subr.mxu0 0.0
        %2884 = vmatpush1.msra.mxu0 %v2854
        %2885 = vmatprep.subr.mxu0 0.0
        %2886 = vmatpush1.msra.mxu0 %v2855
        %2887 = vmatprep.subr.mxu0 0.0
        %2888 = vmatpush1.msra.mxu0 %v2856
        %2889 = vmatprep.subr.mxu0 0.0
        %2890 = vmatpush1.msra.mxu0 %v2857
        %2891 = vmatprep.subr.mxu0 0.0
        %2892 = vmatpush1.msra.mxu0 %v2858
        %2893 = vmatprep.subr.mxu0 0.0
        %2894 = vmatpush1.msra.mxu0 %v2859
        %2895 = vmatprep.subr.mxu0 0.0
        %2896 = vmatpush1.msra.mxu0 %v2860
        %2897 = vmatprep.subr.mxu0 0.0
        %2898 = vmatpush1.msra.mxu0 %v2861
        %2899 = vmatprep.subr.mxu0 0.0
        %2900 = vmatpush1.msra.mxu0 %v2862
        %2901 = vmatprep.subr.mxu0 0.0
        %2902 = vmatpush1.msra.mxu0 %v2863
        %2903 = vmatprep.subr.mxu0 0.0
        %2904 = vmatpush1.msra.mxu0 %v2864
        %2905 = vmatprep.subr.mxu0 0.0
        %2906 = vmatpush1.msra.mxu0 0.0
        %2907 = vmatprep.subr.mxu0 0.0
        %2908 = vmatpush1.msra.mxu0 0.0
        %2909 = vmatprep.subr.mxu0 0.0
        %2910 = vmatpush1.msra.mxu0 0.0
        %2911 = vmatprep.subr.mxu0 0.0
        %2912 = vmatpush1.msra.mxu0 0.0
        %2913 = vmatprep.subr.mxu0 0.0
        %2914 = vmatpush1.msra.mxu0 0.0
        %2915 = vmatprep.subr.mxu0 0.0
        %2916 = vmatpush1.msra.mxu0 0.0
        %2917 = vmatprep.subr.mxu0 0.0
        %2918 = vmatpush1.msra.mxu0 0.0
        %2919 = vmatprep.subr.mxu0 0.0
        %2920 = vmatpush1.msra.mxu0 0.0
        %2921 = vmatprep.subr.mxu0 0.0
        %2922 = vmatpush1.msra.mxu0 0.0
        %2923 = vmatprep.subr.mxu0 0.0
        %2924 = vmatpush1.msra.mxu0 0.0
        %2925 = vmatprep.subr.mxu0 0.0
        %2926 = vmatpush1.msra.mxu0 0.0
        %2927 = vmatprep.subr.mxu0 0.0
        %2928 = vmatpush1.msra.mxu0 0.0
        %2929 = vmatprep.subr.mxu0 0.0
        %2930 = vmatpush1.msra.mxu0 0.0
        %2931 = vmatprep.subr.mxu0 0.0
        %2932 = vmatpush1.msra.mxu0 0.0
        %2933 = vmatprep.subr.mxu0 0.0
        %2934 = vmatpush1.msra.mxu0 0.0
        %2935 = vmatprep.subr.mxu0 0.0
        %2936 = vmatpush1.msra.mxu0 0.0
        %2937 = vmatprep.mubr.f32.mxu0 0.0
        %2938 = vmatmul.mubr.f32.gmra.mrb[0].mxu0 %v572
        %v2939 = vpop.f32.mrb[0].mxu0
        %v2940 = vadd.f32 %v2871, %v2939
        %v2941 = vpop.f32.mrb[0].mxu0
        %2942 = vdwg.mxu0
        %v2944 = vsel %vm852, %v2750, 0
        %v2947 = vsel %vm852, %v2845, 0
        %2949 = vmatprep.subr.mxu0 0.0
        %2950 = vmatpush1.xpose.msra.mxu0 %v2947
        %2951 = vmatprep.subr.mxu0 0.0
        %2952 = vmatpush1.xpose.msra.mxu0 0.0
        %2953 = vmatprep.subr.mxu0 0.0
        %2954 = vmatpush1.xpose.msra.mxu0 0.0
        %2955 = vmatprep.subr.mxu0 0.0
        %2956 = vmatpush1.xpose.msra.mxu0 0.0
        %2957 = vmatprep.subr.mxu0 0.0
        %2958 = vmatpush1.xpose.msra.mxu0 0.0
        %2959 = vmatprep.subr.mxu0 0.0
        %2960 = vmatpush1.xpose.msra.mxu0 0.0
        %2961 = vmatprep.subr.mxu0 0.0
        %2962 = vmatpush1.xpose.msra.mxu0 0.0
        %2963 = vmatprep.subr.mxu0 0.0
        %2964 = vmatpush1.xpose.msra.mxu0 0.0
        %2965 = vmatprep.subr.mxu0 0.0
        %2966 = vmatpush1.xpose.msra.mxu0 0.0
        %2967 = vmatprep.subr.mxu0 0.0
        %2968 = vmatpush1.xpose.msra.mxu0 0.0
        %2969 = vmatprep.subr.mxu0 0.0
        %2970 = vmatpush1.xpose.msra.mxu0 0.0
        %2971 = vmatprep.subr.mxu0 0.0
        %2972 = vmatpush1.xpose.msra.mxu0 0.0
        %2973 = vmatprep.subr.mxu0 0.0
        %2974 = vmatpush1.xpose.msra.mxu0 0.0
        %2975 = vmatprep.subr.mxu0 0.0
        %2976 = vmatpush1.xpose.msra.mxu0 0.0
        %2977 = vmatprep.subr.mxu0 0.0
        %2978 = vmatpush1.xpose.msra.mxu0 0.0
        %2979 = vmatprep.subr.mxu0 0.0
        %2980 = vmatpush1.xpose.msra.mxu0 0.0
        %2981 = vmatprep.subr.mxu0 0.0
        %2982 = vmatpush1.xpose.msra.mxu0 0.0
        %2983 = vmatprep.subr.mxu0 0.0
        %2984 = vmatpush1.xpose.msra.mxu0 0.0
        %2985 = vmatprep.subr.mxu0 0.0
        %2986 = vmatpush1.xpose.msra.mxu0 0.0
        %2987 = vmatprep.subr.mxu0 0.0
        %2988 = vmatpush1.xpose.msra.mxu0 0.0
        %2989 = vmatprep.subr.mxu0 0.0
        %2990 = vmatpush1.xpose.msra.mxu0 0.0
        %2991 = vmatprep.subr.mxu0 0.0
        %2992 = vmatpush1.xpose.msra.mxu0 0.0
        %2993 = vmatprep.subr.mxu0 0.0
        %2994 = vmatpush1.xpose.msra.mxu0 0.0
        %2995 = vmatprep.subr.mxu0 0.0
        %2996 = vmatpush1.xpose.msra.mxu0 0.0
        %2997 = vmatprep.subr.mxu0 0.0
        %2998 = vmatpush1.xpose.msra.mxu0 0.0
        %2999 = vmatprep.subr.mxu0 0.0
        %3000 = vmatpush1.xpose.msra.mxu0 0.0
        %3001 = vmatprep.subr.mxu0 0.0
        %3002 = vmatpush1.xpose.msra.mxu0 0.0
        %3003 = vmatprep.subr.mxu0 0.0
        %3004 = vmatpush1.xpose.msra.mxu0 0.0
        %3005 = vmatprep.subr.mxu0 0.0
        %3006 = vmatpush1.xpose.msra.mxu0 0.0
        %3007 = vmatprep.subr.mxu0 0.0
        %3008 = vmatpush1.xpose.msra.mxu0 0.0
        %3009 = vmatprep.subr.mxu0 0.0
        %3010 = vmatpush1.xpose.msra.mxu0 0.0
        %3011 = vmatprep.subr.mxu0 0.0
        %3012 = vmatpush1.xpose.msra.mxu0 0.0
        %3013 = vmatprep.mubr.f32.mxu0 0.0
        %3014 = vmatmul.mubr.f32.gmra.mrb[0].mxu0 %v2944
        %v3015 = vpop.f32.mrb[0].mxu0
        %v3016 = vadd.f32 0.0, %v3015
        %v3017 = vpop.f32.mrb[0].mxu0
        %3018 = vdwg.mxu0
        %v3019 = vmul.f32 %v3016, 0.25
        %v3020 = vsel %vm930, %v3019, -inf
        %3021 = vmax.xlane.f32.xlu0 %v3020
        %v3022 = vpop.xlane.xlu0 %3021
        %v3023 = vsub.f32 %v3019, %v3022
        %v3024 = vmul.f32 %v3023, 1.442695
        %v3025 = vpow.pop %v3024
        %v3026 = vsel %vm930, %v3025, 0.0
        %3027 = vadd.xlane.f32.xlu0 %v3026
        %v3028 = vpop.xlane.xlu0 %3027
        %v3029 = vrcp.pop %v3028
        %v3030 = vmul.f32 %v3025, %v3029
        %v3032 = vsel %vm930, %v3030, 0
        %3034 = vmatprep.subr.mxu0 0.0
        %3035 = vmatpush1.msra.mxu0 %v2940
        %3036 = vmatprep.subr.mxu0 0.0
        %3037 = vmatpush1.msra.mxu0 0.0
        %3038 = vmatprep.subr.mxu0 0.0
        %3039 = vmatpush1.msra.mxu0 0.0
        %3040 = vmatprep.subr.mxu0 0.0
        %3041 = vmatpush1.msra.mxu0 0.0
        %3042 = vmatprep.subr.mxu0 0.0
        %3043 = vmatpush1.msra.mxu0 0.0
        %3044 = vmatprep.subr.mxu0 0.0
        %3045 = vmatpush1.msra.mxu0 0.0
        %3046 = vmatprep.subr.mxu0 0.0
        %3047 = vmatpush1.msra.mxu0 0.0
        %3048 = vmatprep.subr.mxu0 0.0
        %3049 = vmatpush1.msra.mxu0 0.0
        %3050 = vmatprep.subr.mxu0 0.0
        %3051 = vmatpush1.msra.mxu0 0.0
        %3052 = vmatprep.subr.mxu0 0.0
        %3053 = vmatpush1.msra.mxu0 0.0
        %3054 = vmatprep.subr.mxu0 0.0
        %3055 = vmatpush1.msra.mxu0 0.0
        %3056 = vmatprep.subr.mxu0 0.0
        %3057 = vmatpush1.msra.mxu0 0.0
        %3058 = vmatprep.subr.mxu0 0.0
        %3059 = vmatpush1.msra.mxu0 0.0
        %3060 = vmatprep.subr.mxu0 0.0
        %3061 = vmatpush1.msra.mxu0 0.0
        %3062 = vmatprep.subr.mxu0 0.0
        %3063 = vmatpush1.msra.mxu0 0.0
        %3064 = vmatprep.subr.mxu0 0.0
        %3065 = vmatpush1.msra.mxu0 0.0
        %3066 = vmatprep.subr.mxu0 0.0
        %3067 = vmatpush1.msra.mxu0 0.0
        %3068 = vmatprep.subr.mxu0 0.0
        %3069 = vmatpush1.msra.mxu0 0.0
        %3070 = vmatprep.subr.mxu0 0.0
        %3071 = vmatpush1.msra.mxu0 0.0
        %3072 = vmatprep.subr.mxu0 0.0
        %3073 = vmatpush1.msra.mxu0 0.0
        %3074 = vmatprep.subr.mxu0 0.0
        %3075 = vmatpush1.msra.mxu0 0.0
        %3076 = vmatprep.subr.mxu0 0.0
        %3077 = vmatpush1.msra.mxu0 0.0
        %3078 = vmatprep.subr.mxu0 0.0
        %3079 = vmatpush1.msra.mxu0 0.0
        %3080 = vmatprep.subr.mxu0 0.0
        %3081 = vmatpush1.msra.mxu0 0.0
        %3082 = vmatprep.subr.mxu0 0.0
        %3083 = vmatpush1.msra.mxu0 0.0
        %3084 = vmatprep.subr.mxu0 0.0
        %3085 = vmatpush1.msra.mxu0 0.0
        %3086 = vmatprep.subr.mxu0 0.0
        %3087 = vmatpush1.msra.mxu0 0.0
        %3088 = vmatprep.subr.mxu0 0.0
        %3089 = vmatpush1.msra.mxu0 0.0
        %3090 = vmatprep.subr.mxu0 0.0
        %3091 = vmatpush1.msra.mxu0 0.0
        %3092 = vmatprep.subr.mxu0 0.0
        %3093 = vmatpush1.msra.mxu0 0.0
        %3094 = vmatprep.subr.mxu0 0.0
        %3095 = vmatpush1.msra.mxu0 0.0
        %3096 = vmatprep.subr.mxu0 0.0
        %3097 = vmatpush1.msra.mxu0 0.0
        %3098 = vmatprep.mubr.f32.mxu0 0.0
        %3099 = vmatmul.mubr.f32.gmra.mrb[0].mxu0 %v3032
        %v3100 = vpop.f32.mrb[0].mxu0
        %v3101 = vadd.f32 0.0, %v3100
        %v3102 = vpop.f32.mrb[0].mxu0
        %3103 = vdwg.mxu0
        %s3104 = scalar_lea.vmem %s9, 64
        %v3105 = vld [vmem:[%s3104] sm:$0xff]
        %v3106 = vld [vmem:[%s3104 + $0x8] sm:$0xff]
        %v3108 = vsel %vm852, %v3101, 0
        %3110 = vmatprep.subr.mxu0 0.0
        %3111 = vmatpush1.msra.mxu0 %v3105
        %3112 = vmatprep.subr.mxu0 0.0
        %3113 = vmatpush1.msra.mxu0 %v3106
        %3114 = vmatprep.subr.mxu0 0.0
        %3115 = vmatpush1.msra.mxu0 0.0
        %3116 = vmatprep.subr.mxu0 0.0
        %3117 = vmatpush1.msra.mxu0 0.0
        %3118 = vmatprep.subr.mxu0 0.0
        %3119 = vmatpush1.msra.mxu0 0.0
        %3120 = vmatprep.subr.mxu0 0.0
        %3121 = vmatpush1.msra.mxu0 0.0
        %3122 = vmatprep.subr.mxu0 0.0
        %3123 = vmatpush1.msra.mxu0 0.0
        %3124 = vmatprep.subr.mxu0 0.0
        %3125 = vmatpush1.msra.mxu0 0.0
        %3126 = vmatprep.subr.mxu0 0.0
        %3127 = vmatpush1.msra.mxu0 0.0
        %3128 = vmatprep.subr.mxu0 0.0
        %3129 = vmatpush1.msra.mxu0 0.0
        %3130 = vmatprep.subr.mxu0 0.0
        %3131 = vmatpush1.msra.mxu0 0.0
        %3132 = vmatprep.subr.mxu0 0.0
        %3133 = vmatpush1.msra.mxu0 0.0
        %3134 = vmatprep.subr.mxu0 0.0
        %3135 = vmatpush1.msra.mxu0 0.0
        %3136 = vmatprep.subr.mxu0 0.0
        %3137 = vmatpush1.msra.mxu0 0.0
        %3138 = vmatprep.subr.mxu0 0.0
        %3139 = vmatpush1.msra.mxu0 0.0
        %3140 = vmatprep.subr.mxu0 0.0
        %3141 = vmatpush1.msra.mxu0 0.0
        %3142 = vmatprep.subr.mxu0 0.0
        %3143 = vmatpush1.msra.mxu0 0.0
        %3144 = vmatprep.subr.mxu0 0.0
        %3145 = vmatpush1.msra.mxu0 0.0
        %3146 = vmatprep.subr.mxu0 0.0
        %3147 = vmatpush1.msra.mxu0 0.0
        %3148 = vmatprep.subr.mxu0 0.0
        %3149 = vmatpush1.msra.mxu0 0.0
        %3150 = vmatprep.subr.mxu0 0.0
        %3151 = vmatpush1.msra.mxu0 0.0
        %3152 = vmatprep.subr.mxu0 0.0
        %3153 = vmatpush1.msra.mxu0 0.0
        %3154 = vmatprep.subr.mxu0 0.0
        %3155 = vmatpush1.msra.mxu0 0.0
        %3156 = vmatprep.subr.mxu0 0.0
        %3157 = vmatpush1.msra.mxu0 0.0
        %3158 = vmatprep.subr.mxu0 0.0
        %3159 = vmatpush1.msra.mxu0 0.0
        %3160 = vmatprep.subr.mxu0 0.0
        %3161 = vmatpush1.msra.mxu0 0.0
        %3162 = vmatprep.subr.mxu0 0.0
        %3163 = vmatpush1.msra.mxu0 0.0
        %3164 = vmatprep.subr.mxu0 0.0
        %3165 = vmatpush1.msra.mxu0 0.0
        %3166 = vmatprep.subr.mxu0 0.0
        %3167 = vmatpush1.msra.mxu0 0.0
        %3168 = vmatprep.subr.mxu0 0.0
        %3169 = vmatpush1.msra.mxu0 0.0
        %3170 = vmatprep.subr.mxu0 0.0
        %3171 = vmatpush1.msra.mxu0 0.0
        %3172 = vmatprep.subr.mxu0 0.0
        %3173 = vmatpush1.msra.mxu0 0.0
        %3174 = vmatprep.mubr.f32.mxu0 0.0
        %3175 = vmatmul.mubr.f32.gmra.mrb[0].mxu0 %v3108
        %v3176 = vpop.f32.mrb[0].mxu0
        %v3177 = vadd.f32 0.0, %v3176
        %v3178 = vpop.f32.mrb[0].mxu0
        %3179 = vdwg.mxu0
        %v3180 = vadd.f32 %v2657, %v3177
        %s3181 = scalar_lea.vmem %s3, 640
        %v3182 = vld [vmem:[%s3181] sm:$0xff]
        %v3183 = vld [vmem:[%s3181 + $0x8] sm:$0xff]
        %v3184 = vld [vmem:[%s3181 + $0x10] sm:$0xff]
        %v3185 = vld [vmem:[%s3181 + $0x18] sm:$0xff]
        %v3186 = vld [vmem:[%s3181 + $0x20] sm:$0xff]
        %v3187 = vld [vmem:[%s3181 + $0x28] sm:$0xff]
        %v3188 = vld [vmem:[%s3181 + $0x30] sm:$0xff]
        %v3189 = vld [vmem:[%s3181 + $0x38] sm:$0xff]
        %v3190 = vld [vmem:[%s3181 + $0x40] sm:$0xff]
        %v3191 = vld [vmem:[%s3181 + $0x48] sm:$0xff]
        %v3192 = vld [vmem:[%s3181 + $0x50] sm:$0xff]
        %v3193 = vld [vmem:[%s3181 + $0x58] sm:$0xff]
        %v3194 = vld [vmem:[%s3181 + $0x60] sm:$0xff]
        %v3195 = vld [vmem:[%s3181 + $0x68] sm:$0xff]
        %v3196 = vld [vmem:[%s3181 + $0x70] sm:$0xff]
        %v3197 = vld [vmem:[%s3181 + $0x78] sm:$0xff]
        %s3198 = scalar_lea.vmem %s4, 5
        %v3199 = vld [vmem:[%s3198] sm:$0x1]
        %v3201 = vlaneseq
        %v3202 = vshrl.u32 %v3201, 7
        %v3203 = vsub.s32 0, %v3202
        %v3204 = vrot.slane %v3199, %v3203
        %3206 = vmatprep.subr.mxu0 0.0
        %3207 = vmatpush1.msra.mxu0 %v3182
        %3208 = vmatprep.subr.mxu0 0.0
        %3209 = vmatpush1.msra.mxu0 %v3183
        %3210 = vmatprep.subr.mxu0 0.0
        %3211 = vmatpush1.msra.mxu0 %v3184
        %3212 = vmatprep.subr.mxu0 0.0
        %3213 = vmatpush1.msra.mxu0 %v3185
        %3214 = vmatprep.subr.mxu0 0.0
        %3215 = vmatpush1.msra.mxu0 %v3186
        %3216 = vmatprep.subr.mxu0 0.0
        %3217 = vmatpush1.msra.mxu0 %v3187
        %3218 = vmatprep.subr.mxu0 0.0
        %3219 = vmatpush1.msra.mxu0 %v3188
        %3220 = vmatprep.subr.mxu0 0.0
        %3221 = vmatpush1.msra.mxu0 %v3189
        %3222 = vmatprep.subr.mxu0 0.0
        %3223 = vmatpush1.msra.mxu0 %v3190
        %3224 = vmatprep.subr.mxu0 0.0
        %3225 = vmatpush1.msra.mxu0 %v3191
        %3226 = vmatprep.subr.mxu0 0.0
        %3227 = vmatpush1.msra.mxu0 %v3192
        %3228 = vmatprep.subr.mxu0 0.0
        %3229 = vmatpush1.msra.mxu0 %v3193
        %3230 = vmatprep.subr.mxu0 0.0
        %3231 = vmatpush1.msra.mxu0 %v3194
        %3232 = vmatprep.subr.mxu0 0.0
        %3233 = vmatpush1.msra.mxu0 %v3195
        %3234 = vmatprep.subr.mxu0 0.0
        %3235 = vmatpush1.msra.mxu0 %v3196
        %3236 = vmatprep.subr.mxu0 0.0
        %3237 = vmatpush1.msra.mxu0 %v3197
        %3238 = vmatprep.subr.mxu0 0.0
        %3239 = vmatpush1.msra.mxu0 0.0
        %3240 = vmatprep.subr.mxu0 0.0
        %3241 = vmatpush1.msra.mxu0 0.0
        %3242 = vmatprep.subr.mxu0 0.0
        %3243 = vmatpush1.msra.mxu0 0.0
        %3244 = vmatprep.subr.mxu0 0.0
        %3245 = vmatpush1.msra.mxu0 0.0
        %3246 = vmatprep.subr.mxu0 0.0
        %3247 = vmatpush1.msra.mxu0 0.0
        %3248 = vmatprep.subr.mxu0 0.0
        %3249 = vmatpush1.msra.mxu0 0.0
        %3250 = vmatprep.subr.mxu0 0.0
        %3251 = vmatpush1.msra.mxu0 0.0
        %3252 = vmatprep.subr.mxu0 0.0
        %3253 = vmatpush1.msra.mxu0 0.0
        %3254 = vmatprep.subr.mxu0 0.0
        %3255 = vmatpush1.msra.mxu0 0.0
        %3256 = vmatprep.subr.mxu0 0.0
        %3257 = vmatpush1.msra.mxu0 0.0
        %3258 = vmatprep.subr.mxu0 0.0
        %3259 = vmatpush1.msra.mxu0 0.0
        %3260 = vmatprep.subr.mxu0 0.0
        %3261 = vmatpush1.msra.mxu0 0.0
        %3262 = vmatprep.subr.mxu0 0.0
        %3263 = vmatpush1.msra.mxu0 0.0
        %3264 = vmatprep.subr.mxu0 0.0
        %3265 = vmatpush1.msra.mxu0 0.0
        %3266 = vmatprep.subr.mxu0 0.0
        %3267 = vmatpush1.msra.mxu0 0.0
        %3268 = vmatprep.subr.mxu0 0.0
        %3269 = vmatpush1.msra.mxu0 0.0
        %3270 = vmatprep.mubr.f32.mxu0 0.0
        %3271 = vmatmul.mubr.f32.gmra.mrb[0].mxu0 %v572
        %v3272 = vpop.f32.mrb[0].mxu0
        %v3273 = vadd.f32 %v3204, %v3272
        %v3274 = vpop.f32.mrb[0].mxu0
        %3275 = vdwg.mxu0
        %s3276 = scalar_lea.vmem %s5, 640
        %v3277 = vld [vmem:[%s3276] sm:$0xff]
        %v3278 = vld [vmem:[%s3276 + $0x8] sm:$0xff]
        %v3279 = vld [vmem:[%s3276 + $0x10] sm:$0xff]
        %v3280 = vld [vmem:[%s3276 + $0x18] sm:$0xff]
        %v3281 = vld [vmem:[%s3276 + $0x20] sm:$0xff]
        %v3282 = vld [vmem:[%s3276 + $0x28] sm:$0xff]
        %v3283 = vld [vmem:[%s3276 + $0x30] sm:$0xff]
        %v3284 = vld [vmem:[%s3276 + $0x38] sm:$0xff]
        %v3285 = vld [vmem:[%s3276 + $0x40] sm:$0xff]
        %v3286 = vld [vmem:[%s3276 + $0x48] sm:$0xff]
        %v3287 = vld [vmem:[%s3276 + $0x50] sm:$0xff]
        %v3288 = vld [vmem:[%s3276 + $0x58] sm:$0xff]
        %v3289 = vld [vmem:[%s3276 + $0x60] sm:$0xff]
        %v3290 = vld [vmem:[%s3276 + $0x68] sm:$0xff]
        %v3291 = vld [vmem:[%s3276 + $0x70] sm:$0xff]
        %v3292 = vld [vmem:[%s3276 + $0x78] sm:$0xff]
        %s3293 = scalar_lea.vmem %s6, 5
        %v3294 = vld [vmem:[%s3293] sm:$0x1]
        %v3296 = vlaneseq
        %v3297 = vshrl.u32 %v3296, 7
        %v3298 = vsub.s32 0, %v3297
        %v3299 = vrot.slane %v3294, %v3298
        %3301 = vmatprep.subr.mxu0 0.0
        %3302 = vmatpush1.msra.mxu0 %v3277
        %3303 = vmatprep.subr.mxu0 0.0
        %3304 = vmatpush1.msra.mxu0 %v3278
        %3305 = vmatprep.subr.mxu0 0.0
        %3306 = vmatpush1.msra.mxu0 %v3279
        %3307 = vmatprep.subr.mxu0 0.0
        %3308 = vmatpush1.msra.mxu0 %v3280
        %3309 = vmatprep.subr.mxu0 0.0
        %3310 = vmatpush1.msra.mxu0 %v3281
        %3311 = vmatprep.subr.mxu0 0.0
        %3312 = vmatpush1.msra.mxu0 %v3282
        %3313 = vmatprep.subr.mxu0 0.0
        %3314 = vmatpush1.msra.mxu0 %v3283
        %3315 = vmatprep.subr.mxu0 0.0
        %3316 = vmatpush1.msra.mxu0 %v3284
        %3317 = vmatprep.subr.mxu0 0.0
        %3318 = vmatpush1.msra.mxu0 %v3285
        %3319 = vmatprep.subr.mxu0 0.0
        %3320 = vmatpush1.msra.mxu0 %v3286
        %3321 = vmatprep.subr.mxu0 0.0
        %3322 = vmatpush1.msra.mxu0 %v3287
        %3323 = vmatprep.subr.mxu0 0.0
        %3324 = vmatpush1.msra.mxu0 %v3288
        %3325 = vmatprep.subr.mxu0 0.0
        %3326 = vmatpush1.msra.mxu0 %v3289
        %3327 = vmatprep.subr.mxu0 0.0
        %3328 = vmatpush1.msra.mxu0 %v3290
        %3329 = vmatprep.subr.mxu0 0.0
        %3330 = vmatpush1.msra.mxu0 %v3291
        %3331 = vmatprep.subr.mxu0 0.0
        %3332 = vmatpush1.msra.mxu0 %v3292
        %3333 = vmatprep.subr.mxu0 0.0
        %3334 = vmatpush1.msra.mxu0 0.0
        %3335 = vmatprep.subr.mxu0 0.0
        %3336 = vmatpush1.msra.mxu0 0.0
        %3337 = vmatprep.subr.mxu0 0.0
        %3338 = vmatpush1.msra.mxu0 0.0
        %3339 = vmatprep.subr.mxu0 0.0
        %3340 = vmatpush1.msra.mxu0 0.0
        %3341 = vmatprep.subr.mxu0 0.0
        %3342 = vmatpush1.msra.mxu0 0.0
        %3343 = vmatprep.subr.mxu0 0.0
        %3344 = vmatpush1.msra.mxu0 0.0
        %3345 = vmatprep.subr.mxu0 0.0
        %3346 = vmatpush1.msra.mxu0 0.0
        %3347 = vmatprep.subr.mxu0 0.0
        %3348 = vmatpush1.msra.mxu0 0.0
        %3349 = vmatprep.subr.mxu0 0.0
        %3350 = vmatpush1.msra.mxu0 0.0
        %3351 = vmatprep.subr.mxu0 0.0
        %3352 = vmatpush1.msra.mxu0 0.0
        %3353 = vmatprep.subr.mxu0 0.0
        %3354 = vmatpush1.msra.mxu0 0.0
        %3355 = vmatprep.subr.mxu0 0.0
        %3356 = vmatpush1.msra.mxu0 0.0
        %3357 = vmatprep.subr.mxu0 0.0
        %3358 = vmatpush1.msra.mxu0 0.0
        %3359 = vmatprep.subr.mxu0 0.0
        %3360 = vmatpush1.msra.mxu0 0.0
        %3361 = vmatprep.subr.mxu0 0.0
        %3362 = vmatpush1.msra.mxu0 0.0
        %3363 = vmatprep.subr.mxu0 0.0
        %3364 = vmatpush1.msra.mxu0 0.0
        %3365 = vmatprep.mubr.f32.mxu0 0.0
        %3366 = vmatmul.mubr.f32.gmra.mrb[0].mxu0 %v572
        %v3367 = vpop.f32.mrb[0].mxu0
        %v3368 = vadd.f32 %v3299, %v3367
        %v3369 = vpop.f32.mrb[0].mxu0
        %3370 = vdwg.mxu0
        %s3371 = scalar_lea.vmem %s7, 640
        %v3372 = vld [vmem:[%s3371] sm:$0xff]
        %v3373 = vld [vmem:[%s3371 + $0x8] sm:$0xff]
        %v3374 = vld [vmem:[%s3371 + $0x10] sm:$0xff]
        %v3375 = vld [vmem:[%s3371 + $0x18] sm:$0xff]
        %v3376 = vld [vmem:[%s3371 + $0x20] sm:$0xff]
        %v3377 = vld [vmem:[%s3371 + $0x28] sm:$0xff]
        %v3378 = vld [vmem:[%s3371 + $0x30] sm:$0xff]
        %v3379 = vld [vmem:[%s3371 + $0x38] sm:$0xff]
        %v3380 = vld [vmem:[%s3371 + $0x40] sm:$0xff]
        %v3381 = vld [vmem:[%s3371 + $0x48] sm:$0xff]
        %v3382 = vld [vmem:[%s3371 + $0x50] sm:$0xff]
        %v3383 = vld [vmem:[%s3371 + $0x58] sm:$0xff]
        %v3384 = vld [vmem:[%s3371 + $0x60] sm:$0xff]
        %v3385 = vld [vmem:[%s3371 + $0x68] sm:$0xff]
        %v3386 = vld [vmem:[%s3371 + $0x70] sm:$0xff]
        %v3387 = vld [vmem:[%s3371 + $0x78] sm:$0xff]
        %s3388 = scalar_lea.vmem %s8, 5
        %v3389 = vld [vmem:[%s3388] sm:$0x1]
        %v3391 = vlaneseq
        %v3392 = vshrl.u32 %v3391, 7
        %v3393 = vsub.s32 0, %v3392
        %v3394 = vrot.slane %v3389, %v3393
        %3396 = vmatprep.subr.mxu0 0.0
        %3397 = vmatpush1.msra.mxu0 %v3372
        %3398 = vmatprep.subr.mxu0 0.0
        %3399 = vmatpush1.msra.mxu0 %v3373
        %3400 = vmatprep.subr.mxu0 0.0
        %3401 = vmatpush1.msra.mxu0 %v3374
        %3402 = vmatprep.subr.mxu0 0.0
        %3403 = vmatpush1.msra.mxu0 %v3375
        %3404 = vmatprep.subr.mxu0 0.0
        %3405 = vmatpush1.msra.mxu0 %v3376
        %3406 = vmatprep.subr.mxu0 0.0
        %3407 = vmatpush1.msra.mxu0 %v3377
        %3408 = vmatprep.subr.mxu0 0.0
        %3409 = vmatpush1.msra.mxu0 %v3378
        %3410 = vmatprep.subr.mxu0 0.0
        %3411 = vmatpush1.msra.mxu0 %v3379
        %3412 = vmatprep.subr.mxu0 0.0
        %3413 = vmatpush1.msra.mxu0 %v3380
        %3414 = vmatprep.subr.mxu0 0.0
        %3415 = vmatpush1.msra.mxu0 %v3381
        %3416 = vmatprep.subr.mxu0 0.0
        %3417 = vmatpush1.msra.mxu0 %v3382
        %3418 = vmatprep.subr.mxu0 0.0
        %3419 = vmatpush1.msra.mxu0 %v3383
        %3420 = vmatprep.subr.mxu0 0.0
        %3421 = vmatpush1.msra.mxu0 %v3384
        %3422 = vmatprep.subr.mxu0 0.0
        %3423 = vmatpush1.msra.mxu0 %v3385
        %3424 = vmatprep.subr.mxu0 0.0
        %3425 = vmatpush1.msra.mxu0 %v3386
        %3426 = vmatprep.subr.mxu0 0.0
        %3427 = vmatpush1.msra.mxu0 %v3387
        %3428 = vmatprep.subr.mxu0 0.0
        %3429 = vmatpush1.msra.mxu0 0.0
        %3430 = vmatprep.subr.mxu0 0.0
        %3431 = vmatpush1.msra.mxu0 0.0
        %3432 = vmatprep.subr.mxu0 0.0
        %3433 = vmatpush1.msra.mxu0 0.0
        %3434 = vmatprep.subr.mxu0 0.0
        %3435 = vmatpush1.msra.mxu0 0.0
        %3436 = vmatprep.subr.mxu0 0.0
        %3437 = vmatpush1.msra.mxu0 0.0
        %3438 = vmatprep.subr.mxu0 0.0
        %3439 = vmatpush1.msra.mxu0 0.0
        %3440 = vmatprep.subr.mxu0 0.0
        %3441 = vmatpush1.msra.mxu0 0.0
        %3442 = vmatprep.subr.mxu0 0.0
        %3443 = vmatpush1.msra.mxu0 0.0
        %3444 = vmatprep.subr.mxu0 0.0
        %3445 = vmatpush1.msra.mxu0 0.0
        %3446 = vmatprep.subr.mxu0 0.0
        %3447 = vmatpush1.msra.mxu0 0.0
        %3448 = vmatprep.subr.mxu0 0.0
        %3449 = vmatpush1.msra.mxu0 0.0
        %3450 = vmatprep.subr.mxu0 0.0
        %3451 = vmatpush1.msra.mxu0 0.0
        %3452 = vmatprep.subr.mxu0 0.0
        %3453 = vmatpush1.msra.mxu0 0.0
        %3454 = vmatprep.subr.mxu0 0.0
        %3455 = vmatpush1.msra.mxu0 0.0
        %3456 = vmatprep.subr.mxu0 0.0
        %3457 = vmatpush1.msra.mxu0 0.0
        %3458 = vmatprep.subr.mxu0 0.0
        %3459 = vmatpush1.msra.mxu0 0.0
        %3460 = vmatprep.mubr.f32.mxu0 0.0
        %3461 = vmatmul.mubr.f32.gmra.mrb[0].mxu0 %v572
        %v3462 = vpop.f32.mrb[0].mxu0
        %v3463 = vadd.f32 %v3394, %v3462
        %v3464 = vpop.f32.mrb[0].mxu0
        %3465 = vdwg.mxu0
        %v3467 = vsel %vm852, %v3273, 0
        %v3470 = vsel %vm852, %v3368, 0
        %3472 = vmatprep.subr.mxu0 0.0
        %3473 = vmatpush1.xpose.msra.mxu0 %v3470
        %3474 = vmatprep.subr.mxu0 0.0
        %3475 = vmatpush1.xpose.msra.mxu0 0.0
        %3476 = vmatprep.subr.mxu0 0.0
        %3477 = vmatpush1.xpose.msra.mxu0 0.0
        %3478 = vmatprep.subr.mxu0 0.0
        %3479 = vmatpush1.xpose.msra.mxu0 0.0
        %3480 = vmatprep.subr.mxu0 0.0
        %3481 = vmatpush1.xpose.msra.mxu0 0.0
        %3482 = vmatprep.subr.mxu0 0.0
        %3483 = vmatpush1.xpose.msra.mxu0 0.0
        %3484 = vmatprep.subr.mxu0 0.0
        %3485 = vmatpush1.xpose.msra.mxu0 0.0
        %3486 = vmatprep.subr.mxu0 0.0
        %3487 = vmatpush1.xpose.msra.mxu0 0.0
        %3488 = vmatprep.subr.mxu0 0.0
        %3489 = vmatpush1.xpose.msra.mxu0 0.0
        %3490 = vmatprep.subr.mxu0 0.0
        %3491 = vmatpush1.xpose.msra.mxu0 0.0
        %3492 = vmatprep.subr.mxu0 0.0
        %3493 = vmatpush1.xpose.msra.mxu0 0.0
        %3494 = vmatprep.subr.mxu0 0.0
        %3495 = vmatpush1.xpose.msra.mxu0 0.0
        %3496 = vmatprep.subr.mxu0 0.0
        %3497 = vmatpush1.xpose.msra.mxu0 0.0
        %3498 = vmatprep.subr.mxu0 0.0
        %3499 = vmatpush1.xpose.msra.mxu0 0.0
        %3500 = vmatprep.subr.mxu0 0.0
        %3501 = vmatpush1.xpose.msra.mxu0 0.0
        %3502 = vmatprep.subr.mxu0 0.0
        %3503 = vmatpush1.xpose.msra.mxu0 0.0
        %3504 = vmatprep.subr.mxu0 0.0
        %3505 = vmatpush1.xpose.msra.mxu0 0.0
        %3506 = vmatprep.subr.mxu0 0.0
        %3507 = vmatpush1.xpose.msra.mxu0 0.0
        %3508 = vmatprep.subr.mxu0 0.0
        %3509 = vmatpush1.xpose.msra.mxu0 0.0
        %3510 = vmatprep.subr.mxu0 0.0
        %3511 = vmatpush1.xpose.msra.mxu0 0.0
        %3512 = vmatprep.subr.mxu0 0.0
        %3513 = vmatpush1.xpose.msra.mxu0 0.0
        %3514 = vmatprep.subr.mxu0 0.0
        %3515 = vmatpush1.xpose.msra.mxu0 0.0
        %3516 = vmatprep.subr.mxu0 0.0
        %3517 = vmatpush1.xpose.msra.mxu0 0.0
        %3518 = vmatprep.subr.mxu0 0.0
        %3519 = vmatpush1.xpose.msra.mxu0 0.0
        %3520 = vmatprep.subr.mxu0 0.0
        %3521 = vmatpush1.xpose.msra.mxu0 0.0
        %3522 = vmatprep.subr.mxu0 0.0
        %3523 = vmatpush1.xpose.msra.mxu0 0.0
        %3524 = vmatprep.subr.mxu0 0.0
        %3525 = vmatpush1.xpose.msra.mxu0 0.0
        %3526 = vmatprep.subr.mxu0 0.0
        %3527 = vmatpush1.xpose.msra.mxu0 0.0
        %3528 = vmatprep.subr.mxu0 0.0
        %3529 = vmatpush1.xpose.msra.mxu0 0.0
        %3530 = vmatprep.subr.mxu0 0.0
        %3531 = vmatpush1.xpose.msra.mxu0 0.0
        %3532 = vmatprep.subr.mxu0 0.0
        %3533 = vmatpush1.xpose.msra.mxu0 0.0
        %3534 = vmatprep.subr.mxu0 0.0
        %3535 = vmatpush1.xpose.msra.mxu0 0.0
        %3536 = vmatprep.mubr.f32.mxu0 0.0
        %3537 = vmatmul.mubr.f32.gmra.mrb[0].mxu0 %v3467
        %v3538 = vpop.f32.mrb[0].mxu0
        %v3539 = vadd.f32 0.0, %v3538
        %v3540 = vpop.f32.mrb[0].mxu0
        %3541 = vdwg.mxu0
        %v3542 = vmul.f32 %v3539, 0.25
        %v3543 = vsel %vm930, %v3542, -inf
        %3544 = vmax.xlane.f32.xlu0 %v3543
        %v3545 = vpop.xlane.xlu0 %3544
        %v3546 = vsub.f32 %v3542, %v3545
        %v3547 = vmul.f32 %v3546, 1.442695
        %v3548 = vpow.pop %v3547
        %v3549 = vsel %vm930, %v3548, 0.0
        %3550 = vadd.xlane.f32.xlu0 %v3549
        %v3551 = vpop.xlane.xlu0 %3550
        %v3552 = vrcp.pop %v3551
        %v3553 = vmul.f32 %v3548, %v3552
        %v3555 = vsel %vm930, %v3553, 0
        %3557 = vmatprep.subr.mxu0 0.0
        %3558 = vmatpush1.msra.mxu0 %v3463
        %3559 = vmatprep.subr.mxu0 0.0
        %3560 = vmatpush1.msra.mxu0 0.0
        %3561 = vmatprep.subr.mxu0 0.0
        %3562 = vmatpush1.msra.mxu0 0.0
        %3563 = vmatprep.subr.mxu0 0.0
        %3564 = vmatpush1.msra.mxu0 0.0
        %3565 = vmatprep.subr.mxu0 0.0
        %3566 = vmatpush1.msra.mxu0 0.0
        %3567 = vmatprep.subr.mxu0 0.0
        %3568 = vmatpush1.msra.mxu0 0.0
        %3569 = vmatprep.subr.mxu0 0.0
        %3570 = vmatpush1.msra.mxu0 0.0
        %3571 = vmatprep.subr.mxu0 0.0
        %3572 = vmatpush1.msra.mxu0 0.0
        %3573 = vmatprep.subr.mxu0 0.0
        %3574 = vmatpush1.msra.mxu0 0.0
        %3575 = vmatprep.subr.mxu0 0.0
        %3576 = vmatpush1.msra.mxu0 0.0
        %3577 = vmatprep.subr.mxu0 0.0
        %3578 = vmatpush1.msra.mxu0 0.0
        %3579 = vmatprep.subr.mxu0 0.0
        %3580 = vmatpush1.msra.mxu0 0.0
        %3581 = vmatprep.subr.mxu0 0.0
        %3582 = vmatpush1.msra.mxu0 0.0
        %3583 = vmatprep.subr.mxu0 0.0
        %3584 = vmatpush1.msra.mxu0 0.0
        %3585 = vmatprep.subr.mxu0 0.0
        %3586 = vmatpush1.msra.mxu0 0.0
        %3587 = vmatprep.subr.mxu0 0.0
        %3588 = vmatpush1.msra.mxu0 0.0
        %3589 = vmatprep.subr.mxu0 0.0
        %3590 = vmatpush1.msra.mxu0 0.0
        %3591 = vmatprep.subr.mxu0 0.0
        %3592 = vmatpush1.msra.mxu0 0.0
        %3593 = vmatprep.subr.mxu0 0.0
        %3594 = vmatpush1.msra.mxu0 0.0
        %3595 = vmatprep.subr.mxu0 0.0
        %3596 = vmatpush1.msra.mxu0 0.0
        %3597 = vmatprep.subr.mxu0 0.0
        %3598 = vmatpush1.msra.mxu0 0.0
        %3599 = vmatprep.subr.mxu0 0.0
        %3600 = vmatpush1.msra.mxu0 0.0
        %3601 = vmatprep.subr.mxu0 0.0
        %3602 = vmatpush1.msra.mxu0 0.0
        %3603 = vmatprep.subr.mxu0 0.0
        %3604 = vmatpush1.msra.mxu0 0.0
        %3605 = vmatprep.subr.mxu0 0.0
        %3606 = vmatpush1.msra.mxu0 0.0
        %3607 = vmatprep.subr.mxu0 0.0
        %3608 = vmatpush1.msra.mxu0 0.0
        %3609 = vmatprep.subr.mxu0 0.0
        %3610 = vmatpush1.msra.mxu0 0.0
        %3611 = vmatprep.subr.mxu0 0.0
        %3612 = vmatpush1.msra.mxu0 0.0
        %3613 = vmatprep.subr.mxu0 0.0
        %3614 = vmatpush1.msra.mxu0 0.0
        %3615 = vmatprep.subr.mxu0 0.0
        %3616 = vmatpush1.msra.mxu0 0.0
        %3617 = vmatprep.subr.mxu0 0.0
        %3618 = vmatpush1.msra.mxu0 0.0
        %3619 = vmatprep.subr.mxu0 0.0
        %3620 = vmatpush1.msra.mxu0 0.0
        %3621 = vmatprep.mubr.f32.mxu0 0.0
        %3622 = vmatmul.mubr.f32.gmra.mrb[0].mxu0 %v3555
        %v3623 = vpop.f32.mrb[0].mxu0
        %v3624 = vadd.f32 0.0, %v3623
        %v3625 = vpop.f32.mrb[0].mxu0
        %3626 = vdwg.mxu0
        %s3627 = scalar_lea.vmem %s9, 80
        %v3628 = vld [vmem:[%s3627] sm:$0xff]
        %v3629 = vld [vmem:[%s3627 + $0x8] sm:$0xff]
        %v3631 = vsel %vm852, %v3624, 0
        %3633 = vmatprep.subr.mxu0 0.0
        %3634 = vmatpush1.msra.mxu0 %v3628
        %3635 = vmatprep.subr.mxu0 0.0
        %3636 = vmatpush1.msra.mxu0 %v3629
        %3637 = vmatprep.subr.mxu0 0.0
        %3638 = vmatpush1.msra.mxu0 0.0
        %3639 = vmatprep.subr.mxu0 0.0
        %3640 = vmatpush1.msra.mxu0 0.0
        %3641 = vmatprep.subr.mxu0 0.0
        %3642 = vmatpush1.msra.mxu0 0.0
        %3643 = vmatprep.subr.mxu0 0.0
        %3644 = vmatpush1.msra.mxu0 0.0
        %3645 = vmatprep.subr.mxu0 0.0
        %3646 = vmatpush1.msra.mxu0 0.0
        %3647 = vmatprep.subr.mxu0 0.0
        %3648 = vmatpush1.msra.mxu0 0.0
        %3649 = vmatprep.subr.mxu0 0.0
        %3650 = vmatpush1.msra.mxu0 0.0
        %3651 = vmatprep.subr.mxu0 0.0
        %3652 = vmatpush1.msra.mxu0 0.0
        %3653 = vmatprep.subr.mxu0 0.0
        %3654 = vmatpush1.msra.mxu0 0.0
        %3655 = vmatprep.subr.mxu0 0.0
        %3656 = vmatpush1.msra.mxu0 0.0
        %3657 = vmatprep.subr.mxu0 0.0
        %3658 = vmatpush1.msra.mxu0 0.0
        %3659 = vmatprep.subr.mxu0 0.0
        %3660 = vmatpush1.msra.mxu0 0.0
        %3661 = vmatprep.subr.mxu0 0.0
        %3662 = vmatpush1.msra.mxu0 0.0
        %3663 = vmatprep.subr.mxu0 0.0
        %3664 = vmatpush1.msra.mxu0 0.0
        %3665 = vmatprep.subr.mxu0 0.0
        %3666 = vmatpush1.msra.mxu0 0.0
        %3667 = vmatprep.subr.mxu0 0.0
        %3668 = vmatpush1.msra.mxu0 0.0
        %3669 = vmatprep.subr.mxu0 0.0
        %3670 = vmatpush1.msra.mxu0 0.0
        %3671 = vmatprep.subr.mxu0 0.0
        %3672 = vmatpush1.msra.mxu0 0.0
        %3673 = vmatprep.subr.mxu0 0.0
        %3674 = vmatpush1.msra.mxu0 0.0
        %3675 = vmatprep.subr.mxu0 0.0
        %3676 = vmatpush1.msra.mxu0 0.0
        %3677 = vmatprep.subr.mxu0 0.0
        %3678 = vmatpush1.msra.mxu0 0.0
        %3679 = vmatprep.subr.mxu0 0.0
        %3680 = vmatpush1.msra.mxu0 0.0
        %3681 = vmatprep.subr.mxu0 0.0
        %3682 = vmatpush1.msra.mxu0 0.0
        %3683 = vmatprep.subr.mxu0 0.0
        %3684 = vmatpush1.msra.mxu0 0.0
        %3685 = vmatprep.subr.mxu0 0.0
        %3686 = vmatpush1.msra.mxu0 0.0
        %3687 = vmatprep.subr.mxu0 0.0
        %3688 = vmatpush1.msra.mxu0 0.0
        %3689 = vmatprep.subr.mxu0 0.0
        %3690 = vmatpush1.msra.mxu0 0.0
        %3691 = vmatprep.subr.mxu0 0.0
        %3692 = vmatpush1.msra.mxu0 0.0
        %3693 = vmatprep.subr.mxu0 0.0
        %3694 = vmatpush1.msra.mxu0 0.0
        %3695 = vmatprep.subr.mxu0 0.0
        %3696 = vmatpush1.msra.mxu0 0.0
        %3697 = vmatprep.mubr.f32.mxu0 0.0
        %3698 = vmatmul.mubr.f32.gmra.mrb[0].mxu0 %v3631
        %v3699 = vpop.f32.mrb[0].mxu0
        %v3700 = vadd.f32 0.0, %v3699
        %v3701 = vpop.f32.mrb[0].mxu0
        %3702 = vdwg.mxu0
        %v3703 = vadd.f32 %v3180, %v3700
        %s3704 = scalar_lea.vmem %s3, 768
        %v3705 = vld [vmem:[%s3704] sm:$0xff]
        %v3706 = vld [vmem:[%s3704 + $0x8] sm:$0xff]
        %v3707 = vld [vmem:[%s3704 + $0x10] sm:$0xff]
        %v3708 = vld [vmem:[%s3704 + $0x18] sm:$0xff]
        %v3709 = vld [vmem:[%s3704 + $0x20] sm:$0xff]
        %v3710 = vld [vmem:[%s3704 + $0x28] sm:$0xff]
        %v3711 = vld [vmem:[%s3704 + $0x30] sm:$0xff]
        %v3712 = vld [vmem:[%s3704 + $0x38] sm:$0xff]
        %v3713 = vld [vmem:[%s3704 + $0x40] sm:$0xff]
        %v3714 = vld [vmem:[%s3704 + $0x48] sm:$0xff]
        %v3715 = vld [vmem:[%s3704 + $0x50] sm:$0xff]
        %v3716 = vld [vmem:[%s3704 + $0x58] sm:$0xff]
        %v3717 = vld [vmem:[%s3704 + $0x60] sm:$0xff]
        %v3718 = vld [vmem:[%s3704 + $0x68] sm:$0xff]
        %v3719 = vld [vmem:[%s3704 + $0x70] sm:$0xff]
        %v3720 = vld [vmem:[%s3704 + $0x78] sm:$0xff]
        %s3721 = scalar_lea.vmem %s4, 6
        %v3722 = vld [vmem:[%s3721] sm:$0x1]
        %v3724 = vlaneseq
        %v3725 = vshrl.u32 %v3724, 7
        %v3726 = vsub.s32 0, %v3725
        %v3727 = vrot.slane %v3722, %v3726
        %3729 = vmatprep.subr.mxu0 0.0
        %3730 = vmatpush1.msra.mxu0 %v3705
        %3731 = vmatprep.subr.mxu0 0.0
        %3732 = vmatpush1.msra.mxu0 %v3706
        %3733 = vmatprep.subr.mxu0 0.0
        %3734 = vmatpush1.msra.mxu0 %v3707
        %3735 = vmatprep.subr.mxu0 0.0
        %3736 = vmatpush1.msra.mxu0 %v3708
        %3737 = vmatprep.subr.mxu0 0.0
        %3738 = vmatpush1.msra.mxu0 %v3709
        %3739 = vmatprep.subr.mxu0 0.0
        %3740 = vmatpush1.msra.mxu0 %v3710
        %3741 = vmatprep.subr.mxu0 0.0
        %3742 = vmatpush1.msra.mxu0 %v3711
        %3743 = vmatprep.subr.mxu0 0.0
        %3744 = vmatpush1.msra.mxu0 %v3712
        %3745 = vmatprep.subr.mxu0 0.0
        %3746 = vmatpush1.msra.mxu0 %v3713
        %3747 = vmatprep.subr.mxu0 0.0
        %3748 = vmatpush1.msra.mxu0 %v3714
        %3749 = vmatprep.subr.mxu0 0.0
        %3750 = vmatpush1.msra.mxu0 %v3715
        %3751 = vmatprep.subr.mxu0 0.0
        %3752 = vmatpush1.msra.mxu0 %v3716
        %3753 = vmatprep.subr.mxu0 0.0
        %3754 = vmatpush1.msra.mxu0 %v3717
        %3755 = vmatprep.subr.mxu0 0.0
        %3756 = vmatpush1.msra.mxu0 %v3718
        %3757 = vmatprep.subr.mxu0 0.0
        %3758 = vmatpush1.msra.mxu0 %v3719
        %3759 = vmatprep.subr.mxu0 0.0
        %3760 = vmatpush1.msra.mxu0 %v3720
        %3761 = vmatprep.subr.mxu0 0.0
        %3762 = vmatpush1.msra.mxu0 0.0
        %3763 = vmatprep.subr.mxu0 0.0
        %3764 = vmatpush1.msra.mxu0 0.0
        %3765 = vmatprep.subr.mxu0 0.0
        %3766 = vmatpush1.msra.mxu0 0.0
        %3767 = vmatprep.subr.mxu0 0.0
        %3768 = vmatpush1.msra.mxu0 0.0
        %3769 = vmatprep.subr.mxu0 0.0
        %3770 = vmatpush1.msra.mxu0 0.0
        %3771 = vmatprep.subr.mxu0 0.0
        %3772 = vmatpush1.msra.mxu0 0.0
        %3773 = vmatprep.subr.mxu0 0.0
        %3774 = vmatpush1.msra.mxu0 0.0
        %3775 = vmatprep.subr.mxu0 0.0
        %3776 = vmatpush1.msra.mxu0 0.0
        %3777 = vmatprep.subr.mxu0 0.0
        %3778 = vmatpush1.msra.mxu0 0.0
        %3779 = vmatprep.subr.mxu0 0.0
        %3780 = vmatpush1.msra.mxu0 0.0
        %3781 = vmatprep.subr.mxu0 0.0
        %3782 = vmatpush1.msra.mxu0 0.0
        %3783 = vmatprep.subr.mxu0 0.0
        %3784 = vmatpush1.msra.mxu0 0.0
        %3785 = vmatprep.subr.mxu0 0.0
        %3786 = vmatpush1.msra.mxu0 0.0
        %3787 = vmatprep.subr.mxu0 0.0
        %3788 = vmatpush1.msra.mxu0 0.0
        %3789 = vmatprep.subr.mxu0 0.0
        %3790 = vmatpush1.msra.mxu0 0.0
        %3791 = vmatprep.subr.mxu0 0.0
        %3792 = vmatpush1.msra.mxu0 0.0
        %3793 = vmatprep.mubr.f32.mxu0 0.0
        %3794 = vmatmul.mubr.f32.gmra.mrb[0].mxu0 %v572
        %v3795 = vpop.f32.mrb[0].mxu0
        %v3796 = vadd.f32 %v3727, %v3795
        %v3797 = vpop.f32.mrb[0].mxu0
        %3798 = vdwg.mxu0
        %s3799 = scalar_lea.vmem %s5, 768
        %v3800 = vld [vmem:[%s3799] sm:$0xff]
        %v3801 = vld [vmem:[%s3799 + $0x8] sm:$0xff]
        %v3802 = vld [vmem:[%s3799 + $0x10] sm:$0xff]
        %v3803 = vld [vmem:[%s3799 + $0x18] sm:$0xff]
        %v3804 = vld [vmem:[%s3799 + $0x20] sm:$0xff]
        %v3805 = vld [vmem:[%s3799 + $0x28] sm:$0xff]
        %v3806 = vld [vmem:[%s3799 + $0x30] sm:$0xff]
        %v3807 = vld [vmem:[%s3799 + $0x38] sm:$0xff]
        %v3808 = vld [vmem:[%s3799 + $0x40] sm:$0xff]
        %v3809 = vld [vmem:[%s3799 + $0x48] sm:$0xff]
        %v3810 = vld [vmem:[%s3799 + $0x50] sm:$0xff]
        %v3811 = vld [vmem:[%s3799 + $0x58] sm:$0xff]
        %v3812 = vld [vmem:[%s3799 + $0x60] sm:$0xff]
        %v3813 = vld [vmem:[%s3799 + $0x68] sm:$0xff]
        %v3814 = vld [vmem:[%s3799 + $0x70] sm:$0xff]
        %v3815 = vld [vmem:[%s3799 + $0x78] sm:$0xff]
        %s3816 = scalar_lea.vmem %s6, 6
        %v3817 = vld [vmem:[%s3816] sm:$0x1]
        %v3819 = vlaneseq
        %v3820 = vshrl.u32 %v3819, 7
        %v3821 = vsub.s32 0, %v3820
        %v3822 = vrot.slane %v3817, %v3821
        %3824 = vmatprep.subr.mxu0 0.0
        %3825 = vmatpush1.msra.mxu0 %v3800
        %3826 = vmatprep.subr.mxu0 0.0
        %3827 = vmatpush1.msra.mxu0 %v3801
        %3828 = vmatprep.subr.mxu0 0.0
        %3829 = vmatpush1.msra.mxu0 %v3802
        %3830 = vmatprep.subr.mxu0 0.0
        %3831 = vmatpush1.msra.mxu0 %v3803
        %3832 = vmatprep.subr.mxu0 0.0
        %3833 = vmatpush1.msra.mxu0 %v3804
        %3834 = vmatprep.subr.mxu0 0.0
        %3835 = vmatpush1.msra.mxu0 %v3805
        %3836 = vmatprep.subr.mxu0 0.0
        %3837 = vmatpush1.msra.mxu0 %v3806
        %3838 = vmatprep.subr.mxu0 0.0
        %3839 = vmatpush1.msra.mxu0 %v3807
        %3840 = vmatprep.subr.mxu0 0.0
        %3841 = vmatpush1.msra.mxu0 %v3808
        %3842 = vmatprep.subr.mxu0 0.0
        %3843 = vmatpush1.msra.mxu0 %v3809
        %3844 = vmatprep.subr.mxu0 0.0
        %3845 = vmatpush1.msra.mxu0 %v3810
        %3846 = vmatprep.subr.mxu0 0.0
        %3847 = vmatpush1.msra.mxu0 %v3811
        %3848 = vmatprep.subr.mxu0 0.0
        %3849 = vmatpush1.msra.mxu0 %v3812
        %3850 = vmatprep.subr.mxu0 0.0
        %3851 = vmatpush1.msra.mxu0 %v3813
        %3852 = vmatprep.subr.mxu0 0.0
        %3853 = vmatpush1.msra.mxu0 %v3814
        %3854 = vmatprep.subr.mxu0 0.0
        %3855 = vmatpush1.msra.mxu0 %v3815
        %3856 = vmatprep.subr.mxu0 0.0
        %3857 = vmatpush1.msra.mxu0 0.0
        %3858 = vmatprep.subr.mxu0 0.0
        %3859 = vmatpush1.msra.mxu0 0.0
        %3860 = vmatprep.subr.mxu0 0.0
        %3861 = vmatpush1.msra.mxu0 0.0
        %3862 = vmatprep.subr.mxu0 0.0
        %3863 = vmatpush1.msra.mxu0 0.0
        %3864 = vmatprep.subr.mxu0 0.0
        %3865 = vmatpush1.msra.mxu0 0.0
        %3866 = vmatprep.subr.mxu0 0.0
        %3867 = vmatpush1.msra.mxu0 0.0
        %3868 = vmatprep.subr.mxu0 0.0
        %3869 = vmatpush1.msra.mxu0 0.0
        %3870 = vmatprep.subr.mxu0 0.0
        %3871 = vmatpush1.msra.mxu0 0.0
        %3872 = vmatprep.subr.mxu0 0.0
        %3873 = vmatpush1.msra.mxu0 0.0
        %3874 = vmatprep.subr.mxu0 0.0
        %3875 = vmatpush1.msra.mxu0 0.0
        %3876 = vmatprep.subr.mxu0 0.0
        %3877 = vmatpush1.msra.mxu0 0.0
        %3878 = vmatprep.subr.mxu0 0.0
        %3879 = vmatpush1.msra.mxu0 0.0
        %3880 = vmatprep.subr.mxu0 0.0
        %3881 = vmatpush1.msra.mxu0 0.0
        %3882 = vmatprep.subr.mxu0 0.0
        %3883 = vmatpush1.msra.mxu0 0.0
        %3884 = vmatprep.subr.mxu0 0.0
        %3885 = vmatpush1.msra.mxu0 0.0
        %3886 = vmatprep.subr.mxu0 0.0
        %3887 = vmatpush1.msra.mxu0 0.0
        %3888 = vmatprep.mubr.f32.mxu0 0.0
        %3889 = vmatmul.mubr.f32.gmra.mrb[0].mxu0 %v572
        %v3890 = vpop.f32.mrb[0].mxu0
        %v3891 = vadd.f32 %v3822, %v3890
        %v3892 = vpop.f32.mrb[0].mxu0
        %3893 = vdwg.mxu0
        %s3894 = scalar_lea.vmem %s7, 768
        %v3895 = vld [vmem:[%s3894] sm:$0xff]
        %v3896 = vld [vmem:[%s3894 + $0x8] sm:$0xff]
        %v3897 = vld [vmem:[%s3894 + $0x10] sm:$0xff]
        %v3898 = vld [vmem:[%s3894 + $0x18] sm:$0xff]
        %v3899 = vld [vmem:[%s3894 + $0x20] sm:$0xff]
        %v3900 = vld [vmem:[%s3894 + $0x28] sm:$0xff]
        %v3901 = vld [vmem:[%s3894 + $0x30] sm:$0xff]
        %v3902 = vld [vmem:[%s3894 + $0x38] sm:$0xff]
        %v3903 = vld [vmem:[%s3894 + $0x40] sm:$0xff]
        %v3904 = vld [vmem:[%s3894 + $0x48] sm:$0xff]
        %v3905 = vld [vmem:[%s3894 + $0x50] sm:$0xff]
        %v3906 = vld [vmem:[%s3894 + $0x58] sm:$0xff]
        %v3907 = vld [vmem:[%s3894 + $0x60] sm:$0xff]
        %v3908 = vld [vmem:[%s3894 + $0x68] sm:$0xff]
        %v3909 = vld [vmem:[%s3894 + $0x70] sm:$0xff]
        %v3910 = vld [vmem:[%s3894 + $0x78] sm:$0xff]
        %s3911 = scalar_lea.vmem %s8, 6
        %v3912 = vld [vmem:[%s3911] sm:$0x1]
        %v3914 = vlaneseq
        %v3915 = vshrl.u32 %v3914, 7
        %v3916 = vsub.s32 0, %v3915
        %v3917 = vrot.slane %v3912, %v3916
        %3919 = vmatprep.subr.mxu0 0.0
        %3920 = vmatpush1.msra.mxu0 %v3895
        %3921 = vmatprep.subr.mxu0 0.0
        %3922 = vmatpush1.msra.mxu0 %v3896
        %3923 = vmatprep.subr.mxu0 0.0
        %3924 = vmatpush1.msra.mxu0 %v3897
        %3925 = vmatprep.subr.mxu0 0.0
        %3926 = vmatpush1.msra.mxu0 %v3898
        %3927 = vmatprep.subr.mxu0 0.0
        %3928 = vmatpush1.msra.mxu0 %v3899
        %3929 = vmatprep.subr.mxu0 0.0
        %3930 = vmatpush1.msra.mxu0 %v3900
        %3931 = vmatprep.subr.mxu0 0.0
        %3932 = vmatpush1.msra.mxu0 %v3901
        %3933 = vmatprep.subr.mxu0 0.0
        %3934 = vmatpush1.msra.mxu0 %v3902
        %3935 = vmatprep.subr.mxu0 0.0
        %3936 = vmatpush1.msra.mxu0 %v3903
        %3937 = vmatprep.subr.mxu0 0.0
        %3938 = vmatpush1.msra.mxu0 %v3904
        %3939 = vmatprep.subr.mxu0 0.0
        %3940 = vmatpush1.msra.mxu0 %v3905
        %3941 = vmatprep.subr.mxu0 0.0
        %3942 = vmatpush1.msra.mxu0 %v3906
        %3943 = vmatprep.subr.mxu0 0.0
        %3944 = vmatpush1.msra.mxu0 %v3907
        %3945 = vmatprep.subr.mxu0 0.0
        %3946 = vmatpush1.msra.mxu0 %v3908
        %3947 = vmatprep.subr.mxu0 0.0
        %3948 = vmatpush1.msra.mxu0 %v3909
        %3949 = vmatprep.subr.mxu0 0.0
        %3950 = vmatpush1.msra.mxu0 %v3910
        %3951 = vmatprep.subr.mxu0 0.0
        %3952 = vmatpush1.msra.mxu0 0.0
        %3953 = vmatprep.subr.mxu0 0.0
        %3954 = vmatpush1.msra.mxu0 0.0
        %3955 = vmatprep.subr.mxu0 0.0
        %3956 = vmatpush1.msra.mxu0 0.0
        %3957 = vmatprep.subr.mxu0 0.0
        %3958 = vmatpush1.msra.mxu0 0.0
        %3959 = vmatprep.subr.mxu0 0.0
        %3960 = vmatpush1.msra.mxu0 0.0
        %3961 = vmatprep.subr.mxu0 0.0
        %3962 = vmatpush1.msra.mxu0 0.0
        %3963 = vmatprep.subr.mxu0 0.0
        %3964 = vmatpush1.msra.mxu0 0.0
        %3965 = vmatprep.subr.mxu0 0.0
        %3966 = vmatpush1.msra.mxu0 0.0
        %3967 = vmatprep.subr.mxu0 0.0
        %3968 = vmatpush1.msra.mxu0 0.0
        %3969 = vmatprep.subr.mxu0 0.0
        %3970 = vmatpush1.msra.mxu0 0.0
        %3971 = vmatprep.subr.mxu0 0.0
        %3972 = vmatpush1.msra.mxu0 0.0
        %3973 = vmatprep.subr.mxu0 0.0
        %3974 = vmatpush1.msra.mxu0 0.0
        %3975 = vmatprep.subr.mxu0 0.0
        %3976 = vmatpush1.msra.mxu0 0.0
        %3977 = vmatprep.subr.mxu0 0.0
        %3978 = vmatpush1.msra.mxu0 0.0
        %3979 = vmatprep.subr.mxu0 0.0
        %3980 = vmatpush1.msra.mxu0 0.0
        %3981 = vmatprep.subr.mxu0 0.0
        %3982 = vmatpush1.msra.mxu0 0.0
        %3983 = vmatprep.mubr.f32.mxu0 0.0
        %3984 = vmatmul.mubr.f32.gmra.mrb[0].mxu0 %v572
        %v3985 = vpop.f32.mrb[0].mxu0
        %v3986 = vadd.f32 %v3917, %v3985
        %v3987 = vpop.f32.mrb[0].mxu0
        %3988 = vdwg.mxu0
        %v3990 = vsel %vm852, %v3796, 0
        %v3993 = vsel %vm852, %v3891, 0
        %3995 = vmatprep.subr.mxu0 0.0
        %3996 = vmatpush1.xpose.msra.mxu0 %v3993
        %3997 = vmatprep.subr.mxu0 0.0
        %3998 = vmatpush1.xpose.msra.mxu0 0.0
        %3999 = vmatprep.subr.mxu0 0.0
        %4000 = vmatpush1.xpose.msra.mxu0 0.0
        %4001 = vmatprep.subr.mxu0 0.0
        %4002 = vmatpush1.xpose.msra.mxu0 0.0
        %4003 = vmatprep.subr.mxu0 0.0
        %4004 = vmatpush1.xpose.msra.mxu0 0.0
        %4005 = vmatprep.subr.mxu0 0.0
        %4006 = vmatpush1.xpose.msra.mxu0 0.0
        %4007 = vmatprep.subr.mxu0 0.0
        %4008 = vmatpush1.xpose.msra.mxu0 0.0
        %4009 = vmatprep.subr.mxu0 0.0
        %4010 = vmatpush1.xpose.msra.mxu0 0.0
        %4011 = vmatprep.subr.mxu0 0.0
        %4012 = vmatpush1.xpose.msra.mxu0 0.0
        %4013 = vmatprep.subr.mxu0 0.0
        %4014 = vmatpush1.xpose.msra.mxu0 0.0
        %4015 = vmatprep.subr.mxu0 0.0
        %4016 = vmatpush1.xpose.msra.mxu0 0.0
        %4017 = vmatprep.subr.mxu0 0.0
        %4018 = vmatpush1.xpose.msra.mxu0 0.0
        %4019 = vmatprep.subr.mxu0 0.0
        %4020 = vmatpush1.xpose.msra.mxu0 0.0
        %4021 = vmatprep.subr.mxu0 0.0
        %4022 = vmatpush1.xpose.msra.mxu0 0.0
        %4023 = vmatprep.subr.mxu0 0.0
        %4024 = vmatpush1.xpose.msra.mxu0 0.0
        %4025 = vmatprep.subr.mxu0 0.0
        %4026 = vmatpush1.xpose.msra.mxu0 0.0
        %4027 = vmatprep.subr.mxu0 0.0
        %4028 = vmatpush1.xpose.msra.mxu0 0.0
        %4029 = vmatprep.subr.mxu0 0.0
        %4030 = vmatpush1.xpose.msra.mxu0 0.0
        %4031 = vmatprep.subr.mxu0 0.0
        %4032 = vmatpush1.xpose.msra.mxu0 0.0
        %4033 = vmatprep.subr.mxu0 0.0
        %4034 = vmatpush1.xpose.msra.mxu0 0.0
        %4035 = vmatprep.subr.mxu0 0.0
        %4036 = vmatpush1.xpose.msra.mxu0 0.0
        %4037 = vmatprep.subr.mxu0 0.0
        %4038 = vmatpush1.xpose.msra.mxu0 0.0
        %4039 = vmatprep.subr.mxu0 0.0
        %4040 = vmatpush1.xpose.msra.mxu0 0.0
        %4041 = vmatprep.subr.mxu0 0.0
        %4042 = vmatpush1.xpose.msra.mxu0 0.0
        %4043 = vmatprep.subr.mxu0 0.0
        %4044 = vmatpush1.xpose.msra.mxu0 0.0
        %4045 = vmatprep.subr.mxu0 0.0
        %4046 = vmatpush1.xpose.msra.mxu0 0.0
        %4047 = vmatprep.subr.mxu0 0.0
        %4048 = vmatpush1.xpose.msra.mxu0 0.0
        %4049 = vmatprep.subr.mxu0 0.0
        %4050 = vmatpush1.xpose.msra.mxu0 0.0
        %4051 = vmatprep.subr.mxu0 0.0
        %4052 = vmatpush1.xpose.msra.mxu0 0.0
        %4053 = vmatprep.subr.mxu0 0.0
        %4054 = vmatpush1.xpose.msra.mxu0 0.0
        %4055 = vmatprep.subr.mxu0 0.0
        %4056 = vmatpush1.xpose.msra.mxu0 0.0
        %4057 = vmatprep.subr.mxu0 0.0
        %4058 = vmatpush1.xpose.msra.mxu0 0.0
        %4059 = vmatprep.mubr.f32.mxu0 0.0
        %4060 = vmatmul.mubr.f32.gmra.mrb[0].mxu0 %v3990
        %v4061 = vpop.f32.mrb[0].mxu0
        %v4062 = vadd.f32 0.0, %v4061
        %v4063 = vpop.f32.mrb[0].mxu0
        %4064 = vdwg.mxu0
        %v4065 = vmul.f32 %v4062, 0.25
        %v4066 = vsel %vm930, %v4065, -inf
        %4067 = vmax.xlane.f32.xlu0 %v4066
        %v4068 = vpop.xlane.xlu0 %4067
        %v4069 = vsub.f32 %v4065, %v4068
        %v4070 = vmul.f32 %v4069, 1.442695
        %v4071 = vpow.pop %v4070
        %v4072 = vsel %vm930, %v4071, 0.0
        %4073 = vadd.xlane.f32.xlu0 %v4072
        %v4074 = vpop.xlane.xlu0 %4073
        %v4075 = vrcp.pop %v4074
        %v4076 = vmul.f32 %v4071, %v4075
        %v4078 = vsel %vm930, %v4076, 0
        %4080 = vmatprep.subr.mxu0 0.0
        %4081 = vmatpush1.msra.mxu0 %v3986
        %4082 = vmatprep.subr.mxu0 0.0
        %4083 = vmatpush1.msra.mxu0 0.0
        %4084 = vmatprep.subr.mxu0 0.0
        %4085 = vmatpush1.msra.mxu0 0.0
        %4086 = vmatprep.subr.mxu0 0.0
        %4087 = vmatpush1.msra.mxu0 0.0
        %4088 = vmatprep.subr.mxu0 0.0
        %4089 = vmatpush1.msra.mxu0 0.0
        %4090 = vmatprep.subr.mxu0 0.0
        %4091 = vmatpush1.msra.mxu0 0.0
        %4092 = vmatprep.subr.mxu0 0.0
        %4093 = vmatpush1.msra.mxu0 0.0
        %4094 = vmatprep.subr.mxu0 0.0
        %4095 = vmatpush1.msra.mxu0 0.0
        %4096 = vmatprep.subr.mxu0 0.0
        %4097 = vmatpush1.msra.mxu0 0.0
        %4098 = vmatprep.subr.mxu0 0.0
        %4099 = vmatpush1.msra.mxu0 0.0
        %4100 = vmatprep.subr.mxu0 0.0
        %4101 = vmatpush1.msra.mxu0 0.0
        %4102 = vmatprep.subr.mxu0 0.0
        %4103 = vmatpush1.msra.mxu0 0.0
        %4104 = vmatprep.subr.mxu0 0.0
        %4105 = vmatpush1.msra.mxu0 0.0
        %4106 = vmatprep.subr.mxu0 0.0
        %4107 = vmatpush1.msra.mxu0 0.0
        %4108 = vmatprep.subr.mxu0 0.0
        %4109 = vmatpush1.msra.mxu0 0.0
        %4110 = vmatprep.subr.mxu0 0.0
        %4111 = vmatpush1.msra.mxu0 0.0
        %4112 = vmatprep.subr.mxu0 0.0
        %4113 = vmatpush1.msra.mxu0 0.0
        %4114 = vmatprep.subr.mxu0 0.0
        %4115 = vmatpush1.msra.mxu0 0.0
        %4116 = vmatprep.subr.mxu0 0.0
        %4117 = vmatpush1.msra.mxu0 0.0
        %4118 = vmatprep.subr.mxu0 0.0
        %4119 = vmatpush1.msra.mxu0 0.0
        %4120 = vmatprep.subr.mxu0 0.0
        %4121 = vmatpush1.msra.mxu0 0.0
        %4122 = vmatprep.subr.mxu0 0.0
        %4123 = vmatpush1.msra.mxu0 0.0
        %4124 = vmatprep.subr.mxu0 0.0
        %4125 = vmatpush1.msra.mxu0 0.0
        %4126 = vmatprep.subr.mxu0 0.0
        %4127 = vmatpush1.msra.mxu0 0.0
        %4128 = vmatprep.subr.mxu0 0.0
        %4129 = vmatpush1.msra.mxu0 0.0
        %4130 = vmatprep.subr.mxu0 0.0
        %4131 = vmatpush1.msra.mxu0 0.0
        %4132 = vmatprep.subr.mxu0 0.0
        %4133 = vmatpush1.msra.mxu0 0.0
        %4134 = vmatprep.subr.mxu0 0.0
        %4135 = vmatpush1.msra.mxu0 0.0
        %4136 = vmatprep.subr.mxu0 0.0
        %4137 = vmatpush1.msra.mxu0 0.0
        %4138 = vmatprep.subr.mxu0 0.0
        %4139 = vmatpush1.msra.mxu0 0.0
        %4140 = vmatprep.subr.mxu0 0.0
        %4141 = vmatpush1.msra.mxu0 0.0
        %4142 = vmatprep.subr.mxu0 0.0
        %4143 = vmatpush1.msra.mxu0 0.0
        %4144 = vmatprep.mubr.f32.mxu0 0.0
        %4145 = vmatmul.mubr.f32.gmra.mrb[0].mxu0 %v4078
        %v4146 = vpop.f32.mrb[0].mxu0
        %v4147 = vadd.f32 0.0, %v4146
        %v4148 = vpop.f32.mrb[0].mxu0
        %4149 = vdwg.mxu0
        %s4150 = scalar_lea.vmem %s9, 96
        %v4151 = vld [vmem:[%s4150] sm:$0xff]
        %v4152 = vld [vmem:[%s4150 + $0x8] sm:$0xff]
        %v4154 = vsel %vm852, %v4147, 0
        %4156 = vmatprep.subr.mxu0 0.0
        %4157 = vmatpush1.msra.mxu0 %v4151
        %4158 = vmatprep.subr.mxu0 0.0
        %4159 = vmatpush1.msra.mxu0 %v4152
        %4160 = vmatprep.subr.mxu0 0.0
        %4161 = vmatpush1.msra.mxu0 0.0
        %4162 = vmatprep.subr.mxu0 0.0
        %4163 = vmatpush1.msra.mxu0 0.0
        %4164 = vmatprep.subr.mxu0 0.0
        %4165 = vmatpush1.msra.mxu0 0.0
        %4166 = vmatprep.subr.mxu0 0.0
        %4167 = vmatpush1.msra.mxu0 0.0
        %4168 = vmatprep.subr.mxu0 0.0
        %4169 = vmatpush1.msra.mxu0 0.0
        %4170 = vmatprep.subr.mxu0 0.0
        %4171 = vmatpush1.msra.mxu0 0.0
        %4172 = vmatprep.subr.mxu0 0.0
        %4173 = vmatpush1.msra.mxu0 0.0
        %4174 = vmatprep.subr.mxu0 0.0
        %4175 = vmatpush1.msra.mxu0 0.0
        %4176 = vmatprep.subr.mxu0 0.0
        %4177 = vmatpush1.msra.mxu0 0.0
        %4178 = vmatprep.subr.mxu0 0.0
        %4179 = vmatpush1.msra.mxu0 0.0
        %4180 = vmatprep.subr.mxu0 0.0
        %4181 = vmatpush1.msra.mxu0 0.0
        %4182 = vmatprep.subr.mxu0 0.0
        %4183 = vmatpush1.msra.mxu0 0.0
        %4184 = vmatprep.subr.mxu0 0.0
        %4185 = vmatpush1.msra.mxu0 0.0
        %4186 = vmatprep.subr.mxu0 0.0
        %4187 = vmatpush1.msra.mxu0 0.0
        %4188 = vmatprep.subr.mxu0 0.0
        %4189 = vmatpush1.msra.mxu0 0.0
        %4190 = vmatprep.subr.mxu0 0.0
        %4191 = vmatpush1.msra.mxu0 0.0
        %4192 = vmatprep.subr.mxu0 0.0
        %4193 = vmatpush1.msra.mxu0 0.0
        %4194 = vmatprep.subr.mxu0 0.0
        %4195 = vmatpush1.msra.mxu0 0.0
        %4196 = vmatprep.subr.mxu0 0.0
        %4197 = vmatpush1.msra.mxu0 0.0
        %4198 = vmatprep.subr.mxu0 0.0
        %4199 = vmatpush1.msra.mxu0 0.0
        %4200 = vmatprep.subr.mxu0 0.0
        %4201 = vmatpush1.msra.mxu0 0.0
        %4202 = vmatprep.subr.mxu0 0.0
        %4203 = vmatpush1.msra.mxu0 0.0
        %4204 = vmatprep.subr.mxu0 0.0
        %4205 = vmatpush1.msra.mxu0 0.0
        %4206 = vmatprep.subr.mxu0 0.0
        %4207 = vmatpush1.msra.mxu0 0.0
        %4208 = vmatprep.subr.mxu0 0.0
        %4209 = vmatpush1.msra.mxu0 0.0
        %4210 = vmatprep.subr.mxu0 0.0
        %4211 = vmatpush1.msra.mxu0 0.0
        %4212 = vmatprep.subr.mxu0 0.0
        %4213 = vmatpush1.msra.mxu0 0.0
        %4214 = vmatprep.subr.mxu0 0.0
        %4215 = vmatpush1.msra.mxu0 0.0
        %4216 = vmatprep.subr.mxu0 0.0
        %4217 = vmatpush1.msra.mxu0 0.0
        %4218 = vmatprep.subr.mxu0 0.0
        %4219 = vmatpush1.msra.mxu0 0.0
        %4220 = vmatprep.mubr.f32.mxu0 0.0
        %4221 = vmatmul.mubr.f32.gmra.mrb[0].mxu0 %v4154
        %v4222 = vpop.f32.mrb[0].mxu0
        %v4223 = vadd.f32 0.0, %v4222
        %v4224 = vpop.f32.mrb[0].mxu0
        %4225 = vdwg.mxu0
        %v4226 = vadd.f32 %v3703, %v4223
        %s4227 = scalar_lea.vmem %s3, 896
        %v4228 = vld [vmem:[%s4227] sm:$0xff]
        %v4229 = vld [vmem:[%s4227 + $0x8] sm:$0xff]
        %v4230 = vld [vmem:[%s4227 + $0x10] sm:$0xff]
        %v4231 = vld [vmem:[%s4227 + $0x18] sm:$0xff]
        %v4232 = vld [vmem:[%s4227 + $0x20] sm:$0xff]
        %v4233 = vld [vmem:[%s4227 + $0x28] sm:$0xff]
        %v4234 = vld [vmem:[%s4227 + $0x30] sm:$0xff]
        %v4235 = vld [vmem:[%s4227 + $0x38] sm:$0xff]
        %v4236 = vld [vmem:[%s4227 + $0x40] sm:$0xff]
        %v4237 = vld [vmem:[%s4227 + $0x48] sm:$0xff]
        %v4238 = vld [vmem:[%s4227 + $0x50] sm:$0xff]
        %v4239 = vld [vmem:[%s4227 + $0x58] sm:$0xff]
        %v4240 = vld [vmem:[%s4227 + $0x60] sm:$0xff]
        %v4241 = vld [vmem:[%s4227 + $0x68] sm:$0xff]
        %v4242 = vld [vmem:[%s4227 + $0x70] sm:$0xff]
        %v4243 = vld [vmem:[%s4227 + $0x78] sm:$0xff]
        %s4244 = scalar_lea.vmem %s4, 7
        %v4245 = vld [vmem:[%s4244] sm:$0x1]
        %v4247 = vlaneseq
        %v4248 = vshrl.u32 %v4247, 7
        %v4249 = vsub.s32 0, %v4248
        %v4250 = vrot.slane %v4245, %v4249
        %4252 = vmatprep.subr.mxu0 0.0
        %4253 = vmatpush1.msra.mxu0 %v4228
        %4254 = vmatprep.subr.mxu0 0.0
        %4255 = vmatpush1.msra.mxu0 %v4229
        %4256 = vmatprep.subr.mxu0 0.0
        %4257 = vmatpush1.msra.mxu0 %v4230
        %4258 = vmatprep.subr.mxu0 0.0
        %4259 = vmatpush1.msra.mxu0 %v4231
        %4260 = vmatprep.subr.mxu0 0.0
        %4261 = vmatpush1.msra.mxu0 %v4232
        %4262 = vmatprep.subr.mxu0 0.0
        %4263 = vmatpush1.msra.mxu0 %v4233
        %4264 = vmatprep.subr.mxu0 0.0
        %4265 = vmatpush1.msra.mxu0 %v4234
        %4266 = vmatprep.subr.mxu0 0.0
        %4267 = vmatpush1.msra.mxu0 %v4235
        %4268 = vmatprep.subr.mxu0 0.0
        %4269 = vmatpush1.msra.mxu0 %v4236
        %4270 = vmatprep.subr.mxu0 0.0
        %4271 = vmatpush1.msra.mxu0 %v4237
        %4272 = vmatprep.subr.mxu0 0.0
        %4273 = vmatpush1.msra.mxu0 %v4238
        %4274 = vmatprep.subr.mxu0 0.0
        %4275 = vmatpush1.msra.mxu0 %v4239
        %4276 = vmatprep.subr.mxu0 0.0
        %4277 = vmatpush1.msra.mxu0 %v4240
        %4278 = vmatprep.subr.mxu0 0.0
        %4279 = vmatpush1.msra.mxu0 %v4241
        %4280 = vmatprep.subr.mxu0 0.0
        %4281 = vmatpush1.msra.mxu0 %v4242
        %4282 = vmatprep.subr.mxu0 0.0
        %4283 = vmatpush1.msra.mxu0 %v4243
        %4284 = vmatprep.subr.mxu0 0.0
        %4285 = vmatpush1.msra.mxu0 0.0
        %4286 = vmatprep.subr.mxu0 0.0
        %4287 = vmatpush1.msra.mxu0 0.0
        %4288 = vmatprep.subr.mxu0 0.0
        %4289 = vmatpush1.msra.mxu0 0.0
        %4290 = vmatprep.subr.mxu0 0.0
        %4291 = vmatpush1.msra.mxu0 0.0
        %4292 = vmatprep.subr.mxu0 0.0
        %4293 = vmatpush1.msra.mxu0 0.0
        %4294 = vmatprep.subr.mxu0 0.0
        %4295 = vmatpush1.msra.mxu0 0.0
        %4296 = vmatprep.subr.mxu0 0.0
        %4297 = vmatpush1.msra.mxu0 0.0
        %4298 = vmatprep.subr.mxu0 0.0
        %4299 = vmatpush1.msra.mxu0 0.0
        %4300 = vmatprep.subr.mxu0 0.0
        %4301 = vmatpush1.msra.mxu0 0.0
        %4302 = vmatprep.subr.mxu0 0.0
        %4303 = vmatpush1.msra.mxu0 0.0
        %4304 = vmatprep.subr.mxu0 0.0
        %4305 = vmatpush1.msra.mxu0 0.0
        %4306 = vmatprep.subr.mxu0 0.0
        %4307 = vmatpush1.msra.mxu0 0.0
        %4308 = vmatprep.subr.mxu0 0.0
        %4309 = vmatpush1.msra.mxu0 0.0
        %4310 = vmatprep.subr.mxu0 0.0
        %4311 = vmatpush1.msra.mxu0 0.0
        %4312 = vmatprep.subr.mxu0 0.0
        %4313 = vmatpush1.msra.mxu0 0.0
        %4314 = vmatprep.subr.mxu0 0.0
        %4315 = vmatpush1.msra.mxu0 0.0
        %4316 = vmatprep.mubr.f32.mxu0 0.0
        %4317 = vmatmul.mubr.f32.gmra.mrb[0].mxu0 %v572
        %v4318 = vpop.f32.mrb[0].mxu0
        %v4319 = vadd.f32 %v4250, %v4318
        %v4320 = vpop.f32.mrb[0].mxu0
        %4321 = vdwg.mxu0
        %s4322 = scalar_lea.vmem %s5, 896
        %v4323 = vld [vmem:[%s4322] sm:$0xff]
        %v4324 = vld [vmem:[%s4322 + $0x8] sm:$0xff]
        %v4325 = vld [vmem:[%s4322 + $0x10] sm:$0xff]
        %v4326 = vld [vmem:[%s4322 + $0x18] sm:$0xff]
        %v4327 = vld [vmem:[%s4322 + $0x20] sm:$0xff]
        %v4328 = vld [vmem:[%s4322 + $0x28] sm:$0xff]
        %v4329 = vld [vmem:[%s4322 + $0x30] sm:$0xff]
        %v4330 = vld [vmem:[%s4322 + $0x38] sm:$0xff]
        %v4331 = vld [vmem:[%s4322 + $0x40] sm:$0xff]
        %v4332 = vld [vmem:[%s4322 + $0x48] sm:$0xff]
        %v4333 = vld [vmem:[%s4322 + $0x50] sm:$0xff]
        %v4334 = vld [vmem:[%s4322 + $0x58] sm:$0xff]
        %v4335 = vld [vmem:[%s4322 + $0x60] sm:$0xff]
        %v4336 = vld [vmem:[%s4322 + $0x68] sm:$0xff]
        %v4337 = vld [vmem:[%s4322 + $0x70] sm:$0xff]
        %v4338 = vld [vmem:[%s4322 + $0x78] sm:$0xff]
        %s4339 = scalar_lea.vmem %s6, 7
        %v4340 = vld [vmem:[%s4339] sm:$0x1]
        %v4342 = vlaneseq
        %v4343 = vshrl.u32 %v4342, 7
        %v4344 = vsub.s32 0, %v4343
        %v4345 = vrot.slane %v4340, %v4344
        %4347 = vmatprep.subr.mxu0 0.0
        %4348 = vmatpush1.msra.mxu0 %v4323
        %4349 = vmatprep.subr.mxu0 0.0
        %4350 = vmatpush1.msra.mxu0 %v4324
        %4351 = vmatprep.subr.mxu0 0.0
        %4352 = vmatpush1.msra.mxu0 %v4325
        %4353 = vmatprep.subr.mxu0 0.0
        %4354 = vmatpush1.msra.mxu0 %v4326
        %4355 = vmatprep.subr.mxu0 0.0
        %4356 = vmatpush1.msra.mxu0 %v4327
        %4357 = vmatprep.subr.mxu0 0.0
        %4358 = vmatpush1.msra.mxu0 %v4328
        %4359 = vmatprep.subr.mxu0 0.0
        %4360 = vmatpush1.msra.mxu0 %v4329
        %4361 = vmatprep.subr.mxu0 0.0
        %4362 = vmatpush1.msra.mxu0 %v4330
        %4363 = vmatprep.subr.mxu0 0.0
        %4364 = vmatpush1.msra.mxu0 %v4331
        %4365 = vmatprep.subr.mxu0 0.0
        %4366 = vmatpush1.msra.mxu0 %v4332
        %4367 = vmatprep.subr.mxu0 0.0
        %4368 = vmatpush1.msra.mxu0 %v4333
        %4369 = vmatprep.subr.mxu0 0.0
        %4370 = vmatpush1.msra.mxu0 %v4334
        %4371 = vmatprep.subr.mxu0 0.0
        %4372 = vmatpush1.msra.mxu0 %v4335
        %4373 = vmatprep.subr.mxu0 0.0
        %4374 = vmatpush1.msra.mxu0 %v4336
        %4375 = vmatprep.subr.mxu0 0.0
        %4376 = vmatpush1.msra.mxu0 %v4337
        %4377 = vmatprep.subr.mxu0 0.0
        %4378 = vmatpush1.msra.mxu0 %v4338
        %4379 = vmatprep.subr.mxu0 0.0
        %4380 = vmatpush1.msra.mxu0 0.0
        %4381 = vmatprep.subr.mxu0 0.0
        %4382 = vmatpush1.msra.mxu0 0.0
        %4383 = vmatprep.subr.mxu0 0.0
        %4384 = vmatpush1.msra.mxu0 0.0
        %4385 = vmatprep.subr.mxu0 0.0
        %4386 = vmatpush1.msra.mxu0 0.0
        %4387 = vmatprep.subr.mxu0 0.0
        %4388 = vmatpush1.msra.mxu0 0.0
        %4389 = vmatprep.subr.mxu0 0.0
        %4390 = vmatpush1.msra.mxu0 0.0
        %4391 = vmatprep.subr.mxu0 0.0
        %4392 = vmatpush1.msra.mxu0 0.0
        %4393 = vmatprep.subr.mxu0 0.0
        %4394 = vmatpush1.msra.mxu0 0.0
        %4395 = vmatprep.subr.mxu0 0.0
        %4396 = vmatpush1.msra.mxu0 0.0
        %4397 = vmatprep.subr.mxu0 0.0
        %4398 = vmatpush1.msra.mxu0 0.0
        %4399 = vmatprep.subr.mxu0 0.0
        %4400 = vmatpush1.msra.mxu0 0.0
        %4401 = vmatprep.subr.mxu0 0.0
        %4402 = vmatpush1.msra.mxu0 0.0
        %4403 = vmatprep.subr.mxu0 0.0
        %4404 = vmatpush1.msra.mxu0 0.0
        %4405 = vmatprep.subr.mxu0 0.0
        %4406 = vmatpush1.msra.mxu0 0.0
        %4407 = vmatprep.subr.mxu0 0.0
        %4408 = vmatpush1.msra.mxu0 0.0
        %4409 = vmatprep.subr.mxu0 0.0
        %4410 = vmatpush1.msra.mxu0 0.0
        %4411 = vmatprep.mubr.f32.mxu0 0.0
        %4412 = vmatmul.mubr.f32.gmra.mrb[0].mxu0 %v572
        %v4413 = vpop.f32.mrb[0].mxu0
        %v4414 = vadd.f32 %v4345, %v4413
        %v4415 = vpop.f32.mrb[0].mxu0
        %4416 = vdwg.mxu0
        %s4417 = scalar_lea.vmem %s7, 896
        %v4418 = vld [vmem:[%s4417] sm:$0xff]
        %v4419 = vld [vmem:[%s4417 + $0x8] sm:$0xff]
        %v4420 = vld [vmem:[%s4417 + $0x10] sm:$0xff]
        %v4421 = vld [vmem:[%s4417 + $0x18] sm:$0xff]
        %v4422 = vld [vmem:[%s4417 + $0x20] sm:$0xff]
        %v4423 = vld [vmem:[%s4417 + $0x28] sm:$0xff]
        %v4424 = vld [vmem:[%s4417 + $0x30] sm:$0xff]
        %v4425 = vld [vmem:[%s4417 + $0x38] sm:$0xff]
        %v4426 = vld [vmem:[%s4417 + $0x40] sm:$0xff]
        %v4427 = vld [vmem:[%s4417 + $0x48] sm:$0xff]
        %v4428 = vld [vmem:[%s4417 + $0x50] sm:$0xff]
        %v4429 = vld [vmem:[%s4417 + $0x58] sm:$0xff]
        %v4430 = vld [vmem:[%s4417 + $0x60] sm:$0xff]
        %v4431 = vld [vmem:[%s4417 + $0x68] sm:$0xff]
        %v4432 = vld [vmem:[%s4417 + $0x70] sm:$0xff]
        %v4433 = vld [vmem:[%s4417 + $0x78] sm:$0xff]
        %s4434 = scalar_lea.vmem %s8, 7
        %v4435 = vld [vmem:[%s4434] sm:$0x1]
        %v4437 = vlaneseq
        %v4438 = vshrl.u32 %v4437, 7
        %v4439 = vsub.s32 0, %v4438
        %v4440 = vrot.slane %v4435, %v4439
        %4442 = vmatprep.subr.mxu0 0.0
        %4443 = vmatpush1.msra.mxu0 %v4418
        %4444 = vmatprep.subr.mxu0 0.0
        %4445 = vmatpush1.msra.mxu0 %v4419
        %4446 = vmatprep.subr.mxu0 0.0
        %4447 = vmatpush1.msra.mxu0 %v4420
        %4448 = vmatprep.subr.mxu0 0.0
        %4449 = vmatpush1.msra.mxu0 %v4421
        %4450 = vmatprep.subr.mxu0 0.0
        %4451 = vmatpush1.msra.mxu0 %v4422
        %4452 = vmatprep.subr.mxu0 0.0
        %4453 = vmatpush1.msra.mxu0 %v4423
        %4454 = vmatprep.subr.mxu0 0.0
        %4455 = vmatpush1.msra.mxu0 %v4424
        %4456 = vmatprep.subr.mxu0 0.0
        %4457 = vmatpush1.msra.mxu0 %v4425
        %4458 = vmatprep.subr.mxu0 0.0
        %4459 = vmatpush1.msra.mxu0 %v4426
        %4460 = vmatprep.subr.mxu0 0.0
        %4461 = vmatpush1.msra.mxu0 %v4427
        %4462 = vmatprep.subr.mxu0 0.0
        %4463 = vmatpush1.msra.mxu0 %v4428
        %4464 = vmatprep.subr.mxu0 0.0
        %4465 = vmatpush1.msra.mxu0 %v4429
        %4466 = vmatprep.subr.mxu0 0.0
        %4467 = vmatpush1.msra.mxu0 %v4430
        %4468 = vmatprep.subr.mxu0 0.0
        %4469 = vmatpush1.msra.mxu0 %v4431
        %4470 = vmatprep.subr.mxu0 0.0
        %4471 = vmatpush1.msra.mxu0 %v4432
        %4472 = vmatprep.subr.mxu0 0.0
        %4473 = vmatpush1.msra.mxu0 %v4433
        %4474 = vmatprep.subr.mxu0 0.0
        %4475 = vmatpush1.msra.mxu0 0.0
        %4476 = vmatprep.subr.mxu0 0.0
        %4477 = vmatpush1.msra.mxu0 0.0
        %4478 = vmatprep.subr.mxu0 0.0
        %4479 = vmatpush1.msra.mxu0 0.0
        %4480 = vmatprep.subr.mxu0 0.0
        %4481 = vmatpush1.msra.mxu0 0.0
        %4482 = vmatprep.subr.mxu0 0.0
        %4483 = vmatpush1.msra.mxu0 0.0
        %4484 = vmatprep.subr.mxu0 0.0
        %4485 = vmatpush1.msra.mxu0 0.0
        %4486 = vmatprep.subr.mxu0 0.0
        %4487 = vmatpush1.msra.mxu0 0.0
        %4488 = vmatprep.subr.mxu0 0.0
        %4489 = vmatpush1.msra.mxu0 0.0
        %4490 = vmatprep.subr.mxu0 0.0
        %4491 = vmatpush1.msra.mxu0 0.0
        %4492 = vmatprep.subr.mxu0 0.0
        %4493 = vmatpush1.msra.mxu0 0.0
        %4494 = vmatprep.subr.mxu0 0.0
        %4495 = vmatpush1.msra.mxu0 0.0
        %4496 = vmatprep.subr.mxu0 0.0
        %4497 = vmatpush1.msra.mxu0 0.0
        %4498 = vmatprep.subr.mxu0 0.0
        %4499 = vmatpush1.msra.mxu0 0.0
        %4500 = vmatprep.subr.mxu0 0.0
        %4501 = vmatpush1.msra.mxu0 0.0
        %4502 = vmatprep.subr.mxu0 0.0
        %4503 = vmatpush1.msra.mxu0 0.0
        %4504 = vmatprep.subr.mxu0 0.0
        %4505 = vmatpush1.msra.mxu0 0.0
        %4506 = vmatprep.mubr.f32.mxu0 0.0
        %4507 = vmatmul.mubr.f32.gmra.mrb[0].mxu0 %v572
        %v4508 = vpop.f32.mrb[0].mxu0
        %v4509 = vadd.f32 %v4440, %v4508
        %v4510 = vpop.f32.mrb[0].mxu0
        %4511 = vdwg.mxu0
        %v4513 = vsel %vm852, %v4319, 0
        %v4516 = vsel %vm852, %v4414, 0
        %4518 = vmatprep.subr.mxu0 0.0
        %4519 = vmatpush1.xpose.msra.mxu0 %v4516
        %4520 = vmatprep.subr.mxu0 0.0
        %4521 = vmatpush1.xpose.msra.mxu0 0.0
        %4522 = vmatprep.subr.mxu0 0.0
        %4523 = vmatpush1.xpose.msra.mxu0 0.0
        %4524 = vmatprep.subr.mxu0 0.0
        %4525 = vmatpush1.xpose.msra.mxu0 0.0
        %4526 = vmatprep.subr.mxu0 0.0
        %4527 = vmatpush1.xpose.msra.mxu0 0.0
        %4528 = vmatprep.subr.mxu0 0.0
        %4529 = vmatpush1.xpose.msra.mxu0 0.0
        %4530 = vmatprep.subr.mxu0 0.0
        %4531 = vmatpush1.xpose.msra.mxu0 0.0
        %4532 = vmatprep.subr.mxu0 0.0
        %4533 = vmatpush1.xpose.msra.mxu0 0.0
        %4534 = vmatprep.subr.mxu0 0.0
        %4535 = vmatpush1.xpose.msra.mxu0 0.0
        %4536 = vmatprep.subr.mxu0 0.0
        %4537 = vmatpush1.xpose.msra.mxu0 0.0
        %4538 = vmatprep.subr.mxu0 0.0
        %4539 = vmatpush1.xpose.msra.mxu0 0.0
        %4540 = vmatprep.subr.mxu0 0.0
        %4541 = vmatpush1.xpose.msra.mxu0 0.0
        %4542 = vmatprep.subr.mxu0 0.0
        %4543 = vmatpush1.xpose.msra.mxu0 0.0
        %4544 = vmatprep.subr.mxu0 0.0
        %4545 = vmatpush1.xpose.msra.mxu0 0.0
        %4546 = vmatprep.subr.mxu0 0.0
        %4547 = vmatpush1.xpose.msra.mxu0 0.0
        %4548 = vmatprep.subr.mxu0 0.0
        %4549 = vmatpush1.xpose.msra.mxu0 0.0
        %4550 = vmatprep.subr.mxu0 0.0
        %4551 = vmatpush1.xpose.msra.mxu0 0.0
        %4552 = vmatprep.subr.mxu0 0.0
        %4553 = vmatpush1.xpose.msra.mxu0 0.0
        %4554 = vmatprep.subr.mxu0 0.0
        %4555 = vmatpush1.xpose.msra.mxu0 0.0
        %4556 = vmatprep.subr.mxu0 0.0
        %4557 = vmatpush1.xpose.msra.mxu0 0.0
        %4558 = vmatprep.subr.mxu0 0.0
        %4559 = vmatpush1.xpose.msra.mxu0 0.0
        %4560 = vmatprep.subr.mxu0 0.0
        %4561 = vmatpush1.xpose.msra.mxu0 0.0
        %4562 = vmatprep.subr.mxu0 0.0
        %4563 = vmatpush1.xpose.msra.mxu0 0.0
        %4564 = vmatprep.subr.mxu0 0.0
        %4565 = vmatpush1.xpose.msra.mxu0 0.0
        %4566 = vmatprep.subr.mxu0 0.0
        %4567 = vmatpush1.xpose.msra.mxu0 0.0
        %4568 = vmatprep.subr.mxu0 0.0
        %4569 = vmatpush1.xpose.msra.mxu0 0.0
        %4570 = vmatprep.subr.mxu0 0.0
        %4571 = vmatpush1.xpose.msra.mxu0 0.0
        %4572 = vmatprep.subr.mxu0 0.0
        %4573 = vmatpush1.xpose.msra.mxu0 0.0
        %4574 = vmatprep.subr.mxu0 0.0
        %4575 = vmatpush1.xpose.msra.mxu0 0.0
        %4576 = vmatprep.subr.mxu0 0.0
        %4577 = vmatpush1.xpose.msra.mxu0 0.0
        %4578 = vmatprep.subr.mxu0 0.0
        %4579 = vmatpush1.xpose.msra.mxu0 0.0
        %4580 = vmatprep.subr.mxu0 0.0
        %4581 = vmatpush1.xpose.msra.mxu0 0.0
        %4582 = vmatprep.mubr.f32.mxu0 0.0
        %4583 = vmatmul.mubr.f32.gmra.mrb[0].mxu0 %v4513
        %v4584 = vpop.f32.mrb[0].mxu0
        %v4585 = vadd.f32 0.0, %v4584
        %v4586 = vpop.f32.mrb[0].mxu0
        %4587 = vdwg.mxu0
        %v4588 = vmul.f32 %v4585, 0.25
        %v4589 = vsel %vm930, %v4588, -inf
        %4590 = vmax.xlane.f32.xlu0 %v4589
        %v4591 = vpop.xlane.xlu0 %4590
        %v4592 = vsub.f32 %v4588, %v4591
        %v4593 = vmul.f32 %v4592, 1.442695
        %v4594 = vpow.pop %v4593
        %v4595 = vsel %vm930, %v4594, 0.0
        %4596 = vadd.xlane.f32.xlu0 %v4595
        %v4597 = vpop.xlane.xlu0 %4596
        %v4598 = vrcp.pop %v4597
        %v4599 = vmul.f32 %v4594, %v4598
        %v4601 = vsel %vm930, %v4599, 0
        %4603 = vmatprep.subr.mxu0 0.0
        %4604 = vmatpush1.msra.mxu0 %v4509
        %4605 = vmatprep.subr.mxu0 0.0
        %4606 = vmatpush1.msra.mxu0 0.0
        %4607 = vmatprep.subr.mxu0 0.0
        %4608 = vmatpush1.msra.mxu0 0.0
        %4609 = vmatprep.subr.mxu0 0.0
        %4610 = vmatpush1.msra.mxu0 0.0
        %4611 = vmatprep.subr.mxu0 0.0
        %4612 = vmatpush1.msra.mxu0 0.0
        %4613 = vmatprep.subr.mxu0 0.0
        %4614 = vmatpush1.msra.mxu0 0.0
        %4615 = vmatprep.subr.mxu0 0.0
        %4616 = vmatpush1.msra.mxu0 0.0
        %4617 = vmatprep.subr.mxu0 0.0
        %4618 = vmatpush1.msra.mxu0 0.0
        %4619 = vmatprep.subr.mxu0 0.0
        %4620 = vmatpush1.msra.mxu0 0.0
        %4621 = vmatprep.subr.mxu0 0.0
        %4622 = vmatpush1.msra.mxu0 0.0
        %4623 = vmatprep.subr.mxu0 0.0
        %4624 = vmatpush1.msra.mxu0 0.0
        %4625 = vmatprep.subr.mxu0 0.0
        %4626 = vmatpush1.msra.mxu0 0.0
        %4627 = vmatprep.subr.mxu0 0.0
        %4628 = vmatpush1.msra.mxu0 0.0
        %4629 = vmatprep.subr.mxu0 0.0
        %4630 = vmatpush1.msra.mxu0 0.0
        %4631 = vmatprep.subr.mxu0 0.0
        %4632 = vmatpush1.msra.mxu0 0.0
        %4633 = vmatprep.subr.mxu0 0.0
        %4634 = vmatpush1.msra.mxu0 0.0
        %4635 = vmatprep.subr.mxu0 0.0
        %4636 = vmatpush1.msra.mxu0 0.0
        %4637 = vmatprep.subr.mxu0 0.0
        %4638 = vmatpush1.msra.mxu0 0.0
        %4639 = vmatprep.subr.mxu0 0.0
        %4640 = vmatpush1.msra.mxu0 0.0
        %4641 = vmatprep.subr.mxu0 0.0
        %4642 = vmatpush1.msra.mxu0 0.0
        %4643 = vmatprep.subr.mxu0 0.0
        %4644 = vmatpush1.msra.mxu0 0.0
        %4645 = vmatprep.subr.mxu0 0.0
        %4646 = vmatpush1.msra.mxu0 0.0
        %4647 = vmatprep.subr.mxu0 0.0
        %4648 = vmatpush1.msra.mxu0 0.0
        %4649 = vmatprep.subr.mxu0 0.0
        %4650 = vmatpush1.msra.mxu0 0.0
        %4651 = vmatprep.subr.mxu0 0.0
        %4652 = vmatpush1.msra.mxu0 0.0
        %4653 = vmatprep.subr.mxu0 0.0
        %4654 = vmatpush1.msra.mxu0 0.0
        %4655 = vmatprep.subr.mxu0 0.0
        %4656 = vmatpush1.msra.mxu0 0.0
        %4657 = vmatprep.subr.mxu0 0.0
        %4658 = vmatpush1.msra.mxu0 0.0
        %4659 = vmatprep.subr.mxu0 0.0
        %4660 = vmatpush1.msra.mxu0 0.0
        %4661 = vmatprep.subr.mxu0 0.0
        %4662 = vmatpush1.msra.mxu0 0.0
        %4663 = vmatprep.subr.mxu0 0.0
        %4664 = vmatpush1.msra.mxu0 0.0
        %4665 = vmatprep.subr.mxu0 0.0
        %4666 = vmatpush1.msra.mxu0 0.0
        %4667 = vmatprep.mubr.f32.mxu0 0.0
        %4668 = vmatmul.mubr.f32.gmra.mrb[0].mxu0 %v4601
        %v4669 = vpop.f32.mrb[0].mxu0
        %v4670 = vadd.f32 0.0, %v4669
        %v4671 = vpop.f32.mrb[0].mxu0
        %4672 = vdwg.mxu0
        %s4673 = scalar_lea.vmem %s9, 112
        %v4674 = vld [vmem:[%s4673] sm:$0xff]
        %v4675 = vld [vmem:[%s4673 + $0x8] sm:$0xff]
        %v4677 = vsel %vm852, %v4670, 0
        %4679 = vmatprep.subr.mxu0 0.0
        %4680 = vmatpush1.msra.mxu0 %v4674
        %4681 = vmatprep.subr.mxu0 0.0
        %4682 = vmatpush1.msra.mxu0 %v4675
        %4683 = vmatprep.subr.mxu0 0.0
        %4684 = vmatpush1.msra.mxu0 0.0
        %4685 = vmatprep.subr.mxu0 0.0
        %4686 = vmatpush1.msra.mxu0 0.0
        %4687 = vmatprep.subr.mxu0 0.0
        %4688 = vmatpush1.msra.mxu0 0.0
        %4689 = vmatprep.subr.mxu0 0.0
        %4690 = vmatpush1.msra.mxu0 0.0
        %4691 = vmatprep.subr.mxu0 0.0
        %4692 = vmatpush1.msra.mxu0 0.0
        %4693 = vmatprep.subr.mxu0 0.0
        %4694 = vmatpush1.msra.mxu0 0.0
        %4695 = vmatprep.subr.mxu0 0.0
        %4696 = vmatpush1.msra.mxu0 0.0
        %4697 = vmatprep.subr.mxu0 0.0
        %4698 = vmatpush1.msra.mxu0 0.0
        %4699 = vmatprep.subr.mxu0 0.0
        %4700 = vmatpush1.msra.mxu0 0.0
        %4701 = vmatprep.subr.mxu0 0.0
        %4702 = vmatpush1.msra.mxu0 0.0
        %4703 = vmatprep.subr.mxu0 0.0
        %4704 = vmatpush1.msra.mxu0 0.0
        %4705 = vmatprep.subr.mxu0 0.0
        %4706 = vmatpush1.msra.mxu0 0.0
        %4707 = vmatprep.subr.mxu0 0.0
        %4708 = vmatpush1.msra.mxu0 0.0
        %4709 = vmatprep.subr.mxu0 0.0
        %4710 = vmatpush1.msra.mxu0 0.0
        %4711 = vmatprep.subr.mxu0 0.0
        %4712 = vmatpush1.msra.mxu0 0.0
        %4713 = vmatprep.subr.mxu0 0.0
        %4714 = vmatpush1.msra.mxu0 0.0
        %4715 = vmatprep.subr.mxu0 0.0
        %4716 = vmatpush1.msra.mxu0 0.0
        %4717 = vmatprep.subr.mxu0 0.0
        %4718 = vmatpush1.msra.mxu0 0.0
        %4719 = vmatprep.subr.mxu0 0.0
        %4720 = vmatpush1.msra.mxu0 0.0
        %4721 = vmatprep.subr.mxu0 0.0
        %4722 = vmatpush1.msra.mxu0 0.0
        %4723 = vmatprep.subr.mxu0 0.0
        %4724 = vmatpush1.msra.mxu0 0.0
        %4725 = vmatprep.subr.mxu0 0.0
        %4726 = vmatpush1.msra.mxu0 0.0
        %4727 = vmatprep.subr.mxu0 0.0
        %4728 = vmatpush1.msra.mxu0 0.0
        %4729 = vmatprep.subr.mxu0 0.0
        %4730 = vmatpush1.msra.mxu0 0.0
        %4731 = vmatprep.subr.mxu0 0.0
        %4732 = vmatpush1.msra.mxu0 0.0
        %4733 = vmatprep.subr.mxu0 0.0
        %4734 = vmatpush1.msra.mxu0 0.0
        %4735 = vmatprep.subr.mxu0 0.0
        %4736 = vmatpush1.msra.mxu0 0.0
        %4737 = vmatprep.subr.mxu0 0.0
        %4738 = vmatpush1.msra.mxu0 0.0
        %4739 = vmatprep.subr.mxu0 0.0
        %4740 = vmatpush1.msra.mxu0 0.0
        %4741 = vmatprep.subr.mxu0 0.0
        %4742 = vmatpush1.msra.mxu0 0.0
        %4743 = vmatprep.mubr.f32.mxu0 0.0
        %4744 = vmatmul.mubr.f32.gmra.mrb[0].mxu0 %v4677
        %v4745 = vpop.f32.mrb[0].mxu0
        %v4746 = vadd.f32 0.0, %v4745
        %v4747 = vpop.f32.mrb[0].mxu0
        %4748 = vdwg.mxu0
        %v4749 = vadd.f32 %v4226, %v4746
        %v4750 = vadd.f32 %v544, %v4749
        %v4751 = vld [vmem:[%s10] sm:$0x1]
        %v4753 = vlaneseq
        %v4754 = vshrl.u32 %v4753, 7
        %v4755 = vsub.s32 0, %v4754
        %v4756 = vrot.slane %v4751, %v4755
        %v4758 = vadd.f32 %v4750, %v4756
        %4759 = vadd.xlane.f32.xlu0 %v4758
        %v4760 = vpop.xlane.xlu0 %4759
        %v4761 = vmul.f32 %v4760, %v547
        %v4762 = vsub.f32 %v4758, %v4761
        %v4763 = vmul.f32 %v4762, %v4762
        %4764 = vadd.xlane.f32.xlu0 %v4763
        %v4765 = vpop.xlane.xlu0 %4764
        %v4766 = vmul.f32 %v4765, %v547
        %v4767 = vadd.f32 %v4766, 1e-05
        %v4768 = vrsqrt.pop %v4767
        %v4769 = vmul.f32 %v4762, %v4768
        %v4770 = vld [vmem:[%s11] sm:$0x1]
        %v4772 = vlaneseq
        %v4773 = vshrl.u32 %v4772, 7
        %v4774 = vsub.s32 0, %v4773
        %v4775 = vrot.slane %v4770, %v4774
        %v4777 = vmul.f32 %v4769, %v4775
        %v4778 = vld [vmem:[%s12] sm:$0x1]
        %v4780 = vlaneseq
        %v4781 = vshrl.u32 %v4780, 7
        %v4782 = vsub.s32 0, %v4781
        %v4783 = vrot.slane %v4778, %v4782
        %v4785 = vadd.f32 %v4777, %v4783
        %v4786 = vld [vmem:[%s13] sm:$0xff]
        %v4787 = vld [vmem:[%s13 + $0x8] sm:$0xff]
        %v4788 = vld [vmem:[%s13 + $0x10] sm:$0xff]
        %v4789 = vld [vmem:[%s13 + $0x18] sm:$0xff]
        %v4790 = vld [vmem:[%s13 + $0x20] sm:$0xff]
        %v4791 = vld [vmem:[%s13 + $0x28] sm:$0xff]
        %v4792 = vld [vmem:[%s13 + $0x30] sm:$0xff]
        %v4793 = vld [vmem:[%s13 + $0x38] sm:$0xff]
        %v4794 = vld [vmem:[%s13 + $0x40] sm:$0xff]
        %v4795 = vld [vmem:[%s13 + $0x48] sm:$0xff]
        %v4796 = vld [vmem:[%s13 + $0x50] sm:$0xff]
        %v4797 = vld [vmem:[%s13 + $0x58] sm:$0xff]
        %v4798 = vld [vmem:[%s13 + $0x60] sm:$0xff]
        %v4799 = vld [vmem:[%s13 + $0x68] sm:$0xff]
        %v4800 = vld [vmem:[%s13 + $0x70] sm:$0xff]
        %v4801 = vld [vmem:[%s13 + $0x78] sm:$0xff]
        %v4802 = vld [vmem:[%s14] sm:$0x1]
        %v4804 = vlaneseq
        %v4805 = vshrl.u32 %v4804, 7
        %v4806 = vsub.s32 0, %v4805
        %v4807 = vrot.slane %v4802, %v4806
        %4809 = vmatprep.subr.mxu0 0.0
        %4810 = vmatpush1.msra.mxu0 %v4786
        %4811 = vmatprep.subr.mxu0 0.0
        %4812 = vmatpush1.msra.mxu0 %v4787
        %4813 = vmatprep.subr.mxu0 0.0
        %4814 = vmatpush1.msra.mxu0 %v4788
        %4815 = vmatprep.subr.mxu0 0.0
        %4816 = vmatpush1.msra.mxu0 %v4789
        %4817 = vmatprep.subr.mxu0 0.0
        %4818 = vmatpush1.msra.mxu0 %v4790
        %4819 = vmatprep.subr.mxu0 0.0
        %4820 = vmatpush1.msra.mxu0 %v4791
        %4821 = vmatprep.subr.mxu0 0.0
        %4822 = vmatpush1.msra.mxu0 %v4792
        %4823 = vmatprep.subr.mxu0 0.0
        %4824 = vmatpush1.msra.mxu0 %v4793
        %4825 = vmatprep.subr.mxu0 0.0
        %4826 = vmatpush1.msra.mxu0 %v4794
        %4827 = vmatprep.subr.mxu0 0.0
        %4828 = vmatpush1.msra.mxu0 %v4795
        %4829 = vmatprep.subr.mxu0 0.0
        %4830 = vmatpush1.msra.mxu0 %v4796
        %4831 = vmatprep.subr.mxu0 0.0
        %4832 = vmatpush1.msra.mxu0 %v4797
        %4833 = vmatprep.subr.mxu0 0.0
        %4834 = vmatpush1.msra.mxu0 %v4798
        %4835 = vmatprep.subr.mxu0 0.0
        %4836 = vmatpush1.msra.mxu0 %v4799
        %4837 = vmatprep.subr.mxu0 0.0
        %4838 = vmatpush1.msra.mxu0 %v4800
        %4839 = vmatprep.subr.mxu0 0.0
        %4840 = vmatpush1.msra.mxu0 %v4801
        %4841 = vmatprep.subr.mxu0 0.0
        %4842 = vmatpush1.msra.mxu0 0.0
        %4843 = vmatprep.subr.mxu0 0.0
        %4844 = vmatpush1.msra.mxu0 0.0
        %4845 = vmatprep.subr.mxu0 0.0
        %4846 = vmatpush1.msra.mxu0 0.0
        %4847 = vmatprep.subr.mxu0 0.0
        %4848 = vmatpush1.msra.mxu0 0.0
        %4849 = vmatprep.subr.mxu0 0.0
        %4850 = vmatpush1.msra.mxu0 0.0
        %4851 = vmatprep.subr.mxu0 0.0
        %4852 = vmatpush1.msra.mxu0 0.0
        %4853 = vmatprep.subr.mxu0 0.0
        %4854 = vmatpush1.msra.mxu0 0.0
        %4855 = vmatprep.subr.mxu0 0.0
        %4856 = vmatpush1.msra.mxu0 0.0
        %4857 = vmatprep.subr.mxu0 0.0
        %4858 = vmatpush1.msra.mxu0 0.0
        %4859 = vmatprep.subr.mxu0 0.0
        %4860 = vmatpush1.msra.mxu0 0.0
        %4861 = vmatprep.subr.mxu0 0.0
        %4862 = vmatpush1.msra.mxu0 0.0
        %4863 = vmatprep.subr.mxu0 0.0
        %4864 = vmatpush1.msra.mxu0 0.0
        %4865 = vmatprep.subr.mxu0 0.0
        %4866 = vmatpush1.msra.mxu0 0.0
        %4867 = vmatprep.subr.mxu0 0.0
        %4868 = vmatpush1.msra.mxu0 0.0
        %4869 = vmatprep.subr.mxu0 0.0
        %4870 = vmatpush1.msra.mxu0 0.0
        %4871 = vmatprep.subr.mxu0 0.0
        %4872 = vmatpush1.msra.mxu0 0.0
        %4873 = vmatprep.mubr.f32.mxu0 0.0
        %4874 = vmatmul.mubr.f32.gmra.mrb[0].mxu0 %v4785
        %v4875 = vpop.f32.mrb[0].mxu0
        %v4876 = vadd.f32 %v4807, %v4875
        %v4877 = vpop.f32.mrb[0].mxu0
        %4878 = vdwg.mxu0
        %v4879 = vmax.f32 %v4876, 0.0
        %v4880 = vld [vmem:[%s15] sm:$0xff]
        %v4881 = vld [vmem:[%s15 + $0x8] sm:$0xff]
        %v4882 = vld [vmem:[%s15 + $0x10] sm:$0xff]
        %v4883 = vld [vmem:[%s15 + $0x18] sm:$0xff]
        %v4884 = vld [vmem:[%s15 + $0x20] sm:$0xff]
        %v4885 = vld [vmem:[%s15 + $0x28] sm:$0xff]
        %v4886 = vld [vmem:[%s15 + $0x30] sm:$0xff]
        %v4887 = vld [vmem:[%s15 + $0x38] sm:$0xff]
        %v4888 = vld [vmem:[%s15 + $0x40] sm:$0xff]
        %v4889 = vld [vmem:[%s15 + $0x48] sm:$0xff]
        %v4890 = vld [vmem:[%s15 + $0x50] sm:$0xff]
        %v4891 = vld [vmem:[%s15 + $0x58] sm:$0xff]
        %v4892 = vld [vmem:[%s15 + $0x60] sm:$0xff]
        %v4893 = vld [vmem:[%s15 + $0x68] sm:$0xff]
        %v4894 = vld [vmem:[%s15 + $0x70] sm:$0xff]
        %v4895 = vld [vmem:[%s15 + $0x78] sm:$0xff]
        %v4896 = vld [vmem:[%s16] sm:$0x1]
        %v4898 = vlaneseq
        %v4899 = vshrl.u32 %v4898, 7
        %v4900 = vsub.s32 0, %v4899
        %v4901 = vrot.slane %v4896, %v4900
        %4903 = vmatprep.subr.mxu0 0.0
        %4904 = vmatpush1.msra.mxu0 %v4880
        %4905 = vmatprep.subr.mxu0 0.0
        %4906 = vmatpush1.msra.mxu0 %v4881
        %4907 = vmatprep.subr.mxu0 0.0
        %4908 = vmatpush1.msra.mxu0 %v4882
        %4909 = vmatprep.subr.mxu0 0.0
        %4910 = vmatpush1.msra.mxu0 %v4883
        %4911 = vmatprep.subr.mxu0 0.0
        %4912 = vmatpush1.msra.mxu0 %v4884
        %4913 = vmatprep.subr.mxu0 0.0
        %4914 = vmatpush1.msra.mxu0 %v4885
        %4915 = vmatprep.subr.mxu0 0.0
        %4916 = vmatpush1.msra.mxu0 %v4886
        %4917 = vmatprep.subr.mxu0 0.0
        %4918 = vmatpush1.msra.mxu0 %v4887
        %4919 = vmatprep.subr.mxu0 0.0
        %4920 = vmatpush1.msra.mxu0 %v4888
        %4921 = vmatprep.subr.mxu0 0.0
        %4922 = vmatpush1.msra.mxu0 %v4889
        %4923 = vmatprep.subr.mxu0 0.0
        %4924 = vmatpush1.msra.mxu0 %v4890
        %4925 = vmatprep.subr.mxu0 0.0
        %4926 = vmatpush1.msra.mxu0 %v4891
        %4927 = vmatprep.subr.mxu0 0.0
        %4928 = vmatpush1.msra.mxu0 %v4892
        %4929 = vmatprep.subr.mxu0 0.0
        %4930 = vmatpush1.msra.mxu0 %v4893
        %4931 = vmatprep.subr.mxu0 0.0
        %4932 = vmatpush1.msra.mxu0 %v4894
        %4933 = vmatprep.subr.mxu0 0.0
        %4934 = vmatpush1.msra.mxu0 %v4895
        %4935 = vmatprep.subr.mxu0 0.0
        %4936 = vmatpush1.msra.mxu0 0.0
        %4937 = vmatprep.subr.mxu0 0.0
        %4938 = vmatpush1.msra.mxu0 0.0
        %4939 = vmatprep.subr.mxu0 0.0
        %4940 = vmatpush1.msra.mxu0 0.0
        %4941 = vmatprep.subr.mxu0 0.0
        %4942 = vmatpush1.msra.mxu0 0.0
        %4943 = vmatprep.subr.mxu0 0.0
        %4944 = vmatpush1.msra.mxu0 0.0
        %4945 = vmatprep.subr.mxu0 0.0
        %4946 = vmatpush1.msra.mxu0 0.0
        %4947 = vmatprep.subr.mxu0 0.0
        %4948 = vmatpush1.msra.mxu0 0.0
        %4949 = vmatprep.subr.mxu0 0.0
        %4950 = vmatpush1.msra.mxu0 0.0
        %4951 = vmatprep.subr.mxu0 0.0
        %4952 = vmatpush1.msra.mxu0 0.0
        %4953 = vmatprep.subr.mxu0 0.0
        %4954 = vmatpush1.msra.mxu0 0.0
        %4955 = vmatprep.subr.mxu0 0.0
        %4956 = vmatpush1.msra.mxu0 0.0
        %4957 = vmatprep.subr.mxu0 0.0
        %4958 = vmatpush1.msra.mxu0 0.0
        %4959 = vmatprep.subr.mxu0 0.0
        %4960 = vmatpush1.msra.mxu0 0.0
        %4961 = vmatprep.subr.mxu0 0.0
        %4962 = vmatpush1.msra.mxu0 0.0
        %4963 = vmatprep.subr.mxu0 0.0
        %4964 = vmatpush1.msra.mxu0 0.0
        %4965 = vmatprep.subr.mxu0 0.0
        %4966 = vmatpush1.msra.mxu0 0.0
        %4967 = vmatprep.mubr.f32.mxu0 0.0
        %4968 = vmatmul.mubr.f32.gmra.mrb[0].mxu0 %v4879
        %v4969 = vpop.f32.mrb[0].mxu0
        %v4970 = vadd.f32 %v4901, %v4969
        %v4971 = vpop.f32.mrb[0].mxu0
        %4972 = vdwg.mxu0
        %v4973 = vadd.f32 %v4758, %v4970
        %4974 = vst [vmem:[%s539] sm:$0xff] %v4973
        %s4975 = sand.u32 %s401, 1
        %s4976 = scalar_lea.sflag [#allocation3], %s4975
        %s4977 = sand.u32 %s401, 1
        %s4978 = smul.addr %s4977, 8
        %s4979 = scalar_lea.vmem [#allocation2], %s4978
        // Predicated region
        $region89: #{transformer_block_forward.1} parent=87 // pred_check
          %p4980 = pneg %p411
        $region90: #{transformer_block_forward.1} parent=87 // pred_check_branch
          %4982 = sbr.rel (%p4980) target = $region92
        $region91: #{transformer_block_forward.1} parent=87 // pred_region
          %s4984 = ssub.s32 128, 128
          %4985 = vsyncadd %s4976, %s4984
          %s4986 = smul.addr %s31, 128
          %s4987 = scalar_lea.hbm %s17, %s4986
          %s4989 = sshll.u32 %s4979, 4
          %s4990 = int_to_ptr.vmem [resolvable:$true] %s4989
          %4992 = dma.vmem_to_hbm [thread:$0]  %s4990, 128, %s4987, %s4976
        $region92: #{transformer_block_forward.1} parent=87 // pred_fallthru
          _
      $region88: #{transformer_block_forward.1} parent=5 // pred_fallthru
        _
      %p4993 = scmp.le.s32.totalorder 2, %s26
      // Predicated region
      $region93: #{transformer_block_forward.1} parent=5 // pred_check
        %p4994 = pneg %p4993
      $region94: #{transformer_block_forward.1} parent=5 // pred_check_branch
        %4996 = sbr.rel (%p4994) target = $region96
      $region95: #{transformer_block_forward.1} parent=5 // pred_region
        %s4997 = ssub.s32 %s26, 2
        // Predicated region
        $region97: #{transformer_block_forward.1} parent=95 // pred_check
          %p4998 = pneg %p417
        $region98: #{transformer_block_forward.1} parent=95 // pred_check_branch
          %5000 = sbr.rel (%p4998) target = $region100
        $region99: #{transformer_block_forward.1} parent=95 // pred_region
          %s5001 = sand.u32 %s402, 1
          %s5002 = scalar_lea.sflag [#allocation3], %s5001
          %s5003 = sand.u32 %s402, 1
          %s5004 = smul.addr %s5003, 8
          %s5005 = scalar_lea.vmem [#allocation2], %s5004
          %5006 = dma.done %s5002, 128
        $region100: #{transformer_block_forward.1} parent=95 // pred_fallthru
          _
      $region96: #{transformer_block_forward.1} parent=5 // pred_fallthru
        _
    $region6: #{transformer_block_forward.1} parent=1 // loop_footer
      %s30 = sadd.s32 1, %s26
    $region7: #{transformer_block_forward.1} parent=1 // loop_footer_branch
      %25 = sbr.rel target = $region3
    $region8: #{transformer_block_forward.1} parent=1 // loop_exit
      _
    %5007 = vsyncpa [#allocation3], 1
    %s5008 = scalar_lea.sflag [#allocation3], 1
    %5009 = vsyncpa %s5008, 1

</llo_original>
